<compile_context>
chip_gen: v6e
topology: v6e:2x2x1
jax: 0.10.0
libtpu: 0.0.40
codegen_flags: <defaults>
</compile_context>

<pallas_src>
import functools

import jax
import jax.numpy as jnp
from jax.experimental import pallas as pl
from jax.experimental.pallas import tpu as pltpu


def _bottleneck_kernel(x_ref, w1_ref, b1_ref, w2_ref, b2_ref, w3_ref, b3_ref,
                       out_ref, *scratch,
                       TH, W, Cin, P, dilation, use_direct, p_slot):
    """One (batch, row-tile) block per grid step.  stride is fixed to 1."""
    pad_ref = scratch[0]
    col_ref = None if use_direct else scratch[1]

    d = dilation
    THp = TH + 2 * d
    Wp = W + 2 * d

    r = pl.program_id(1)
    nrow_tiles = pl.num_programs(1)
    row0 = r * TH

    def conv1(start, nrows):
        # 1x1 conv (BN1 scale folded into w1) + bias + relu, bf16 output.
        xt = x_ref[0, pl.ds(start, nrows), :, :].reshape(nrows * W, Cin)
        h = jnp.dot(xt.astype(jnp.bfloat16), w1_ref[...],
                    preferred_element_type=jnp.float32)
        h = jnp.maximum(h + b1_ref[...], 0.0)
        return h.reshape(nrows, W, P).astype(jnp.bfloat16)

    # ---- conv1 + BN1 + relu written into the bf16 padded scratch ----------
    zrow = jnp.zeros((d, Wp, P), jnp.bfloat16)
    zcol = jnp.zeros((TH, d, P), jnp.bfloat16)

    # Interior rows of this tile (fully overwritten every step).
    pad_ref[d:d + TH, d:d + W, :] = conv1(row0, TH)
    # Thin left/right zero-padding columns (bf16).
    pad_ref[d:d + TH, 0:d, :] = zcol
    pad_ref[d:d + TH, d + W:Wp, :] = zcol

    # Top / bottom halo rows: zero full-width (covers corners and the image
    # border), then overwrite the centre with recomputed conv1 rows of the
    # neighbouring tile when one exists.
    pad_ref[0:d, :, :] = zrow
    pad_ref[d + TH:THp, :, :] = zrow

    @pl.when(r > 0)
    def _():
        pad_ref[0:d, d:d + W, :] = conv1(row0 - d, d)

    @pl.when(r < nrow_tiles - 1)
    def _():
        pad_ref[d + TH:THp, d:d + W, :] = conv1(row0 + TH, d)

    # ---- conv2 (3x3, stride=1, dilation, padding=dilation) + BN2 + relu ---
    if use_direct:
        # P >= 128: accumulate nine K=P matmuls straight off the padded
        # scratch -- no im2col buffer, no pack-phase stores.
        acc = jnp.zeros((TH * W, P), jnp.float32)
        for ky in range(3):
            for kx in range(3):
                win = pad_ref[pl.ds(ky * d, TH), pl.ds(kx * d, W), :]
                acc = acc + jnp.dot(win.reshape(TH * W, P),
                                    w2_ref[ky * 3 + kx],
                                    preferred_element_type=jnp.float32)
        h2 = acc
    else:
        # P < 128: single K = 9*p_slot matmul; each tap slot starts on a
        # 128-lane boundary so the pack stores never cross lane tiles (the
        # padding lanes are zeroed and the matching w2 rows are zero).
        zlane = jnp.zeros((TH * W, p_slot - P), jnp.bfloat16)
        for ky in range(3):
            for kx in range(3):
                t = ky * 3 + kx
                win = pad_ref[pl.ds(ky * d, TH), pl.ds(kx * d, W), :]
                col_ref[:, t * p_slot:t * p_slot + P] = win.reshape(TH * W, P)
                col_ref[:, t * p_slot + P:(t + 1) * p_slot] = zlane
        h2 = jnp.dot(col_ref[...], w2_ref[...],
                     preferred_element_type=jnp.float32)
    h2 = jnp.maximum(h2 + b2_ref[...], 0.0)

    # ---- conv3 (1x1, BN3 scale folded into w3) + bias ----------------------
    h3 = jnp.dot(h2.astype(jnp.bfloat16), w3_ref[...],
                 preferred_element_type=jnp.float32)
    h3 = h3 + b3_ref[...]

    # ---- residual add (downsample is None -> identity) + relu --------------
    res = x_ref[0, pl.ds(row0, TH), :, :].reshape(TH * W, Cin)   # fresh f32 read
    out_ref[0] = jnp.maximum(h3 + res, 0.0).reshape(TH, W, 4 * P)


def _pick_row_tile(H, dilation):
    if H <= 16:
        return H
    lo = max(int(dilation), 1)
    for th in range(min(H, 32), lo - 1, -1):
        if H % th == 0 and th % 8 == 0:
            return th
    for th in range(min(H, 32), lo - 1, -1):
        if H % th == 0:
            return th
    return H


def bottleneck_forward(x, params, *, dilation=1, row_tile=None):
    N, H, W, Cin = x.shape
    P = params["w1"].shape[1]
    assert Cin == 4 * P, "identity residual path requires Cin == 4 * planes"
    assert dilation >= 1
    TH = row_tile if row_tile is not None else _pick_row_tile(H, dilation)
    assert H % TH == 0, "row tile must divide H"
    assert TH >= dilation, "row tile must be >= dilation (halo recompute)"
    R = H // TH
    d = dilation
    THp, Wp = TH + 2 * d, W + 2 * d

    use_direct = P >= 128           # direct 9-matmul conv2 vs padded im2col
    p_slot = P if use_direct else 128

    # Fold the eval-mode BN scales into the conv weights (output-channel
    # axis) once on the host; cast matmul operands to bf16 (f32 accumulation).
    w1 = (params["w1"] * params["s1"][0]).astype(jnp.bfloat16)          # (Cin, P)
    w3 = (params["w3"] * params["s3"][0]).astype(jnp.bfloat16)          # (P, 4P)
    w2f = (params["w2"] * params["s2"][0]).astype(jnp.bfloat16).reshape(9, P, P)
    if use_direct:
        w2 = w2f                                                        # (9, P, P)
    else:
        w2 = jnp.zeros((9, p_slot, P), jnp.bfloat16).at[:, :P, :].set(w2f)
        w2 = w2.reshape(9 * p_slot, P)                                  # (9*128, P)
    b1 = params["b1"].astype(jnp.float32)
    b2 = params["b2"].astype(jnp.float32)
    b3 = params["b3"].astype(jnp.float32)

    kernel = functools.partial(_bottleneck_kernel, TH=TH, W=W, Cin=Cin, P=P,
                               dilation=d, use_direct=use_direct, p_slot=p_slot)

    def const(shape):
        # TODO(synk): single-buffer these constant-index blocks
        #   (pipeline_mode=pl.Buffered(1)) once supported on this path.
        return pl.BlockSpec(shape, lambda n, r: (0,) * len(shape))

    k2 = 9 * (P if use_direct else p_slot)
    flops = 2 * N * H * W * (Cin * P + k2 * P + P * 4 * P)
    flops += 2 * N * 2 * max(R - 1, 0) * d * W * Cin * P     # halo conv1 recompute
    scratch_rt = (2 * THp * Wp * P * 2
                  + (0 if use_direct else 2 * TH * W * 9 * p_slot * 2))
    bytes_accessed = (x.size * x.dtype.itemsize
                      + N * H * W * 4 * P * 4
                      + (w1.size + w2.size + w3.size) * 2
                      + (b1.size + b2.size + b3.size) * 4
                      + N * R * scratch_rt)
    cost = pl.CostEstimate(flops=int(flops), transcendentals=0,
                           bytes_accessed=int(bytes_accessed))

    # VMEM working set: pipeline double buffers counted exactly once here.
    working_set = (2 * H * W * Cin * x.dtype.itemsize        # x image block
                   + 2 * TH * W * 4 * P * 4                  # out tile block
                   + 2 * (w1.size + w2.size + w3.size) * 2
                   + 2 * (b1.size + b2.size + b3.size) * 4
                   + THp * Wp * P * 2                        # padded h1 (bf16)
                   + (0 if use_direct else TH * W * 9 * p_slot * 2))
    try:
        cap = int(pltpu.get_tpu_info().vmem_capacity_bytes)
    except Exception:
        cap = 64 << 20
    budget = (cap * 4) // 5                 # ~80% of per-core VMEM: headroom
    vmem_limit = int(min(max(working_set + (8 << 20), 32 << 20), budget))

    scratch_shapes = [pltpu.VMEM((THp, Wp, P), jnp.bfloat16)]
    if not use_direct:
        scratch_shapes.append(pltpu.VMEM((TH * W, 9 * p_slot), jnp.bfloat16))

    return pl.pallas_call(
        kernel,
        out_shape=jax.ShapeDtypeStruct((N, H, W, 4 * P), jnp.float32),
        grid=(N, R),
        in_specs=[
            pl.BlockSpec((1, H, W, Cin), lambda n, r: (n, 0, 0, 0)),
            const((Cin, P)), const((1, P)),
            const(w2.shape), const((1, P)),
            const((P, 4 * P)), const((1, 4 * P)),
        ],
        out_specs=pl.BlockSpec((1, TH, W, 4 * P), lambda n, r: (n, r, 0, 0)),
        scratch_shapes=scratch_shapes,
        compiler_params=pltpu.CompilerParams(
            dimension_semantics=("parallel", "parallel"),
            vmem_limit_bytes=vmem_limit),
        cost_estimate=cost,
    )(x, w1, b1, w2, b2, w3, b3)


def reference_forward(x, p, *, dilation=1, bf16_operands=False):
    def q(a):
        return a.astype(jnp.bfloat16).astype(jnp.float32) if bf16_operands else a

    w1 = p["w1"] * p["s1"][0]
    w2 = p["w2"] * p["s2"][0]
    w3 = p["w3"] * p["s3"][0]
    h = jnp.einsum("nhwc,co->nhwo", q(x), q(w1))
    h = jnp.maximum(h + p["b1"][0], 0.0)
    h = jax.lax.conv_general_dilated(
        q(h), q(w2), window_strides=(1, 1),
        padding=[(dilation, dilation), (dilation, dilation)],
        rhs_dilation=(dilation, dilation),
        dimension_numbers=("NHWC", "HWIO", "NHWC"))
    h = jnp.maximum(h + p["b2"][0], 0.0)
    h = jnp.einsum("nhwc,co->nhwo", q(h), q(w3))
    h = h + p["b3"][0]
    return jnp.maximum(h + x, 0.0)


def make_params(key, inplanes, planes, eps=1e-5):
    ks = jax.random.split(key, 15)

    def bn_fold(kg, kb, km, kv, C):
        gamma = 1.0 + 0.1 * jax.random.normal(kg, (C,), jnp.float32)
        beta = 0.1 * jax.random.normal(kb, (C,), jnp.float32)
        mean = 0.1 * jax.random.normal(km, (C,), jnp.float32)
        var = jnp.abs(jax.random.normal(kv, (C,), jnp.float32)) + 0.5
        s = gamma / jnp.sqrt(var + eps)
        b = beta - mean * s
        return s.reshape(1, C), b.reshape(1, C)

    s1, b1 = bn_fold(ks[3], ks[4], ks[5], ks[6], planes)
    s2, b2 = bn_fold(ks[7], ks[8], ks[9], ks[10], planes)
    s3, b3 = bn_fold(ks[11], ks[12], ks[13], ks[14], 4 * planes)
    return {
        "w1": 0.1 * jax.random.normal(ks[0], (inplanes, planes), jnp.float32),
        "w2": 0.1 * jax.random.normal(ks[1], (3, 3, planes, planes), jnp.float32),
        "w3": 0.1 * jax.random.normal(ks[2], (planes, 4 * planes), jnp.float32),
        "s1": s1, "b1": b1, "s2": s2, "b2": b2, "s3": s3, "b3": b3,
    }


if __name__ == "__main__":
    key = jax.random.PRNGKey(0)
    k1, k2, k3, k4 = jax.random.split(key, 4)

    # Test 1: spec-default small shapes (P=4 < 128 -> padded-im2col conv2
    # path), two row tiles so the halo recompute logic is exercised.
    N, H, W, planes = 2, 16, 16, 4
    inplanes = 4 * planes
    x = jax.random.normal(k1, (N, H, W, inplanes), jnp.float32)
    params = make_params(k2, inplanes, planes)
    out = jax.block_until_ready(
        bottleneck_forward(x, params, dilation=1, row_tile=8))
    ref = reference_forward(x, params, dilation=1)
    assert out.shape == (N, H, W, 4 * planes)
    err1 = float(jnp.max(jnp.abs(out - ref)))
    # bf16 matmul operands (f32 accumulation) -> looser than pure f32.
    assert jnp.allclose(out, ref, atol=3e-2, rtol=3e-2), err1

    # Test 2: P=128 (direct 9-matmul conv2 path), dilation=2, two row tiles.
    # Compared against a reference that applies the same bf16 operand
    # quantization (the kernel accumulates in f32 on the MXU).
    N2, H2, W2, planes2 = 1, 16, 16, 128
    inplanes2 = 4 * planes2
    x2 = jax.random.normal(k3, (N2, H2, W2, inplanes2), jnp.float32)
    params2 = make_params(k4, inplanes2, planes2)
    out2 = jax.block_until_ready(
        bottleneck_forward(x2, params2, dilation=2, row_tile=8))
    ref2 = reference_forward(x2, params2, dilation=2, bf16_operands=True)
    err2 = float(jnp.max(jnp.abs(out2 - ref2)))
    assert jnp.allclose(out2, ref2, atol=2e-2, rtol=2e-2), err2

    print("KERNEL_OK")
</pallas_src>

<mosaic_0001>
module attributes {stable_mosaic.version = 11 : i64} {
  func.func @_bottleneck_kernel(%arg0: i32, %arg1: i32, %arg2: memref<1x16x16x16xf32, #tpu.memory_space<vmem>>, %arg3: memref<16x4xbf16, #tpu.memory_space<vmem>>, %arg4: memref<1x4xf32, #tpu.memory_space<vmem>>, %arg5: memref<1152x4xbf16, #tpu.memory_space<vmem>>, %arg6: memref<1x4xf32, #tpu.memory_space<vmem>>, %arg7: memref<4x16xbf16, #tpu.memory_space<vmem>>, %arg8: memref<1x16xf32, #tpu.memory_space<vmem>>, %arg9: memref<1x8x16x16xf32, #tpu.memory_space<vmem>>, %arg10: memref<10x18x4xbf16, #tpu.memory_space<vmem>>, %arg11: memref<128x1152xbf16, #tpu.memory_space<vmem>>) attributes {dimension_semantics = [#tpu.dimension_semantics<parallel>, #tpu.dimension_semantics<parallel>], iteration_bounds = array<i64: 2, 2>, scalar_prefetch = 0 : i64, scratch_operands = 2 : i64, tpu.core_type = #tpu.core_type<tc>, window_params = [{transform_indices = @transform_0, window_bounds = array<i64: 1, 16, 16, 16>}, {pipeline_mode = #tpu.pipeline_mode<synchronous>, transform_indices = @transform_1, window_bounds = array<i64: 16, 4>}, {pipeline_mode = #tpu.pipeline_mode<synchronous>, transform_indices = @transform_2, window_bounds = array<i64: 1, 4>}, {pipeline_mode = #tpu.pipeline_mode<synchronous>, transform_indices = @transform_3, window_bounds = array<i64: 1152, 4>}, {pipeline_mode = #tpu.pipeline_mode<synchronous>, transform_indices = @transform_4, window_bounds = array<i64: 1, 4>}, {pipeline_mode = #tpu.pipeline_mode<synchronous>, transform_indices = @transform_5, window_bounds = array<i64: 4, 16>}, {pipeline_mode = #tpu.pipeline_mode<synchronous>, transform_indices = @transform_6, window_bounds = array<i64: 1, 16>}, {transform_indices = @transform_7, window_bounds = array<i64: 1, 8, 16, 16>}]} {
    %c8_i32 = arith.constant 8 : i32
    %0 = arith.muli %arg1, %c8_i32 : i32
    %cst = arith.constant 0.000000e+00 : bf16
    %1 = vector.broadcast %cst : bf16 to vector<1x18x4xbf16>
    %cst_0 = arith.constant 0.000000e+00 : bf16
    %2 = vector.broadcast %cst_0 : bf16 to vector<8x1x4xbf16>
    %c0 = arith.constant 0 : index
    %3 = arith.index_cast %0 : i32 to index
    %c0_1 = arith.constant 0 : index
    %c0_2 = arith.constant 0 : index
    %4 = vector.load %arg2[%c0, %3, %c0_1, %c0_2] : memref<1x16x16x16xf32, #tpu.memory_space<vmem>>, vector<1x8x16x16xf32>
    %5 = vector.shape_cast %4 : vector<1x8x16x16xf32> to vector<8x16x16xf32>
    %6 = vector.shape_cast %5 : vector<8x16x16xf32> to vector<128x16xf32>
    %7 = arith.truncf %6 : vector<128x16xf32> to vector<128x16xbf16>
    %c0_3 = arith.constant 0 : index
    %c0_4 = arith.constant 0 : index
    %8 = vector.load %arg3[%c0_3, %c0_4] : memref<16x4xbf16, #tpu.memory_space<vmem>>, vector<16x4xbf16>
    %cst_5 = arith.constant dense<0.000000e+00> : vector<128x4xf32>
    %9 = tpu.matmul %7, %8, %cst_5 {dimension_numbers = #tpu.dot_dimension_numbers<[1], [0], [0], [1], [0, 0, 1, 1], [], []>} : vector<128x16xbf16>, vector<16x4xbf16>, vector<128x4xf32> -> vector<128x4xf32>
    %c0_6 = arith.constant 0 : index
    %c0_7 = arith.constant 0 : index
    %10 = vector.load %arg4[%c0_6, %c0_7] : memref<1x4xf32, #tpu.memory_space<vmem>>, vector<1x4xf32>
    %11 = vector.broadcast %10 : vector<1x4xf32> to vector<128x4xf32>
    %12 = arith.addf %9, %11 : vector<128x4xf32>
    %cst_8 = arith.constant 0.000000e+00 : f32
    %13 = vector.broadcast %cst_8 : f32 to vector<128x4xf32>
    %14 = arith.maximumf %12, %13 : vector<128x4xf32>
    %15 = vector.shape_cast %14 : vector<128x4xf32> to vector<8x16x4xf32>
    %16 = arith.truncf %15 : vector<8x16x4xf32> to vector<8x16x4xbf16>
    %c1 = arith.constant 1 : index
    %c1_9 = arith.constant 1 : index
    %c0_10 = arith.constant 0 : index
    %17 = vector.load %arg10[%c1, %c1_9, %c0_10] : memref<10x18x4xbf16, #tpu.memory_space<vmem>>, vector<8x16x4xbf16>
    tpu.vector_store %arg10[%c1, %c1_9, %c0_10], %16 {strides = array<i32>} : memref<10x18x4xbf16, #tpu.memory_space<vmem>>, vector<8x16x4xbf16>,
    %c1_11 = arith.constant 1 : index
    %c0_12 = arith.constant 0 : index
    %c0_13 = arith.constant 0 : index
    %18 = vector.load %arg10[%c1_11, %c0_12, %c0_13] : memref<10x18x4xbf16, #tpu.memory_space<vmem>>, vector<8x1x4xbf16>
    tpu.vector_store %arg10[%c1_11, %c0_12, %c0_13], %2 {strides = array<i32>} : memref<10x18x4xbf16, #tpu.memory_space<vmem>>, vector<8x1x4xbf16>,
    %c1_14 = arith.constant 1 : index
    %c17 = arith.constant 17 : index
    %c0_15 = arith.constant 0 : index
    %19 = vector.load %arg10[%c1_14, %c17, %c0_15] : memref<10x18x4xbf16, #tpu.memory_space<vmem>>, vector<8x1x4xbf16>
    tpu.vector_store %arg10[%c1_14, %c17, %c0_15], %2 {strides = array<i32>} : memref<10x18x4xbf16, #tpu.memory_space<vmem>>, vector<8x1x4xbf16>,
    %c0_16 = arith.constant 0 : index
    %c0_17 = arith.constant 0 : index
    %c0_18 = arith.constant 0 : index
    %20 = vector.load %arg10[%c0_16, %c0_17, %c0_18] : memref<10x18x4xbf16, #tpu.memory_space<vmem>>, vector<1x18x4xbf16>
    tpu.vector_store %arg10[%c0_16, %c0_17, %c0_18], %1 {strides = array<i32>} : memref<10x18x4xbf16, #tpu.memory_space<vmem>>, vector<1x18x4xbf16>,
    %c9 = arith.constant 9 : index
    %c0_19 = arith.constant 0 : index
    %c0_20 = arith.constant 0 : index
    %21 = vector.load %arg10[%c9, %c0_19, %c0_20] : memref<10x18x4xbf16, #tpu.memory_space<vmem>>, vector<1x18x4xbf16>
    tpu.vector_store %arg10[%c9, %c0_19, %c0_20], %1 {strides = array<i32>} : memref<10x18x4xbf16, #tpu.memory_space<vmem>>, vector<1x18x4xbf16>,
    %c0_i32 = arith.constant 0 : i32
    %22 = arith.cmpi sgt, %arg1, %c0_i32 : i32
    %23 = arith.extui %22 : i1 to i32
    %c0_i32_21 = arith.constant 0 : i32
    %24 = arith.cmpi ne, %23, %c0_i32_21 : i32
    scf.if %24 {
      %c1_i32_90 = arith.constant 1 : i32
      %90 = arith.subi %0, %c1_i32_90 : i32
      %c0_91 = arith.constant 0 : index
      %91 = arith.index_cast %90 : i32 to index
      %c0_92 = arith.constant 0 : index
      %c0_93 = arith.constant 0 : index
      %92 = vector.load %arg2[%c0_91, %91, %c0_92, %c0_93] : memref<1x16x16x16xf32, #tpu.memory_space<vmem>>, vector<1x1x16x16xf32>
      %93 = vector.shape_cast %92 : vector<1x1x16x16xf32> to vector<1x16x16xf32>
      %94 = vector.shape_cast %93 : vector<1x16x16xf32> to vector<16x16xf32>
      %95 = arith.truncf %94 : vector<16x16xf32> to vector<16x16xbf16>
      %c0_94 = arith.constant 0 : index
      %c0_95 = arith.constant 0 : index
      %96 = vector.load %arg3[%c0_94, %c0_95] : memref<16x4xbf16, #tpu.memory_space<vmem>>, vector<16x4xbf16>
      %cst_96 = arith.constant dense<0.000000e+00> : vector<16x4xf32>
      %97 = tpu.matmul %95, %96, %cst_96 {dimension_numbers = #tpu.dot_dimension_numbers<[1], [0], [0], [1], [0, 0, 1, 1], [], []>} : vector<16x16xbf16>, vector<16x4xbf16>, vector<16x4xf32> -> vector<16x4xf32>
      %c0_97 = arith.constant 0 : index
      %c0_98 = arith.constant 0 : index
      %98 = vector.load %arg4[%c0_97, %c0_98] : memref<1x4xf32, #tpu.memory_space<vmem>>, vector<1x4xf32>
      %99 = vector.broadcast %98 : vector<1x4xf32> to vector<16x4xf32>
      %100 = arith.addf %97, %99 : vector<16x4xf32>
      %cst_99 = arith.constant 0.000000e+00 : f32
      %101 = vector.broadcast %cst_99 : f32 to vector<16x4xf32>
      %102 = arith.maximumf %100, %101 : vector<16x4xf32>
      %103 = vector.shape_cast %102 : vector<16x4xf32> to vector<1x16x4xf32>
      %104 = arith.truncf %103 : vector<1x16x4xf32> to vector<1x16x4xbf16>
      %c0_100 = arith.constant 0 : index
      %c1_101 = arith.constant 1 : index
      %c0_102 = arith.constant 0 : index
      %105 = vector.load %arg10[%c0_100, %c1_101, %c0_102] : memref<10x18x4xbf16, #tpu.memory_space<vmem>>, vector<1x16x4xbf16>
      tpu.vector_store %arg10[%c0_100, %c1_101, %c0_102], %104 {strides = array<i32>} : memref<10x18x4xbf16, #tpu.memory_space<vmem>>, vector<1x16x4xbf16>,
    } else {
    }
    %c1_i32 = arith.constant 1 : i32
    %25 = arith.cmpi slt, %arg1, %c1_i32 : i32
    %26 = arith.extui %25 : i1 to i32
    %c0_i32_22 = arith.constant 0 : i32
    %27 = arith.cmpi ne, %26, %c0_i32_22 : i32
    scf.if %27 {
      %c8_i32_90 = arith.constant 8 : i32
      %90 = arith.addi %0, %c8_i32_90 : i32
      %c0_91 = arith.constant 0 : index
      %91 = arith.index_cast %90 : i32 to index
      %c0_92 = arith.constant 0 : index
      %c0_93 = arith.constant 0 : index
      %92 = vector.load %arg2[%c0_91, %91, %c0_92, %c0_93] : memref<1x16x16x16xf32, #tpu.memory_space<vmem>>, vector<1x1x16x16xf32>
      %93 = vector.shape_cast %92 : vector<1x1x16x16xf32> to vector<1x16x16xf32>
      %94 = vector.shape_cast %93 : vector<1x16x16xf32> to vector<16x16xf32>
      %95 = arith.truncf %94 : vector<16x16xf32> to vector<16x16xbf16>
      %c0_94 = arith.constant 0 : index
      %c0_95 = arith.constant 0 : index
      %96 = vector.load %arg3[%c0_94, %c0_95] : memref<16x4xbf16, #tpu.memory_space<vmem>>, vector<16x4xbf16>
      %cst_96 = arith.constant dense<0.000000e+00> : vector<16x4xf32>
      %97 = tpu.matmul %95, %96, %cst_96 {dimension_numbers = #tpu.dot_dimension_numbers<[1], [0], [0], [1], [0, 0, 1, 1], [], []>} : vector<16x16xbf16>, vector<16x4xbf16>, vector<16x4xf32> -> vector<16x4xf32>
      %c0_97 = arith.constant 0 : index
      %c0_98 = arith.constant 0 : index
      %98 = vector.load %arg4[%c0_97, %c0_98] : memref<1x4xf32, #tpu.memory_space<vmem>>, vector<1x4xf32>
      %99 = vector.broadcast %98 : vector<1x4xf32> to vector<16x4xf32>
      %100 = arith.addf %97, %99 : vector<16x4xf32>
      %cst_99 = arith.constant 0.000000e+00 : f32
      %101 = vector.broadcast %cst_99 : f32 to vector<16x4xf32>
      %102 = arith.maximumf %100, %101 : vector<16x4xf32>
      %103 = vector.shape_cast %102 : vector<16x4xf32> to vector<1x16x4xf32>
      %104 = arith.truncf %103 : vector<1x16x4xf32> to vector<1x16x4xbf16>
      %c9_100 = arith.constant 9 : index
      %c1_101 = arith.constant 1 : index
      %c0_102 = arith.constant 0 : index
      %105 = vector.load %arg10[%c9_100, %c1_101, %c0_102] : memref<10x18x4xbf16, #tpu.memory_space<vmem>>, vector<1x16x4xbf16>
      tpu.vector_store %arg10[%c9_100, %c1_101, %c0_102], %104 {strides = array<i32>} : memref<10x18x4xbf16, #tpu.memory_space<vmem>>, vector<1x16x4xbf16>,
    } else {
    }
    %cst_23 = arith.constant 0.000000e+00 : bf16
    %28 = vector.broadcast %cst_23 : bf16 to vector<128x124xbf16>
    %c0_24 = arith.constant 0 : index
    %c0_25 = arith.constant 0 : index
    %c0_26 = arith.constant 0 : index
    %29 = vector.load %arg10[%c0_24, %c0_25, %c0_26] : memref<10x18x4xbf16, #tpu.memory_space<vmem>>, vector<8x16x4xbf16>
    %30 = vector.shape_cast %29 : vector<8x16x4xbf16> to vector<128x4xbf16>
    %c0_27 = arith.constant 0 : index
    %c0_28 = arith.constant 0 : index
    %31 = vector.load %arg11[%c0_27, %c0_28] : memref<128x1152xbf16, #tpu.memory_space<vmem>>, vector<128x4xbf16>
    tpu.vector_store %arg11[%c0_27, %c0_28], %30 {strides = array<i32>} : memref<128x1152xbf16, #tpu.memory_space<vmem>>, vector<128x4xbf16>,
    %c0_29 = arith.constant 0 : index
    %c4 = arith.constant 4 : index
    %32 = vector.load %arg11[%c0_29, %c4] : memref<128x1152xbf16, #tpu.memory_space<vmem>>, vector<128x124xbf16>
    tpu.vector_store %arg11[%c0_29, %c4], %28 {strides = array<i32>} : memref<128x1152xbf16, #tpu.memory_space<vmem>>, vector<128x124xbf16>,
    %c0_30 = arith.constant 0 : index
    %c1_31 = arith.constant 1 : index
    %c0_32 = arith.constant 0 : index
    %33 = vector.load %arg10[%c0_30, %c1_31, %c0_32] : memref<10x18x4xbf16, #tpu.memory_space<vmem>>, vector<8x16x4xbf16>
    %34 = vector.shape_cast %33 : vector<8x16x4xbf16> to vector<128x4xbf16>
    %c0_33 = arith.constant 0 : index
    %c128 = arith.constant 128 : index
    %35 = vector.load %arg11[%c0_33, %c128] : memref<128x1152xbf16, #tpu.memory_space<vmem>>, vector<128x4xbf16>
    tpu.vector_store %arg11[%c0_33, %c128], %34 {strides = array<i32>} : memref<128x1152xbf16, #tpu.memory_space<vmem>>, vector<128x4xbf16>,
    %c0_34 = arith.constant 0 : index
    %c132 = arith.constant 132 : index
    %36 = vector.load %arg11[%c0_34, %c132] : memref<128x1152xbf16, #tpu.memory_space<vmem>>, vector<128x124xbf16>
    tpu.vector_store %arg11[%c0_34, %c132], %28 {strides = array<i32>} : memref<128x1152xbf16, #tpu.memory_space<vmem>>, vector<128x124xbf16>,
    %c0_35 = arith.constant 0 : index
    %c2 = arith.constant 2 : index
    %c0_36 = arith.constant 0 : index
    %37 = vector.load %arg10[%c0_35, %c2, %c0_36] : memref<10x18x4xbf16, #tpu.memory_space<vmem>>, vector<8x16x4xbf16>
    %38 = vector.shape_cast %37 : vector<8x16x4xbf16> to vector<128x4xbf16>
    %c0_37 = arith.constant 0 : index
    %c256 = arith.constant 256 : index
    %39 = vector.load %arg11[%c0_37, %c256] : memref<128x1152xbf16, #tpu.memory_space<vmem>>, vector<128x4xbf16>
    tpu.vector_store %arg11[%c0_37, %c256], %38 {strides = array<i32>} : memref<128x1152xbf16, #tpu.memory_space<vmem>>, vector<128x4xbf16>,
    %c0_38 = arith.constant 0 : index
    %c260 = arith.constant 260 : index
    %40 = vector.load %arg11[%c0_38, %c260] : memref<128x1152xbf16, #tpu.memory_space<vmem>>, vector<128x124xbf16>
    tpu.vector_store %arg11[%c0_38, %c260], %28 {strides = array<i32>} : memref<128x1152xbf16, #tpu.memory_space<vmem>>, vector<128x124xbf16>,
    %c1_39 = arith.constant 1 : index
    %c0_40 = arith.constant 0 : index
    %c0_41 = arith.constant 0 : index
    %41 = vector.load %arg10[%c1_39, %c0_40, %c0_41] : memref<10x18x4xbf16, #tpu.memory_space<vmem>>, vector<8x16x4xbf16>
    %42 = vector.shape_cast %41 : vector<8x16x4xbf16> to vector<128x4xbf16>
    %c0_42 = arith.constant 0 : index
    %c384 = arith.constant 384 : index
    %43 = vector.load %arg11[%c0_42, %c384] : memref<128x1152xbf16, #tpu.memory_space<vmem>>, vector<128x4xbf16>
    tpu.vector_store %arg11[%c0_42, %c384], %42 {strides = array<i32>} : memref<128x1152xbf16, #tpu.memory_space<vmem>>, vector<128x4xbf16>,
    %c0_43 = arith.constant 0 : index
    %c388 = arith.constant 388 : index
    %44 = vector.load %arg11[%c0_43, %c388] : memref<128x1152xbf16, #tpu.memory_space<vmem>>, vector<128x124xbf16>
    tpu.vector_store %arg11[%c0_43, %c388], %28 {strides = array<i32>} : memref<128x1152xbf16, #tpu.memory_space<vmem>>, vector<128x124xbf16>,
    %c1_44 = arith.constant 1 : index
    %c1_45 = arith.constant 1 : index
    %c0_46 = arith.constant 0 : index
    %45 = vector.load %arg10[%c1_44, %c1_45, %c0_46] : memref<10x18x4xbf16, #tpu.memory_space<vmem>>, vector<8x16x4xbf16>
    %46 = vector.shape_cast %45 : vector<8x16x4xbf16> to vector<128x4xbf16>
    %c0_47 = arith.constant 0 : index
    %c512 = arith.constant 512 : index
    %47 = vector.load %arg11[%c0_47, %c512] : memref<128x1152xbf16, #tpu.memory_space<vmem>>, vector<128x4xbf16>
    tpu.vector_store %arg11[%c0_47, %c512], %46 {strides = array<i32>} : memref<128x1152xbf16, #tpu.memory_space<vmem>>, vector<128x4xbf16>,
    %c0_48 = arith.constant 0 : index
    %c516 = arith.constant 516 : index
    %48 = vector.load %arg11[%c0_48, %c516] : memref<128x1152xbf16, #tpu.memory_space<vmem>>, vector<128x124xbf16>
    tpu.vector_store %arg11[%c0_48, %c516], %28 {strides = array<i32>} : memref<128x1152xbf16, #tpu.memory_space<vmem>>, vector<128x124xbf16>,
    %c1_49 = arith.constant 1 : index
    %c2_50 = arith.constant 2 : index
    %c0_51 = arith.constant 0 : index
    %49 = vector.load %arg10[%c1_49, %c2_50, %c0_51] : memref<10x18x4xbf16, #tpu.memory_space<vmem>>, vector<8x16x4xbf16>
    %50 = vector.shape_cast %49 : vector<8x16x4xbf16> to vector<128x4xbf16>
    %c0_52 = arith.constant 0 : index
    %c640 = arith.constant 640 : index
    %51 = vector.load %arg11[%c0_52, %c640] : memref<128x1152xbf16, #tpu.memory_space<vmem>>, vector<128x4xbf16>
    tpu.vector_store %arg11[%c0_52, %c640], %50 {strides = array<i32>} : memref<128x1152xbf16, #tpu.memory_space<vmem>>, vector<128x4xbf16>,
    %c0_53 = arith.constant 0 : index
    %c644 = arith.constant 644 : index
    %52 = vector.load %arg11[%c0_53, %c644] : memref<128x1152xbf16, #tpu.memory_space<vmem>>, vector<128x124xbf16>
    tpu.vector_store %arg11[%c0_53, %c644], %28 {strides = array<i32>} : memref<128x1152xbf16, #tpu.memory_space<vmem>>, vector<128x124xbf16>,
    %c2_54 = arith.constant 2 : index
    %c0_55 = arith.constant 0 : index
    %c0_56 = arith.constant 0 : index
    %53 = vector.load %arg10[%c2_54, %c0_55, %c0_56] : memref<10x18x4xbf16, #tpu.memory_space<vmem>>, vector<8x16x4xbf16>
    %54 = vector.shape_cast %53 : vector<8x16x4xbf16> to vector<128x4xbf16>
    %c0_57 = arith.constant 0 : index
    %c768 = arith.constant 768 : index
    %55 = vector.load %arg11[%c0_57, %c768] : memref<128x1152xbf16, #tpu.memory_space<vmem>>, vector<128x4xbf16>
    tpu.vector_store %arg11[%c0_57, %c768], %54 {strides = array<i32>} : memref<128x1152xbf16, #tpu.memory_space<vmem>>, vector<128x4xbf16>,
    %c0_58 = arith.constant 0 : index
    %c772 = arith.constant 772 : index
    %56 = vector.load %arg11[%c0_58, %c772] : memref<128x1152xbf16, #tpu.memory_space<vmem>>, vector<128x124xbf16>
    tpu.vector_store %arg11[%c0_58, %c772], %28 {strides = array<i32>} : memref<128x1152xbf16, #tpu.memory_space<vmem>>, vector<128x124xbf16>,
    %c2_59 = arith.constant 2 : index
    %c1_60 = arith.constant 1 : index
    %c0_61 = arith.constant 0 : index
    %57 = vector.load %arg10[%c2_59, %c1_60, %c0_61] : memref<10x18x4xbf16, #tpu.memory_space<vmem>>, vector<8x16x4xbf16>
    %58 = vector.shape_cast %57 : vector<8x16x4xbf16> to vector<128x4xbf16>
    %c0_62 = arith.constant 0 : index
    %c896 = arith.constant 896 : index
    %59 = vector.load %arg11[%c0_62, %c896] : memref<128x1152xbf16, #tpu.memory_space<vmem>>, vector<128x4xbf16>
    tpu.vector_store %arg11[%c0_62, %c896], %58 {strides = array<i32>} : memref<128x1152xbf16, #tpu.memory_space<vmem>>, vector<128x4xbf16>,
    %c0_63 = arith.constant 0 : index
    %c900 = arith.constant 900 : index
    %60 = vector.load %arg11[%c0_63, %c900] : memref<128x1152xbf16, #tpu.memory_space<vmem>>, vector<128x124xbf16>
    tpu.vector_store %arg11[%c0_63, %c900], %28 {strides = array<i32>} : memref<128x1152xbf16, #tpu.memory_space<vmem>>, vector<128x124xbf16>,
    %c2_64 = arith.constant 2 : index
    %c2_65 = arith.constant 2 : index
    %c0_66 = arith.constant 0 : index
    %61 = vector.load %arg10[%c2_64, %c2_65, %c0_66] : memref<10x18x4xbf16, #tpu.memory_space<vmem>>, vector<8x16x4xbf16>
    %62 = vector.shape_cast %61 : vector<8x16x4xbf16> to vector<128x4xbf16>
    %c0_67 = arith.constant 0 : index
    %c1024 = arith.constant 1024 : index
    %63 = vector.load %arg11[%c0_67, %c1024] : memref<128x1152xbf16, #tpu.memory_space<vmem>>, vector<128x4xbf16>
    tpu.vector_store %arg11[%c0_67, %c1024], %62 {strides = array<i32>} : memref<128x1152xbf16, #tpu.memory_space<vmem>>, vector<128x4xbf16>,
    %c0_68 = arith.constant 0 : index
    %c1028 = arith.constant 1028 : index
    %64 = vector.load %arg11[%c0_68, %c1028] : memref<128x1152xbf16, #tpu.memory_space<vmem>>, vector<128x124xbf16>
    tpu.vector_store %arg11[%c0_68, %c1028], %28 {strides = array<i32>} : memref<128x1152xbf16, #tpu.memory_space<vmem>>, vector<128x124xbf16>,
    %c0_69 = arith.constant 0 : index
    %c0_70 = arith.constant 0 : index
    %65 = vector.load %arg11[%c0_69, %c0_70] : memref<128x1152xbf16, #tpu.memory_space<vmem>>, vector<128x1152xbf16>
    %c0_71 = arith.constant 0 : index
    %c0_72 = arith.constant 0 : index
    %66 = vector.load %arg5[%c0_71, %c0_72] : memref<1152x4xbf16, #tpu.memory_space<vmem>>, vector<1152x4xbf16>
    %cst_73 = arith.constant dense<0.000000e+00> : vector<128x4xf32>
    %67 = tpu.matmul %65, %66, %cst_73 {dimension_numbers = #tpu.dot_dimension_numbers<[1], [0], [0], [1], [0, 0, 1, 1], [], []>} : vector<128x1152xbf16>, vector<1152x4xbf16>, vector<128x4xf32> -> vector<128x4xf32>
    %c0_74 = arith.constant 0 : index
    %c0_75 = arith.constant 0 : index
    %68 = vector.load %arg6[%c0_74, %c0_75] : memref<1x4xf32, #tpu.memory_space<vmem>>, vector<1x4xf32>
    %69 = vector.broadcast %68 : vector<1x4xf32> to vector<128x4xf32>
    %70 = arith.addf %67, %69 : vector<128x4xf32>
    %cst_76 = arith.constant 0.000000e+00 : f32
    %71 = vector.broadcast %cst_76 : f32 to vector<128x4xf32>
    %72 = arith.maximumf %70, %71 : vector<128x4xf32>
    %73 = arith.truncf %72 : vector<128x4xf32> to vector<128x4xbf16>
    %c0_77 = arith.constant 0 : index
    %c0_78 = arith.constant 0 : index
    %74 = vector.load %arg7[%c0_77, %c0_78] : memref<4x16xbf16, #tpu.memory_space<vmem>>, vector<4x16xbf16>
    %cst_79 = arith.constant dense<0.000000e+00> : vector<128x16xf32>
    %75 = tpu.matmul %73, %74, %cst_79 {dimension_numbers = #tpu.dot_dimension_numbers<[1], [0], [0], [1], [0, 0, 1, 1], [], []>} : vector<128x4xbf16>, vector<4x16xbf16>, vector<128x16xf32> -> vector<128x16xf32>
    %c0_80 = arith.constant 0 : index
    %c0_81 = arith.constant 0 : index
    %76 = vector.load %arg8[%c0_80, %c0_81] : memref<1x16xf32, #tpu.memory_space<vmem>>, vector<1x16xf32>
    %77 = vector.broadcast %76 : vector<1x16xf32> to vector<128x16xf32>
    %78 = arith.addf %75, %77 : vector<128x16xf32>
    %c0_82 = arith.constant 0 : index
    %79 = arith.index_cast %0 : i32 to index
    %c0_83 = arith.constant 0 : index
    %c0_84 = arith.constant 0 : index
    %80 = vector.load %arg2[%c0_82, %79, %c0_83, %c0_84] : memref<1x16x16x16xf32, #tpu.memory_space<vmem>>, vector<1x8x16x16xf32>
    %81 = vector.shape_cast %80 : vector<1x8x16x16xf32> to vector<8x16x16xf32>
    %82 = vector.shape_cast %81 : vector<8x16x16xf32> to vector<128x16xf32>
    %83 = arith.addf %78, %82 : vector<128x16xf32>
    %cst_85 = arith.constant 0.000000e+00 : f32
    %84 = vector.broadcast %cst_85 : f32 to vector<128x16xf32>
    %85 = arith.maximumf %83, %84 : vector<128x16xf32>
    %86 = vector.shape_cast %85 : vector<128x16xf32> to vector<8x16x16xf32>
    %c0_86 = arith.constant 0 : index
    %c0_87 = arith.constant 0 : index
    %c0_88 = arith.constant 0 : index
    %c0_89 = arith.constant 0 : index
    %87 = vector.load %arg9[%c0_86, %c0_87, %c0_88, %c0_89] : memref<1x8x16x16xf32, #tpu.memory_space<vmem>>, vector<1x8x16x16xf32>
    %88 = vector.shape_cast %87 : vector<1x8x16x16xf32> to vector<8x16x16xf32>
    %89 = vector.shape_cast %86 : vector<8x16x16xf32> to vector<1x8x16x16xf32>
    tpu.vector_store %arg9[%c0_86, %c0_87, %c0_88, %c0_89], %89 {strides = array<i32>} : memref<1x8x16x16xf32, #tpu.memory_space<vmem>>, vector<1x8x16x16xf32>,
    return
  }
  func.func @transform_0(%arg0: i32, %arg1: i32) -> (i32, i32, i32, i32) {
    %c0_i32 = arith.constant 0 : i32
    %c0_i32_0 = arith.constant 0 : i32
    %c0_i32_1 = arith.constant 0 : i32
    %c0_i32_2 = arith.constant 0 : i32
    return %arg0, %c0_i32, %c0_i32_0, %c0_i32_1 : i32, i32, i32, i32
  }
  func.func @transform_1(%arg0: i32, %arg1: i32) -> (i32, i32) {
    %c0_i32 = arith.constant 0 : i32
    %c0_i32_0 = arith.constant 0 : i32
    %c0_i32_1 = arith.constant 0 : i32
    return %c0_i32, %c0_i32_0 : i32, i32
  }
  func.func @transform_2(%arg0: i32, %arg1: i32) -> (i32, i32) {
    %c0_i32 = arith.constant 0 : i32
    %c0_i32_0 = arith.constant 0 : i32
    %c0_i32_1 = arith.constant 0 : i32
    return %c0_i32, %c0_i32_0 : i32, i32
  }
  func.func @transform_3(%arg0: i32, %arg1: i32) -> (i32, i32) {
    %c0_i32 = arith.constant 0 : i32
    %c0_i32_0 = arith.constant 0 : i32
    %c0_i32_1 = arith.constant 0 : i32
    return %c0_i32, %c0_i32_0 : i32, i32
  }
  func.func @transform_4(%arg0: i32, %arg1: i32) -> (i32, i32) {
    %c0_i32 = arith.constant 0 : i32
    %c0_i32_0 = arith.constant 0 : i32
    %c0_i32_1 = arith.constant 0 : i32
    return %c0_i32, %c0_i32_0 : i32, i32
  }
  func.func @transform_5(%arg0: i32, %arg1: i32) -> (i32, i32) {
    %c0_i32 = arith.constant 0 : i32
    %c0_i32_0 = arith.constant 0 : i32
    %c0_i32_1 = arith.constant 0 : i32
    return %c0_i32, %c0_i32_0 : i32, i32
  }
  func.func @transform_6(%arg0: i32, %arg1: i32) -> (i32, i32) {
    %c0_i32 = arith.constant 0 : i32
    %c0_i32_0 = arith.constant 0 : i32
    %c0_i32_1 = arith.constant 0 : i32
    return %c0_i32, %c0_i32_0 : i32, i32
  }
  func.func @transform_7(%arg0: i32, %arg1: i32) -> (i32, i32, i32, i32) {
    %c0_i32 = arith.constant 0 : i32
    %c0_i32_0 = arith.constant 0 : i32
    %c0_i32_1 = arith.constant 0 : i32
    return %arg0, %arg1, %c0_i32, %c0_i32_0 : i32, i32, i32, i32
  }
}

</mosaic_0001>

<llo_original>
// kernel: tpu_custom_call.1
$region0: #{tpu_custom_call.1}
  #allocation0 [shape = 'u32[]', space=smem, size = 0x4, offset = 0x4, fixed_abs, tag = 'smem constant byte address 0x4 - core index']
  #allocation1 [shape = 'u32[144,128]{1,0:T(1,128)}', space=vmem, size = 0x12000, scoped, tag = 'internal scratch']
  #allocation2 [shape = 'bf16[10,18,4]{2,1,0:T(8,128)(2,1)}', space=vmem, size = 0xf000, scoped, tag = 'scratch operand']
  #allocation3 [shape = 'bf16[128,1152]{1,0:T(8,128)(2,1)}', space=vmem, size = 0x48000, scoped, tag = 'scratch operand']
  %s0 = inlined_call_operand.vmem [shape: f32[2,16,16,16], index: 0, kind: input, shape index: {}]
  %s1 = inlined_call_operand.vmem [shape: bf16[16,4], index: 1, kind: input, shape index: {}]
  %s2 = inlined_call_operand.vmem [shape: f32[1,4], index: 2, kind: input, shape index: {}]
  %s3 = inlined_call_operand.vmem [shape: bf16[1152,4], index: 3, kind: input, shape index: {}]
  %s4 = inlined_call_operand.vmem [shape: f32[1,4], index: 4, kind: input, shape index: {}]
  %s5 = inlined_call_operand.vmem [shape: bf16[4,16], index: 5, kind: input, shape index: {}]
  %s6 = inlined_call_operand.vmem [shape: f32[1,16], index: 6, kind: input, shape index: {}]
  %s7 = inlined_call_operand.hbm [shape: f32[2,16,16,16], index: 7, kind: output, shape index: {}]
  %s8 = sld [smem:[#allocation0]]
  $region69: #{tpu_custom_call.1} parent=0
    _
  %s10 = ssub.s32 1, %s8
  %s11 = scalar_select 0, %s10, %s8
  $region1: #{tpu_custom_call.1} parent=0
    #allocation4 [shape = 'u8[131072]{0}', space=vmem, size = 0x20000, scoped, tag = 'output window, operand 0']
    #allocation5 [shape = 's32[2]{0}', space=sflag, size = 0x8, scoped, tag = 'scoped memory for tpu_custom_call.1']
    %12 = vsyncpa [#allocation5], 0
    %s13 = scalar_lea.sflag [#allocation5], 1
    %14 = vsyncpa %s13, 0
    loop: start=0, step=1, limit=6
    $region2: #{tpu_custom_call.1} parent=1 // loop_pre_header
      _
    $region3: #{tpu_custom_call.1} parent=1 // loop_header
      %s16 = sphi 0, %s20
      %p17 = scmp.ge.s32.totalorder %s16, 6
      %s23 = sphi 0, %s35
      %s24 = sphi 0, %s31
      %s25 = sphi 0, %s23
      %s26 = sphi 0, %s24
      %s27 = sphi 0, %s25
      %s28 = sphi 0, %s26
      %s38 = sphi 0, %s40
      %s41 = sphi 0, %s38
      %s42 = sphi 0, %s41
      %s58 = sphi 0, %s42
      %s62 = sphi 0, %s62
      %s64 = sphi 0, %s62
      %s65 = sphi 0, %s64
      %s79 = sphi 0, %s65
      %s83 = sphi 0, %s83
      %s85 = sphi 0, %s83
      %s86 = sphi 0, %s85
      %s100 = sphi 0, %s86
      %s104 = sphi 0, %s104
      %s106 = sphi 0, %s104
      %s107 = sphi 0, %s106
      %s121 = sphi 0, %s107
      %s125 = sphi 0, %s125
      %s127 = sphi 0, %s125
      %s128 = sphi 0, %s127
      %s142 = sphi 0, %s128
      %s146 = sphi 0, %s146
      %s148 = sphi 0, %s146
      %s149 = sphi 0, %s148
      %s163 = sphi 0, %s149
      %s167 = sphi 0, %s167
      %s169 = sphi 0, %s167
      %s170 = sphi 0, %s169
      %s184 = sphi 0, %s170
      %s192 = sphi 0, %s194
      %s195 = sphi 0, %s192
      %s196 = sphi 0, %s195
      %s212 = sphi 0, %s196
    $region4: #{tpu_custom_call.1} parent=1 // loop_header_branch
      %19 = sbr.rel (%p17) target = $region8
    $region5: #{tpu_custom_call.1} parent=1 // loop_body
      %s21 = ssub.s32 %s16, 1
      %s22 = ssub.s32 %s16, 2
      %s29 = sadd.s32 1, %s24
      %p30 = scmp.ge.s32.totalorder %s29, 2
      %s31 = scalar_select %p30, 0, %s29
      %s32 = sadd.s32 1, %s23
      %s33 = scalar_select %p30, %s32, %s23
      %p34 = scmp.ge.s32.totalorder %s33, 2
      %s35 = scalar_select %p34, 0, %s33
      %s36 = ssub.s32 %s23, %s35
      %p37 = scmp.eq.s32.totalorder %s36, 0
      %s39 = sadd.s32 %s38, 1
      %s40 = scalar_select %p37, %s38, %s39
      %p43 = pneg %p37
      %p44 = scmp.eq.s32.totalorder %s16, 3
      %p45 = por %p43, %p44
      %p46 = scmp.ne.s32.totalorder %s38, %s41
      %p47 = scmp.eq.s32.totalorder %s16, 0
      %p48 = por %p46, %p47
      %p49 = scmp.ne.s32.totalorder %s38, %s41
      %p50 = scmp.eq.s32.totalorder %s21, 3
      %p51 = por %p49, %p50
      %p52 = scmp.ne.s32.totalorder %s41, %s42
      %p53 = scmp.eq.s32.totalorder %s21, 0
      %p54 = por %p52, %p53
      %p55 = scmp.ne.s32.totalorder %s41, %s42
      %p56 = scmp.eq.s32.totalorder %s22, 3
      %p57 = por %p55, %p56
      %p59 = scmp.ne.s32.totalorder %s42, %s58
      %p60 = scmp.eq.s32.totalorder %s22, 0
      %p61 = por %p59, %p60
      %s63 = sadd.s32 %s62, 1
      %p66 = scmp.eq.s32.totalorder %s16, 3
      %p67 = scmp.ne.s32.totalorder %s62, %s64
      %p68 = scmp.eq.s32.totalorder %s16, 0
      %p69 = por %p67, %p68
      %p70 = scmp.ne.s32.totalorder %s62, %s64
      %p71 = scmp.eq.s32.totalorder %s21, 3
      %p72 = por %p70, %p71
      %p73 = scmp.ne.s32.totalorder %s64, %s65
      %p74 = scmp.eq.s32.totalorder %s21, 0
      %p75 = por %p73, %p74
      %p76 = scmp.ne.s32.totalorder %s64, %s65
      %p77 = scmp.eq.s32.totalorder %s22, 3
      %p78 = por %p76, %p77
      %p80 = scmp.ne.s32.totalorder %s65, %s79
      %p81 = scmp.eq.s32.totalorder %s22, 0
      %p82 = por %p80, %p81
      %s84 = sadd.s32 %s83, 1
      %p87 = scmp.eq.s32.totalorder %s16, 3
      %p88 = scmp.ne.s32.totalorder %s83, %s85
      %p89 = scmp.eq.s32.totalorder %s16, 0
      %p90 = por %p88, %p89
      %p91 = scmp.ne.s32.totalorder %s83, %s85
      %p92 = scmp.eq.s32.totalorder %s21, 3
      %p93 = por %p91, %p92
      %p94 = scmp.ne.s32.totalorder %s85, %s86
      %p95 = scmp.eq.s32.totalorder %s21, 0
      %p96 = por %p94, %p95
      %p97 = scmp.ne.s32.totalorder %s85, %s86
      %p98 = scmp.eq.s32.totalorder %s22, 3
      %p99 = por %p97, %p98
      %p101 = scmp.ne.s32.totalorder %s86, %s100
      %p102 = scmp.eq.s32.totalorder %s22, 0
      %p103 = por %p101, %p102
      %s105 = sadd.s32 %s104, 1
      %p108 = scmp.eq.s32.totalorder %s16, 3
      %p109 = scmp.ne.s32.totalorder %s104, %s106
      %p110 = scmp.eq.s32.totalorder %s16, 0
      %p111 = por %p109, %p110
      %p112 = scmp.ne.s32.totalorder %s104, %s106
      %p113 = scmp.eq.s32.totalorder %s21, 3
      %p114 = por %p112, %p113
      %p115 = scmp.ne.s32.totalorder %s106, %s107
      %p116 = scmp.eq.s32.totalorder %s21, 0
      %p117 = por %p115, %p116
      %p118 = scmp.ne.s32.totalorder %s106, %s107
      %p119 = scmp.eq.s32.totalorder %s22, 3
      %p120 = por %p118, %p119
      %p122 = scmp.ne.s32.totalorder %s107, %s121
      %p123 = scmp.eq.s32.totalorder %s22, 0
      %p124 = por %p122, %p123
      %s126 = sadd.s32 %s125, 1
      %p129 = scmp.eq.s32.totalorder %s16, 3
      %p130 = scmp.ne.s32.totalorder %s125, %s127
      %p131 = scmp.eq.s32.totalorder %s16, 0
      %p132 = por %p130, %p131
      %p133 = scmp.ne.s32.totalorder %s125, %s127
      %p134 = scmp.eq.s32.totalorder %s21, 3
      %p135 = por %p133, %p134
      %p136 = scmp.ne.s32.totalorder %s127, %s128
      %p137 = scmp.eq.s32.totalorder %s21, 0
      %p138 = por %p136, %p137
      %p139 = scmp.ne.s32.totalorder %s127, %s128
      %p140 = scmp.eq.s32.totalorder %s22, 3
      %p141 = por %p139, %p140
      %p143 = scmp.ne.s32.totalorder %s128, %s142
      %p144 = scmp.eq.s32.totalorder %s22, 0
      %p145 = por %p143, %p144
      %s147 = sadd.s32 %s146, 1
      %p150 = scmp.eq.s32.totalorder %s16, 3
      %p151 = scmp.ne.s32.totalorder %s146, %s148
      %p152 = scmp.eq.s32.totalorder %s16, 0
      %p153 = por %p151, %p152
      %p154 = scmp.ne.s32.totalorder %s146, %s148
      %p155 = scmp.eq.s32.totalorder %s21, 3
      %p156 = por %p154, %p155
      %p157 = scmp.ne.s32.totalorder %s148, %s149
      %p158 = scmp.eq.s32.totalorder %s21, 0
      %p159 = por %p157, %p158
      %p160 = scmp.ne.s32.totalorder %s148, %s149
      %p161 = scmp.eq.s32.totalorder %s22, 3
      %p162 = por %p160, %p161
      %p164 = scmp.ne.s32.totalorder %s149, %s163
      %p165 = scmp.eq.s32.totalorder %s22, 0
      %p166 = por %p164, %p165
      %s168 = sadd.s32 %s167, 1
      %p171 = scmp.eq.s32.totalorder %s16, 3
      %p172 = scmp.ne.s32.totalorder %s167, %s169
      %p173 = scmp.eq.s32.totalorder %s16, 0
      %p174 = por %p172, %p173
      %p175 = scmp.ne.s32.totalorder %s167, %s169
      %p176 = scmp.eq.s32.totalorder %s21, 3
      %p177 = por %p175, %p176
      %p178 = scmp.ne.s32.totalorder %s169, %s170
      %p179 = scmp.eq.s32.totalorder %s21, 0
      %p180 = por %p178, %p179
      %p181 = scmp.ne.s32.totalorder %s169, %s170
      %p182 = scmp.eq.s32.totalorder %s22, 3
      %p183 = por %p181, %p182
      %p185 = scmp.ne.s32.totalorder %s170, %s184
      %p186 = scmp.eq.s32.totalorder %s22, 0
      %p187 = por %p185, %p186
      %s188 = ssub.s32 %s23, %s35
      %s189 = ssub.s32 %s24, %s31
      %s190 = sor.u32 %s188, %s189
      %p191 = scmp.eq.s32.totalorder %s190, 0
      %s193 = sadd.s32 %s192, 1
      %s194 = scalar_select %p191, %s192, %s193
      %p197 = pneg %p191
      %p198 = scmp.eq.s32.totalorder %s16, 3
      %p199 = por %p197, %p198
      %p200 = scmp.ne.s32.totalorder %s192, %s195
      %p201 = scmp.eq.s32.totalorder %s16, 0
      %p202 = por %p200, %p201
      %p203 = scmp.ne.s32.totalorder %s192, %s195
      %p204 = scmp.eq.s32.totalorder %s21, 3
      %p205 = por %p203, %p204
      %p206 = scmp.ne.s32.totalorder %s195, %s196
      %p207 = scmp.eq.s32.totalorder %s21, 0
      %p208 = por %p206, %p207
      %p209 = scmp.ne.s32.totalorder %s195, %s196
      %p210 = scmp.eq.s32.totalorder %s22, 3
      %p211 = por %p209, %p210
      %p213 = scmp.ne.s32.totalorder %s196, %s212
      %p214 = scmp.eq.s32.totalorder %s22, 0
      %p215 = por %p213, %p214
      %p216 = scmp.le.s32.totalorder 1, %s16
      %p217 = scmp.lt.s32.totalorder %s16, 5
      %p218 = pnand %p216, %p217
      %p219 = pneg %p218
      // Predicated region
      $region9: #{tpu_custom_call.1} parent=5 // pred_check
        _
      $region10: #{tpu_custom_call.1} parent=5 // pred_check_branch
        %221 = sbr.rel (%p218) target = $region12
      $region11: #{tpu_custom_call.1} parent=5 // pred_region
        %s222 = ssub.s32 %s16, 1
        // Predicated region
        $region13: #{tpu_custom_call.1} parent=11 // pred_check
          %p223 = pneg %p75
        $region14: #{tpu_custom_call.1} parent=11 // pred_check_branch
          %225 = sbr.rel (%p223) target = $region16
        $region15: #{tpu_custom_call.1} parent=11 // pred_region
          _
        $region16: #{tpu_custom_call.1} parent=11 // pred_fallthru
          _
        // Predicated region
        $region17: #{tpu_custom_call.1} parent=11 // pred_check
          %p226 = pneg %p96
        $region18: #{tpu_custom_call.1} parent=11 // pred_check_branch
          %228 = sbr.rel (%p226) target = $region20
        $region19: #{tpu_custom_call.1} parent=11 // pred_region
          _
        $region20: #{tpu_custom_call.1} parent=11 // pred_fallthru
          _
        // Predicated region
        $region21: #{tpu_custom_call.1} parent=11 // pred_check
          %p229 = pneg %p117
        $region22: #{tpu_custom_call.1} parent=11 // pred_check_branch
          %231 = sbr.rel (%p229) target = $region24
        $region23: #{tpu_custom_call.1} parent=11 // pred_region
          _
        $region24: #{tpu_custom_call.1} parent=11 // pred_fallthru
          _
        // Predicated region
        $region25: #{tpu_custom_call.1} parent=11 // pred_check
          %p232 = pneg %p138
        $region26: #{tpu_custom_call.1} parent=11 // pred_check_branch
          %234 = sbr.rel (%p232) target = $region28
        $region27: #{tpu_custom_call.1} parent=11 // pred_region
          _
        $region28: #{tpu_custom_call.1} parent=11 // pred_fallthru
          _
        // Predicated region
        $region29: #{tpu_custom_call.1} parent=11 // pred_check
          %p235 = pneg %p159
        $region30: #{tpu_custom_call.1} parent=11 // pred_check_branch
          %237 = sbr.rel (%p235) target = $region32
        $region31: #{tpu_custom_call.1} parent=11 // pred_region
          _
        $region32: #{tpu_custom_call.1} parent=11 // pred_fallthru
          _
        // Predicated region
        $region33: #{tpu_custom_call.1} parent=11 // pred_check
          %p238 = pneg %p180
        $region34: #{tpu_custom_call.1} parent=11 // pred_check_branch
          %240 = sbr.rel (%p238) target = $region36
        $region35: #{tpu_custom_call.1} parent=11 // pred_region
          _
        $region36: #{tpu_custom_call.1} parent=11 // pred_fallthru
          _
      $region12: #{tpu_custom_call.1} parent=5 // pred_fallthru
        _
      %p241 = scmp.lt.s32.totalorder %s16, 4
      // Predicated region
      $region37: #{tpu_custom_call.1} parent=5 // pred_check
        %p242 = pneg %p241
      $region38: #{tpu_custom_call.1} parent=5 // pred_check_branch
        %244 = sbr.rel (%p242) target = $region40
      $region39: #{tpu_custom_call.1} parent=5 // pred_region
        // Predicated region
        $region41: #{tpu_custom_call.1} parent=39 // pred_check
          %p245 = pneg %p48
        $region42: #{tpu_custom_call.1} parent=39 // pred_check_branch
          %247 = sbr.rel (%p245) target = $region44
        $region43: #{tpu_custom_call.1} parent=39 // pred_region
          %p248 = scmp.lt.s32.totalorder %s23, 1
          %s249 = scalar_select %p248, %s23, 1
          %s250 = smul.addr %s249, 32
          %s251 = smul.addr %s250, 8
          %s252 = scalar_lea.vmem %s0, %s251
        $region44: #{tpu_custom_call.1} parent=39 // pred_fallthru
          _
      $region40: #{tpu_custom_call.1} parent=5 // pred_fallthru
        _
      %p253 = scmp.le.s32.totalorder 1, %s16
      %p254 = scmp.lt.s32.totalorder %s16, 5
      %p255 = pnand %p253, %p254
      %p256 = pneg %p255
      // Predicated region
      $region45: #{tpu_custom_call.1} parent=5 // pred_check
        _
      $region46: #{tpu_custom_call.1} parent=5 // pred_check_branch
        %258 = sbr.rel (%p255) target = $region48
      $region47: #{tpu_custom_call.1} parent=5 // pred_region
        %s259 = ssub.s32 %s16, 1
        %p260 = scmp.lt.s32.totalorder %s25, 1
        %s261 = scalar_select %p260, %s25, 1
        %s262 = smul.addr %s261, 32
        %s263 = smul.addr %s262, 8
        %s264 = scalar_lea.vmem %s0, %s263
        %p265 = pneg %p54
        %p266 = pneg %p51
        %p267 = pneg %p75
        %p268 = pneg %p72
        %p269 = pneg %p96
        %p270 = pneg %p93
        %p271 = pneg %p117
        %p272 = pneg %p114
        %p273 = pneg %p138
        %p274 = pneg %p135
        %p275 = pneg %p159
        %p276 = pneg %p156
        %p277 = pneg %p180
        %p278 = pneg %p177
        %p279 = pneg %p208
        %p280 = pneg %p205
        %s281 = sand.u32 %s195, 1
        %s282 = scalar_lea.sflag [#allocation5], %s281
        %s283 = sand.u32 %s195, 1
        %s284 = smul.addr %s283, 128
        %s285 = scalar_lea.vmem [#allocation4], %s284
        %p286 = scmp.lt.s32.totalorder %s25, 1
        %s287 = scalar_select %p286, %s25, 1
        %s288 = smul.addr %s287, 32
        %s289 = smul.addr %s288, 8
        %s290 = scalar_lea.vmem %s0, %s289
        %s291 = smul.u32 8, %s26
        %s293 = smul.u32 %s26, 8
        %s294 = smul.u32 %s293, 16
        %s295 = scalar_lea.vmem %s290, %s294
        %v296 = vld [vmem:[%s295] sm:$0xff]
        %v297 = vld [vmem:[%s295 + $0x8] sm:$0xff]
        %v298 = vld [vmem:[%s295 + $0x10] sm:$0xff]
        %v299 = vld [vmem:[%s295 + $0x18] sm:$0xff]
        %v300 = vld [vmem:[%s295 + $0x20] sm:$0xff]
        %v301 = vld [vmem:[%s295 + $0x28] sm:$0xff]
        %v302 = vld [vmem:[%s295 + $0x30] sm:$0xff]
        %v303 = vld [vmem:[%s295 + $0x38] sm:$0xff]
        %v304 = vld [vmem:[%s295 + $0x40] sm:$0xff]
        %v305 = vld [vmem:[%s295 + $0x48] sm:$0xff]
        %v306 = vld [vmem:[%s295 + $0x50] sm:$0xff]
        %v307 = vld [vmem:[%s295 + $0x58] sm:$0xff]
        %v308 = vld [vmem:[%s295 + $0x60] sm:$0xff]
        %v309 = vld [vmem:[%s295 + $0x68] sm:$0xff]
        %v310 = vld [vmem:[%s295 + $0x70] sm:$0xff]
        %v311 = vld [vmem:[%s295 + $0x78] sm:$0xff]
        %v312 = vpack.c.bf16 %v297, %v296
        %v313 = vpack.c.bf16 %v299, %v298
        %v314 = vpack.c.bf16 %v301, %v300
        %v315 = vpack.c.bf16 %v303, %v302
        %v316 = vpack.c.bf16 %v305, %v304
        %v317 = vpack.c.bf16 %v307, %v306
        %v318 = vpack.c.bf16 %v309, %v308
        %v319 = vpack.c.bf16 %v311, %v310
        %v320 = vld [vmem:[%s1] sm:$0xf]
        %v321 = vld [vmem:[%s1 + $0x4] sm:$0xf]
        %v322 = vld [vmem:[%s2] sm:$0x1]
        %v324 = vlaneseq
        %v325 = vshrl.u32 %v324, 7
        %v326 = vsub.s32 0, %v325
        %v327 = vrot.slane %v322, %v326
        %v331 = vunpack.c.l.b16 %v320
        %v332 = vunpack.c.l.b16 %v321
        %v333 = vpack.c.b16 %v332, %v331
        %vm335 = vcmask 130048
        %v337 = vsel %vm335, %v312, 0
        %v340 = vsel %vm335, %v313, 0
        %v343 = vsel %vm335, %v314, 0
        %v346 = vsel %vm335, %v315, 0
        %v349 = vsel %vm335, %v316, 0
        %v352 = vsel %vm335, %v317, 0
        %v355 = vsel %vm335, %v318, 0
        %v358 = vsel %vm335, %v319, 0
        %360 = vmatprep.subr.bf16.mxu0 0
        %361 = vmatpush1.bf16.msra.mxu0 0
        %362 = vmatprep.subr.bf16.mxu0 0
        %363 = vmatpush1.bf16.msra.mxu0 0
        %364 = vmatprep.subr.bf16.mxu0 0
        %365 = vmatpush1.bf16.msra.mxu0 0
        %366 = vmatprep.subr.bf16.mxu0 0
        %367 = vmatpush1.bf16.msra.mxu0 0
        %368 = vmatprep.subr.bf16.mxu0 0
        %369 = vmatpush1.bf16.msra.mxu0 0
        %370 = vmatprep.subr.bf16.mxu0 0
        %371 = vmatpush1.bf16.msra.mxu0 0
        %372 = vmatprep.subr.bf16.mxu0 0
        %373 = vmatpush1.bf16.msra.mxu0 0
        %374 = vmatprep.subr.bf16.mxu0 0
        %375 = vmatpush1.bf16.msra.mxu0 %v333
        %376 = vmatprep.subr.bf16.mxu0 0
        %377 = vmatpush2.bf16.msra.mxu0 0
        %378 = vmatprep.subr.bf16.mxu0 0
        %379 = vmatpush2.bf16.msra.mxu0 0
        %380 = vmatprep.subr.bf16.mxu0 0
        %381 = vmatpush2.bf16.msra.mxu0 0
        %382 = vmatprep.subr.bf16.mxu0 0
        %383 = vmatpush2.bf16.msra.mxu0 0
        %384 = vmatprep.subr.bf16.mxu0 0
        %385 = vmatpush2.bf16.msra.mxu0 0
        %386 = vmatprep.subr.bf16.mxu0 0
        %387 = vmatpush2.bf16.msra.mxu0 0
        %388 = vmatprep.subr.bf16.mxu0 0
        %389 = vmatpush2.bf16.msra.mxu0 0
        %390 = vmatprep.subr.bf16.mxu0 0
        %391 = vmatpush2.bf16.msra.mxu0 0
        %392 = vmatprep.mubr.bf16.mxu0 0
        %393 = vmatmul.mubr.bf16.gmra.mxu0 %v337
        %v394 = vpop.f32.mrf.mxu0
        %v395 = vadd.f32 %v327, %v394
        %v396 = vpop.f32.mrf.mxu0
        %v397 = vpop.f32.mrf.mxu0
        %v398 = vadd.f32 %v327, %v397
        %v399 = vpop.f32.mrf.mxu0
        %400 = vmatprep.mubr.bf16.mxu0 0
        %401 = vmatmul.mubr.bf16.gmra.mxu0 %v340
        %v402 = vpop.f32.mrf.mxu0
        %v403 = vadd.f32 %v327, %v402
        %v404 = vpop.f32.mrf.mxu0
        %v405 = vpop.f32.mrf.mxu0
        %v406 = vadd.f32 %v327, %v405
        %v407 = vpop.f32.mrf.mxu0
        %408 = vmatprep.mubr.bf16.mxu0 0
        %409 = vmatmul.mubr.bf16.gmra.mxu0 %v343
        %v410 = vpop.f32.mrf.mxu0
        %v411 = vadd.f32 %v327, %v410
        %v412 = vpop.f32.mrf.mxu0
        %v413 = vpop.f32.mrf.mxu0
        %v414 = vadd.f32 %v327, %v413
        %v415 = vpop.f32.mrf.mxu0
        %416 = vmatprep.mubr.bf16.mxu0 0
        %417 = vmatmul.mubr.bf16.gmra.mxu0 %v346
        %v418 = vpop.f32.mrf.mxu0
        %v419 = vadd.f32 %v327, %v418
        %v420 = vpop.f32.mrf.mxu0
        %v421 = vpop.f32.mrf.mxu0
        %v422 = vadd.f32 %v327, %v421
        %v423 = vpop.f32.mrf.mxu0
        %424 = vmatprep.mubr.bf16.mxu0 0
        %425 = vmatmul.mubr.bf16.gmra.mxu0 %v349
        %v426 = vpop.f32.mrf.mxu0
        %v427 = vadd.f32 %v327, %v426
        %v428 = vpop.f32.mrf.mxu0
        %v429 = vpop.f32.mrf.mxu0
        %v430 = vadd.f32 %v327, %v429
        %v431 = vpop.f32.mrf.mxu0
        %432 = vmatprep.mubr.bf16.mxu0 0
        %433 = vmatmul.mubr.bf16.gmra.mxu0 %v352
        %v434 = vpop.f32.mrf.mxu0
        %v435 = vadd.f32 %v327, %v434
        %v436 = vpop.f32.mrf.mxu0
        %v437 = vpop.f32.mrf.mxu0
        %v438 = vadd.f32 %v327, %v437
        %v439 = vpop.f32.mrf.mxu0
        %440 = vmatprep.mubr.bf16.mxu0 0
        %441 = vmatmul.mubr.bf16.gmra.mxu0 %v355
        %v442 = vpop.f32.mrf.mxu0
        %v443 = vadd.f32 %v327, %v442
        %v444 = vpop.f32.mrf.mxu0
        %v445 = vpop.f32.mrf.mxu0
        %v446 = vadd.f32 %v327, %v445
        %v447 = vpop.f32.mrf.mxu0
        %448 = vmatprep.mubr.bf16.mxu0 0
        %449 = vmatmul.mubr.bf16.gmra.mxu0 %v358
        %v450 = vpop.f32.mrf.mxu0
        %v451 = vadd.f32 %v327, %v450
        %v452 = vpop.f32.mrf.mxu0
        %v453 = vpop.f32.mrf.mxu0
        %v454 = vadd.f32 %v327, %v453
        %v455 = vpop.f32.mrf.mxu0
        %456 = vdwg.mxu0
        %v457 = vmax.f32 %v395, 0.0
        %v458 = vmax.f32 %v398, 0.0
        %v459 = vmax.f32 %v403, 0.0
        %v460 = vmax.f32 %v406, 0.0
        %v461 = vmax.f32 %v411, 0.0
        %v462 = vmax.f32 %v414, 0.0
        %v463 = vmax.f32 %v419, 0.0
        %v464 = vmax.f32 %v422, 0.0
        %v465 = vmax.f32 %v427, 0.0
        %v466 = vmax.f32 %v430, 0.0
        %v467 = vmax.f32 %v435, 0.0
        %v468 = vmax.f32 %v438, 0.0
        %v469 = vmax.f32 %v443, 0.0
        %v470 = vmax.f32 %v446, 0.0
        %v471 = vmax.f32 %v451, 0.0
        %v472 = vmax.f32 %v454, 0.0
        %v473 = vpack.c.bf16 %v458, %v457
        %v474 = vpack.c.bf16 %v460, %v459
        %v475 = vpack.c.bf16 %v462, %v461
        %v476 = vpack.c.bf16 %v464, %v463
        %v477 = vpack.c.bf16 %v466, %v465
        %v478 = vpack.c.bf16 %v468, %v467
        %v479 = vpack.c.bf16 %v470, %v469
        %v480 = vpack.c.bf16 %v472, %v471
        %v489 = vunpack.c.l.b16 %v473
        %v490 = vunpack.c.h.b16 %v473
        %v491 = vunpack.c.l.b16 %v474
        %v492 = vunpack.c.h.b16 %v474
        %v493 = vunpack.c.l.b16 %v475
        %v494 = vunpack.c.h.b16 %v475
        %v495 = vunpack.c.l.b16 %v476
        %v496 = vunpack.c.h.b16 %v476
        %v497 = vunpack.c.l.b16 %v477
        %v498 = vunpack.c.h.b16 %v477
        %v499 = vunpack.c.l.b16 %v478
        %v500 = vunpack.c.h.b16 %v478
        %v501 = vunpack.c.l.b16 %v479
        %v502 = vunpack.c.h.b16 %v479
        %v503 = vunpack.c.l.b16 %v480
        %v504 = vunpack.c.h.b16 %v480
        %v505 = vpack.c.b16 %v489, %v489
        %v506 = vpack.c.b16 %v490, %v490
        %v507 = vpack.c.b16 %v491, %v491
        %v508 = vpack.c.b16 %v492, %v492
        %v509 = vpack.c.b16 %v493, %v493
        %v510 = vpack.c.b16 %v494, %v494
        %v511 = vpack.c.b16 %v495, %v495
        %v512 = vpack.c.b16 %v496, %v496
        %v513 = vpack.c.b16 %v497, %v497
        %v514 = vpack.c.b16 %v498, %v498
        %v515 = vpack.c.b16 %v499, %v499
        %v516 = vpack.c.b16 %v500, %v500
        %v517 = vpack.c.b16 %v501, %v501
        %v518 = vpack.c.b16 %v502, %v502
        %v519 = vpack.c.b16 %v503, %v503
        %v520 = vpack.c.b16 %v504, %v504
        %vm521 = vsmask.f32 256
        %vm522 = vsmask.f32 4368
        %vm523 = vmor %vm521, %vm522
        %v525 = vshrl.u32 %v505, 16
        %v527 = vrot.slane %v525, 7
        %v528 = vshll.u32 %v505, 16
        %v530 = vor.u32 %v527, %v528
        %v531 = vrot.slane %v527, 4
        %v533 = vshrl.u32 %v506, 16
        %v535 = vrot.slane %v533, 7
        %v536 = vshll.u32 %v506, 16
        %v538 = vor.u32 %v535, %v536
        %v539 = vsel %vm523, %v531, %v538
        %v540 = vrot.slane %v535, 4
        %v542 = vshrl.u32 %v507, 16
        %v544 = vrot.slane %v542, 7
        %v545 = vshll.u32 %v507, 16
        %v547 = vor.u32 %v544, %v545
        %v548 = vrot.slane %v544, 4
        %v550 = vshrl.u32 %v508, 16
        %v552 = vrot.slane %v550, 7
        %v553 = vshll.u32 %v508, 16
        %v555 = vor.u32 %v552, %v553
        %v556 = vsel %vm523, %v548, %v555
        %v557 = vrot.slane %v552, 4
        %v559 = vshrl.u32 %v509, 16
        %v561 = vrot.slane %v559, 7
        %v562 = vshll.u32 %v509, 16
        %v564 = vor.u32 %v561, %v562
        %v565 = vrot.slane %v561, 4
        %v567 = vshrl.u32 %v510, 16
        %v569 = vrot.slane %v567, 7
        %v570 = vshll.u32 %v510, 16
        %v572 = vor.u32 %v569, %v570
        %v573 = vsel %vm523, %v565, %v572
        %v574 = vrot.slane %v569, 4
        %v576 = vshrl.u32 %v511, 16
        %v578 = vrot.slane %v576, 7
        %v579 = vshll.u32 %v511, 16
        %v581 = vor.u32 %v578, %v579
        %v582 = vrot.slane %v578, 4
        %v584 = vshrl.u32 %v512, 16
        %v586 = vrot.slane %v584, 7
        %v587 = vshll.u32 %v512, 16
        %v589 = vor.u32 %v586, %v587
        %v590 = vsel %vm523, %v582, %v589
        %v591 = vrot.slane %v586, 4
        %v593 = vshrl.u32 %v513, 16
        %v595 = vrot.slane %v593, 7
        %v596 = vshll.u32 %v513, 16
        %v598 = vor.u32 %v595, %v596
        %v599 = vrot.slane %v595, 4
        %v601 = vshrl.u32 %v514, 16
        %v603 = vrot.slane %v601, 7
        %v604 = vshll.u32 %v514, 16
        %v606 = vor.u32 %v603, %v604
        %v607 = vsel %vm523, %v599, %v606
        %v608 = vrot.slane %v603, 4
        %v610 = vshrl.u32 %v515, 16
        %v612 = vrot.slane %v610, 7
        %v613 = vshll.u32 %v515, 16
        %v615 = vor.u32 %v612, %v613
        %v616 = vrot.slane %v612, 4
        %v618 = vshrl.u32 %v516, 16
        %v620 = vrot.slane %v618, 7
        %v621 = vshll.u32 %v516, 16
        %v623 = vor.u32 %v620, %v621
        %v624 = vsel %vm523, %v616, %v623
        %v625 = vrot.slane %v620, 4
        %v627 = vshrl.u32 %v517, 16
        %v629 = vrot.slane %v627, 7
        %v630 = vshll.u32 %v517, 16
        %v632 = vor.u32 %v629, %v630
        %v633 = vrot.slane %v629, 4
        %v635 = vshrl.u32 %v518, 16
        %v637 = vrot.slane %v635, 7
        %v638 = vshll.u32 %v518, 16
        %v640 = vor.u32 %v637, %v638
        %v641 = vsel %vm523, %v633, %v640
        %v642 = vrot.slane %v637, 4
        %v644 = vshrl.u32 %v519, 16
        %v646 = vrot.slane %v644, 7
        %v647 = vshll.u32 %v519, 16
        %v649 = vor.u32 %v646, %v647
        %v650 = vrot.slane %v646, 4
        %v652 = vshrl.u32 %v520, 16
        %v654 = vrot.slane %v652, 7
        %v655 = vshll.u32 %v520, 16
        %v657 = vor.u32 %v654, %v655
        %v658 = vsel %vm523, %v650, %v657
        %v659 = vrot.slane %v654, 4
        %s684 = scalar_lea.vmem [#allocation2], 12
        %vm685 = vcmask 27648
        %vm686 = vsmask.f32 7938
        %vm687 = vmand %vm685, %vm686
        %v688 = vld [vmem:[%s684] sm:$0xf]
        %v689 = vsel %vm687, %v530, %v688
        %690 = vst [vmem:[%s684] sm:$0xf] %v689
        %vm691 = vcmask 27648
        %692 = vst.msk [vmem:[%s684 + $0x4] sm:$0xf] %vm691, %v539
        %vm693 = vcmask 24576
        %vm694 = vmand %vm693, %vm521
        %v695 = vld [vmem:[%s684 + $0x8] sm:$0x1]
        %v696 = vsel %vm694, %v540, %v695
        %697 = vst [vmem:[%s684 + $0x8] sm:$0x1] %v696
        %v698 = vld [vmem:[%s684 + $0xc] sm:$0xf]
        %v699 = vsel %vm687, %v547, %v698
        %700 = vst [vmem:[%s684 + $0xc] sm:$0xf] %v699
        %701 = vst.msk [vmem:[%s684 + $0x10] sm:$0xf] %vm691, %v556
        %v702 = vld [vmem:[%s684 + $0x14] sm:$0x1]
        %v703 = vsel %vm694, %v557, %v702
        %704 = vst [vmem:[%s684 + $0x14] sm:$0x1] %v703
        %v705 = vld [vmem:[%s684 + $0x18] sm:$0xf]
        %v706 = vsel %vm687, %v564, %v705
        %707 = vst [vmem:[%s684 + $0x18] sm:$0xf] %v706
        %708 = vst.msk [vmem:[%s684 + $0x1c] sm:$0xf] %vm691, %v573
        %v709 = vld [vmem:[%s684 + $0x20] sm:$0x1]
        %v710 = vsel %vm694, %v574, %v709
        %711 = vst [vmem:[%s684 + $0x20] sm:$0x1] %v710
        %v712 = vld [vmem:[%s684 + $0x24] sm:$0xf]
        %v713 = vsel %vm687, %v581, %v712
        %714 = vst [vmem:[%s684 + $0x24] sm:$0xf] %v713
        %715 = vst.msk [vmem:[%s684 + $0x28] sm:$0xf] %vm691, %v590
        %v716 = vld [vmem:[%s684 + $0x2c] sm:$0x1]
        %v717 = vsel %vm694, %v591, %v716
        %718 = vst [vmem:[%s684 + $0x2c] sm:$0x1] %v717
        %v719 = vld [vmem:[%s684 + $0x30] sm:$0xf]
        %v720 = vsel %vm687, %v598, %v719
        %721 = vst [vmem:[%s684 + $0x30] sm:$0xf] %v720
        %722 = vst.msk [vmem:[%s684 + $0x34] sm:$0xf] %vm691, %v607
        %v723 = vld [vmem:[%s684 + $0x38] sm:$0x1]
        %v724 = vsel %vm694, %v608, %v723
        %725 = vst [vmem:[%s684 + $0x38] sm:$0x1] %v724
        %v726 = vld [vmem:[%s684 + $0x3c] sm:$0xf]
        %v727 = vsel %vm687, %v615, %v726
        %728 = vst [vmem:[%s684 + $0x3c] sm:$0xf] %v727
        %729 = vst.msk [vmem:[%s684 + $0x40] sm:$0xf] %vm691, %v624
        %v730 = vld [vmem:[%s684 + $0x44] sm:$0x1]
        %v731 = vsel %vm694, %v625, %v730
        %732 = vst [vmem:[%s684 + $0x44] sm:$0x1] %v731
        %v733 = vld [vmem:[%s684 + $0x48] sm:$0xf]
        %v734 = vsel %vm687, %v632, %v733
        %735 = vst [vmem:[%s684 + $0x48] sm:$0xf] %v734
        %736 = vst.msk [vmem:[%s684 + $0x4c] sm:$0xf] %vm691, %v641
        %v737 = vld [vmem:[%s684 + $0x50] sm:$0x1]
        %v738 = vsel %vm694, %v642, %v737
        %739 = vst [vmem:[%s684 + $0x50] sm:$0x1] %v738
        %v740 = vld [vmem:[%s684 + $0x54] sm:$0xf]
        %v741 = vsel %vm687, %v649, %v740
        %742 = vst [vmem:[%s684 + $0x54] sm:$0xf] %v741
        %743 = vst.msk [vmem:[%s684 + $0x58] sm:$0xf] %vm691, %v658
        %v744 = vld [vmem:[%s684 + $0x5c] sm:$0x1]
        %v745 = vsel %vm694, %v659, %v744
        %746 = vst [vmem:[%s684 + $0x5c] sm:$0x1] %v745
        %v747 = vld [vmem:[%s684] sm:$0x1]
        %v748 = vsel %vm694, 0, %v747
        %749 = vst [vmem:[%s684] sm:$0x1] %v748
        %v750 = vld [vmem:[%s684 + $0xc] sm:$0x1]
        %v751 = vsel %vm694, 0, %v750
        %752 = vst [vmem:[%s684 + $0xc] sm:$0x1] %v751
        %v753 = vld [vmem:[%s684 + $0x18] sm:$0x1]
        %v754 = vsel %vm694, 0, %v753
        %755 = vst [vmem:[%s684 + $0x18] sm:$0x1] %v754
        %v756 = vld [vmem:[%s684 + $0x24] sm:$0x1]
        %v757 = vsel %vm694, 0, %v756
        %758 = vst [vmem:[%s684 + $0x24] sm:$0x1] %v757
        %v759 = vld [vmem:[%s684 + $0x30] sm:$0x1]
        %v760 = vsel %vm694, 0, %v759
        %761 = vst [vmem:[%s684 + $0x30] sm:$0x1] %v760
        %v762 = vld [vmem:[%s684 + $0x3c] sm:$0x1]
        %v763 = vsel %vm694, 0, %v762
        %764 = vst [vmem:[%s684 + $0x3c] sm:$0x1] %v763
        %v765 = vld [vmem:[%s684 + $0x48] sm:$0x1]
        %v766 = vsel %vm694, 0, %v765
        %767 = vst [vmem:[%s684 + $0x48] sm:$0x1] %v766
        %v768 = vld [vmem:[%s684 + $0x54] sm:$0x1]
        %v769 = vsel %vm694, 0, %v768
        %770 = vst [vmem:[%s684 + $0x54] sm:$0x1] %v769
        %vm771 = vmand %vm693, %vm686
        %v772 = vld [vmem:[%s684 + $0x8] sm:$0x1]
        %v773 = vsel %vm771, 0, %v772
        %774 = vst [vmem:[%s684 + $0x8] sm:$0x1] %v773
        %v775 = vld [vmem:[%s684 + $0x14] sm:$0x1]
        %v776 = vsel %vm771, 0, %v775
        %777 = vst [vmem:[%s684 + $0x14] sm:$0x1] %v776
        %v778 = vld [vmem:[%s684 + $0x20] sm:$0x1]
        %v779 = vsel %vm771, 0, %v778
        %780 = vst [vmem:[%s684 + $0x20] sm:$0x1] %v779
        %v781 = vld [vmem:[%s684 + $0x2c] sm:$0x1]
        %v782 = vsel %vm771, 0, %v781
        %783 = vst [vmem:[%s684 + $0x2c] sm:$0x1] %v782
        %v784 = vld [vmem:[%s684 + $0x38] sm:$0x1]
        %v785 = vsel %vm771, 0, %v784
        %786 = vst [vmem:[%s684 + $0x38] sm:$0x1] %v785
        %v787 = vld [vmem:[%s684 + $0x44] sm:$0x1]
        %v788 = vsel %vm771, 0, %v787
        %789 = vst [vmem:[%s684 + $0x44] sm:$0x1] %v788
        %v790 = vld [vmem:[%s684 + $0x50] sm:$0x1]
        %v791 = vsel %vm771, 0, %v790
        %792 = vst [vmem:[%s684 + $0x50] sm:$0x1] %v791
        %v793 = vld [vmem:[%s684 + $0x5c] sm:$0x1]
        %v794 = vsel %vm771, 0, %v793
        %795 = vst [vmem:[%s684 + $0x5c] sm:$0x1] %v794
        %796 = vst.msk [vmem:[#allocation2] sm:$0xf] %vm691, 0
        %797 = vst.msk [vmem:[#allocation2 + $0x4] sm:$0xf] %vm691, 0
        %vm798 = vcmask 24576
        %799 = vst.msk [vmem:[#allocation2 + $0x8] sm:$0x1] %vm798, 0
        %s800 = scalar_lea.vmem [#allocation2], 108
        %801 = vst.msk [vmem:[%s800] sm:$0xf] %vm691, 0
        %802 = vst.msk [vmem:[%s800 + $0x4] sm:$0xf] %vm691, 0
        %803 = vst.msk [vmem:[%s800 + $0x8] sm:$0x1] %vm798, 0
        %p804 = scmp.gt.s32.totalorder %s26, 0
        // Predicated region
        $region49: #{tpu_custom_call.1} parent=47 // pred_check
          %p805 = pneg %p804
        $region50: #{tpu_custom_call.1} parent=47 // pred_check_branch
          %807 = sbr.rel (%p805) target = $region52
        $region51: #{tpu_custom_call.1} parent=47 // pred_region
          %s808 = ssub.s32 %s293, 1
          %s809 = smul.u32 %s808, 16
          %s810 = scalar_lea.vmem %s290, %s809
          %v811 = vld [vmem:[%s810] sm:$0xff]
          %v812 = vld [vmem:[%s810 + $0x8] sm:$0xff]
          %v813 = vpack.c.bf16 %v812, %v811
          %v814 = vld [vmem:[%s1] sm:$0xf]
          %v815 = vld [vmem:[%s1 + $0x4] sm:$0xf]
          %v816 = vld [vmem:[%s2] sm:$0x1]
          %v818 = vlaneseq
          %v819 = vshrl.u32 %v818, 7
          %v820 = vsub.s32 0, %v819
          %v821 = vrot.slane %v816, %v820
          %v825 = vunpack.c.l.b16 %v814
          %v826 = vunpack.c.l.b16 %v815
          %v827 = vpack.c.b16 %v826, %v825
          %v830 = vsel %vm335, %v813, 0
          %832 = vmatprep.subr.bf16.mxu0 0
          %833 = vmatpush1.bf16.msra.mxu0 0
          %834 = vmatprep.subr.bf16.mxu0 0
          %835 = vmatpush1.bf16.msra.mxu0 0
          %836 = vmatprep.subr.bf16.mxu0 0
          %837 = vmatpush1.bf16.msra.mxu0 0
          %838 = vmatprep.subr.bf16.mxu0 0
          %839 = vmatpush1.bf16.msra.mxu0 0
          %840 = vmatprep.subr.bf16.mxu0 0
          %841 = vmatpush1.bf16.msra.mxu0 0
          %842 = vmatprep.subr.bf16.mxu0 0
          %843 = vmatpush1.bf16.msra.mxu0 0
          %844 = vmatprep.subr.bf16.mxu0 0
          %845 = vmatpush1.bf16.msra.mxu0 0
          %846 = vmatprep.subr.bf16.mxu0 0
          %847 = vmatpush1.bf16.msra.mxu0 %v827
          %848 = vmatprep.subr.bf16.mxu0 0
          %849 = vmatpush2.bf16.msra.mxu0 0
          %850 = vmatprep.subr.bf16.mxu0 0
          %851 = vmatpush2.bf16.msra.mxu0 0
          %852 = vmatprep.subr.bf16.mxu0 0
          %853 = vmatpush2.bf16.msra.mxu0 0
          %854 = vmatprep.subr.bf16.mxu0 0
          %855 = vmatpush2.bf16.msra.mxu0 0
          %856 = vmatprep.subr.bf16.mxu0 0
          %857 = vmatpush2.bf16.msra.mxu0 0
          %858 = vmatprep.subr.bf16.mxu0 0
          %859 = vmatpush2.bf16.msra.mxu0 0
          %860 = vmatprep.subr.bf16.mxu0 0
          %861 = vmatpush2.bf16.msra.mxu0 0
          %862 = vmatprep.subr.bf16.mxu0 0
          %863 = vmatpush2.bf16.msra.mxu0 0
          %864 = vmatprep.mubr.bf16.mxu0 0
          %865 = vmatmul.mubr.bf16.gmra.mxu0 %v830
          %v866 = vpop.f32.mrf.mxu0
          %v867 = vadd.f32 %v821, %v866
          %v868 = vpop.f32.mrf.mxu0
          %v869 = vpop.f32.mrf.mxu0
          %v870 = vadd.f32 %v821, %v869
          %v871 = vpop.f32.mrf.mxu0
          %872 = vdwg.mxu0
          %v873 = vmax.f32 %v867, 0.0
          %v874 = vmax.f32 %v870, 0.0
          %v875 = vpack.c.bf16 %v874, %v873
          %v877 = vunpack.c.l.b16 %v875
          %v878 = vunpack.c.h.b16 %v875
          %v879 = vpack.c.b16 %v877, %v877
          %v880 = vpack.c.b16 %v878, %v878
          %v882 = vshrl.u32 %v879, 16
          %v884 = vrot.slane %v882, 7
          %v885 = vshll.u32 %v879, 16
          %v887 = vor.u32 %v884, %v885
          %v888 = vrot.slane %v884, 4
          %v890 = vshrl.u32 %v880, 16
          %v892 = vrot.slane %v890, 7
          %v893 = vshll.u32 %v880, 16
          %v895 = vor.u32 %v892, %v893
          %v896 = vsel %vm523, %v888, %v895
          %v897 = vrot.slane %v892, 4
          %v901 = vld [vmem:[#allocation2] sm:$0xf]
          %v902 = vsel %vm687, %v887, %v901
          %903 = vst [vmem:[#allocation2] sm:$0xf] %v902
          %904 = vst.msk [vmem:[#allocation2 + $0x4] sm:$0xf] %vm691, %v896
          %v905 = vld [vmem:[#allocation2 + $0x8] sm:$0x1]
          %v906 = vsel %vm694, %v897, %v905
          %907 = vst [vmem:[#allocation2 + $0x8] sm:$0x1] %v906
        $region52: #{tpu_custom_call.1} parent=47 // pred_fallthru
          _
        %p908 = scmp.lt.s32.totalorder %s26, 1
        // Predicated region
        $region53: #{tpu_custom_call.1} parent=47 // pred_check
          %p909 = pneg %p908
        $region54: #{tpu_custom_call.1} parent=47 // pred_check_branch
          %911 = sbr.rel (%p909) target = $region56
        $region55: #{tpu_custom_call.1} parent=47 // pred_region
          %s912 = sadd.s32 %s293, 8
          %s913 = smul.u32 %s912, 16
          %s914 = scalar_lea.vmem %s290, %s913
          %v915 = vld [vmem:[%s914] sm:$0xff]
          %v916 = vld [vmem:[%s914 + $0x8] sm:$0xff]
          %v917 = vpack.c.bf16 %v916, %v915
          %v918 = vld [vmem:[%s1] sm:$0xf]
          %v919 = vld [vmem:[%s1 + $0x4] sm:$0xf]
          %v920 = vld [vmem:[%s2] sm:$0x1]
          %v922 = vlaneseq
          %v923 = vshrl.u32 %v922, 7
          %v924 = vsub.s32 0, %v923
          %v925 = vrot.slane %v920, %v924
          %v929 = vunpack.c.l.b16 %v918
          %v930 = vunpack.c.l.b16 %v919
          %v931 = vpack.c.b16 %v930, %v929
          %v934 = vsel %vm335, %v917, 0
          %936 = vmatprep.subr.bf16.mxu0 0
          %937 = vmatpush1.bf16.msra.mxu0 0
          %938 = vmatprep.subr.bf16.mxu0 0
          %939 = vmatpush1.bf16.msra.mxu0 0
          %940 = vmatprep.subr.bf16.mxu0 0
          %941 = vmatpush1.bf16.msra.mxu0 0
          %942 = vmatprep.subr.bf16.mxu0 0
          %943 = vmatpush1.bf16.msra.mxu0 0
          %944 = vmatprep.subr.bf16.mxu0 0
          %945 = vmatpush1.bf16.msra.mxu0 0
          %946 = vmatprep.subr.bf16.mxu0 0
          %947 = vmatpush1.bf16.msra.mxu0 0
          %948 = vmatprep.subr.bf16.mxu0 0
          %949 = vmatpush1.bf16.msra.mxu0 0
          %950 = vmatprep.subr.bf16.mxu0 0
          %951 = vmatpush1.bf16.msra.mxu0 %v931
          %952 = vmatprep.subr.bf16.mxu0 0
          %953 = vmatpush2.bf16.msra.mxu0 0
          %954 = vmatprep.subr.bf16.mxu0 0
          %955 = vmatpush2.bf16.msra.mxu0 0
          %956 = vmatprep.subr.bf16.mxu0 0
          %957 = vmatpush2.bf16.msra.mxu0 0
          %958 = vmatprep.subr.bf16.mxu0 0
          %959 = vmatpush2.bf16.msra.mxu0 0
          %960 = vmatprep.subr.bf16.mxu0 0
          %961 = vmatpush2.bf16.msra.mxu0 0
          %962 = vmatprep.subr.bf16.mxu0 0
          %963 = vmatpush2.bf16.msra.mxu0 0
          %964 = vmatprep.subr.bf16.mxu0 0
          %965 = vmatpush2.bf16.msra.mxu0 0
          %966 = vmatprep.subr.bf16.mxu0 0
          %967 = vmatpush2.bf16.msra.mxu0 0
          %968 = vmatprep.mubr.bf16.mxu0 0
          %969 = vmatmul.mubr.bf16.gmra.mxu0 %v934
          %v970 = vpop.f32.mrf.mxu0
          %v971 = vadd.f32 %v925, %v970
          %v972 = vpop.f32.mrf.mxu0
          %v973 = vpop.f32.mrf.mxu0
          %v974 = vadd.f32 %v925, %v973
          %v975 = vpop.f32.mrf.mxu0
          %976 = vdwg.mxu0
          %v977 = vmax.f32 %v971, 0.0
          %v978 = vmax.f32 %v974, 0.0
          %v979 = vpack.c.bf16 %v978, %v977
          %v981 = vunpack.c.l.b16 %v979
          %v982 = vunpack.c.h.b16 %v979
          %v983 = vpack.c.b16 %v981, %v981
          %v984 = vpack.c.b16 %v982, %v982
          %v986 = vshrl.u32 %v983, 16
          %v988 = vrot.slane %v986, 7
          %v989 = vshll.u32 %v983, 16
          %v991 = vor.u32 %v988, %v989
          %v992 = vrot.slane %v988, 4
          %v994 = vshrl.u32 %v984, 16
          %v996 = vrot.slane %v994, 7
          %v997 = vshll.u32 %v984, 16
          %v999 = vor.u32 %v996, %v997
          %v1000 = vsel %vm523, %v992, %v999
          %v1001 = vrot.slane %v996, 4
          %v1005 = vld [vmem:[%s800] sm:$0xf]
          %v1006 = vsel %vm687, %v991, %v1005
          %1007 = vst [vmem:[%s800] sm:$0xf] %v1006
          %1008 = vst.msk [vmem:[%s800 + $0x4] sm:$0xf] %vm691, %v1000
          %v1009 = vld [vmem:[%s800 + $0x8] sm:$0x1]
          %v1010 = vsel %vm694, %v1001, %v1009
          %1011 = vst [vmem:[%s800 + $0x8] sm:$0x1] %v1010
        $region56: #{tpu_custom_call.1} parent=47 // pred_fallthru
          _
        %v1012 = vld [vmem:[#allocation2] sm:$0xf]
        %v1013 = vld [vmem:[#allocation2 + $0x4] sm:$0xf]
        %v1014 = vld [vmem:[#allocation2 + $0xc] sm:$0xf]
        %v1015 = vld [vmem:[#allocation2 + $0x10] sm:$0xf]
        %v1016 = vld [vmem:[#allocation2 + $0x18] sm:$0xf]
        %v1017 = vld [vmem:[#allocation2 + $0x1c] sm:$0xf]
        %v1018 = vld [vmem:[#allocation2 + $0x24] sm:$0xf]
        %v1019 = vld [vmem:[#allocation2 + $0x28] sm:$0xf]
        %v1020 = vld [vmem:[#allocation2 + $0x30] sm:$0xf]
        %v1021 = vld [vmem:[#allocation2 + $0x34] sm:$0xf]
        %v1022 = vld [vmem:[#allocation2 + $0x3c] sm:$0xf]
        %v1023 = vld [vmem:[#allocation2 + $0x40] sm:$0xf]
        %v1024 = vld [vmem:[#allocation2 + $0x48] sm:$0xf]
        %v1025 = vld [vmem:[#allocation2 + $0x4c] sm:$0xf]
        %v1026 = vld [vmem:[#allocation2 + $0x54] sm:$0xf]
        %v1027 = vld [vmem:[#allocation2 + $0x58] sm:$0xf]
        %1028 = vst.msk [vmem:[#allocation3] sm:$0xf] %vm691, %v1012
        %1029 = vst.msk [vmem:[#allocation3 + $0x24] sm:$0xf] %vm691, %v1013
        %1030 = vst.msk [vmem:[#allocation3 + $0x48] sm:$0xf] %vm691, %v1014
        %1031 = vst.msk [vmem:[#allocation3 + $0x6c] sm:$0xf] %vm691, %v1015
        %1032 = vst.msk [vmem:[#allocation3 + $0x90] sm:$0xf] %vm691, %v1016
        %1033 = vst.msk [vmem:[#allocation3 + $0xb4] sm:$0xf] %vm691, %v1017
        %1034 = vst.msk [vmem:[#allocation3 + $0xd8] sm:$0xf] %vm691, %v1018
        %1035 = vst.msk [vmem:[#allocation3 + $0xfc] sm:$0xf] %vm691, %v1019
        %1036 = vst.msk [vmem:[#allocation3 + $0x120] sm:$0xf] %vm691, %v1020
        %1037 = vst.msk [vmem:[#allocation3 + $0x144] sm:$0xf] %vm691, %v1021
        %1038 = vst.msk [vmem:[#allocation3 + $0x168] sm:$0xf] %vm691, %v1022
        %1039 = vst.msk [vmem:[#allocation3 + $0x18c] sm:$0xf] %vm691, %v1023
        %1040 = vst.msk [vmem:[#allocation3 + $0x1b0] sm:$0xf] %vm691, %v1024
        %1041 = vst.msk [vmem:[#allocation3 + $0x1d4] sm:$0xf] %vm691, %v1025
        %1042 = vst.msk [vmem:[#allocation3 + $0x1f8] sm:$0xf] %vm691, %v1026
        %1043 = vst.msk [vmem:[#allocation3 + $0x21c] sm:$0xf] %vm691, %v1027
        %vm1044 = vcmask 1043488
        %1045 = vst.msk [vmem:[#allocation3] sm:$0xf] %vm1044, 0
        %1046 = vst.msk [vmem:[#allocation3 + $0x24] sm:$0xf] %vm1044, 0
        %1047 = vst.msk [vmem:[#allocation3 + $0x48] sm:$0xf] %vm1044, 0
        %1048 = vst.msk [vmem:[#allocation3 + $0x6c] sm:$0xf] %vm1044, 0
        %1049 = vst.msk [vmem:[#allocation3 + $0x90] sm:$0xf] %vm1044, 0
        %1050 = vst.msk [vmem:[#allocation3 + $0xb4] sm:$0xf] %vm1044, 0
        %1051 = vst.msk [vmem:[#allocation3 + $0xd8] sm:$0xf] %vm1044, 0
        %1052 = vst.msk [vmem:[#allocation3 + $0xfc] sm:$0xf] %vm1044, 0
        %1053 = vst.msk [vmem:[#allocation3 + $0x120] sm:$0xf] %vm1044, 0
        %1054 = vst.msk [vmem:[#allocation3 + $0x144] sm:$0xf] %vm1044, 0
        %1055 = vst.msk [vmem:[#allocation3 + $0x168] sm:$0xf] %vm1044, 0
        %1056 = vst.msk [vmem:[#allocation3 + $0x18c] sm:$0xf] %vm1044, 0
        %1057 = vst.msk [vmem:[#allocation3 + $0x1b0] sm:$0xf] %vm1044, 0
        %1058 = vst.msk [vmem:[#allocation3 + $0x1d4] sm:$0xf] %vm1044, 0
        %1059 = vst.msk [vmem:[#allocation3 + $0x1f8] sm:$0xf] %vm1044, 0
        %1060 = vst.msk [vmem:[#allocation3 + $0x21c] sm:$0xf] %vm1044, 0
        %v1061 = vld [vmem:[#allocation2] sm:$0xf]
        %v1062 = vld [vmem:[#allocation2 + $0x4] sm:$0xf]
        %v1063 = vld [vmem:[#allocation2 + $0x8] sm:$0x1]
        %v1064 = vld [vmem:[#allocation2 + $0xc] sm:$0xf]
        %v1065 = vld [vmem:[#allocation2 + $0x10] sm:$0xf]
        %v1066 = vld [vmem:[#allocation2 + $0x14] sm:$0x1]
        %v1067 = vld [vmem:[#allocation2 + $0x18] sm:$0xf]
        %v1068 = vld [vmem:[#allocation2 + $0x1c] sm:$0xf]
        %v1069 = vld [vmem:[#allocation2 + $0x20] sm:$0x1]
        %v1070 = vld [vmem:[#allocation2 + $0x24] sm:$0xf]
        %v1071 = vld [vmem:[#allocation2 + $0x28] sm:$0xf]
        %v1072 = vld [vmem:[#allocation2 + $0x2c] sm:$0x1]
        %v1073 = vld [vmem:[#allocation2 + $0x30] sm:$0xf]
        %v1074 = vld [vmem:[#allocation2 + $0x34] sm:$0xf]
        %v1075 = vld [vmem:[#allocation2 + $0x38] sm:$0x1]
        %v1076 = vld [vmem:[#allocation2 + $0x3c] sm:$0xf]
        %v1077 = vld [vmem:[#allocation2 + $0x40] sm:$0xf]
        %v1078 = vld [vmem:[#allocation2 + $0x44] sm:$0x1]
        %v1079 = vld [vmem:[#allocation2 + $0x48] sm:$0xf]
        %v1080 = vld [vmem:[#allocation2 + $0x4c] sm:$0xf]
        %v1081 = vld [vmem:[#allocation2 + $0x50] sm:$0x1]
        %v1082 = vld [vmem:[#allocation2 + $0x54] sm:$0xf]
        %v1083 = vld [vmem:[#allocation2 + $0x58] sm:$0xf]
        %v1084 = vld [vmem:[#allocation2 + $0x5c] sm:$0x1]
        %vm1085 = vsmask.f32 3328
        %vm1086 = vsmask.f32 7440
        %vm1087 = vmor %vm1085, %vm1086
        %v1089 = vshrl.u32 %v1061, 16
        %v1091 = vrot.slane %v1089, 4
        %v1092 = vshll.u32 %v1061, 16
        %v1094 = vrot.slane %v1092, 5
        %v1095 = vor.u32 %v1091, %v1094
        %v1096 = vrot.slane %v1095, 4
        %v1098 = vshll.u32 %v1062, 16
        %v1100 = vrot.slane %v1098, 5
        %v1101 = vsel %vm1087, %v1096, %v1100
        %v1102 = vshrl.u32 %v1062, 16
        %v1104 = vrot.slane %v1102, 4
        %v1105 = vor.u32 %v1104, %v1100
        %v1106 = vrot.slane %v1105, 4
        %v1108 = vshll.u32 %v1063, 16
        %v1110 = vrot.slane %v1108, 5
        %v1111 = vsel %vm1087, %v1106, %v1110
        %v1113 = vshrl.u32 %v1064, 16
        %v1115 = vrot.slane %v1113, 4
        %v1116 = vshll.u32 %v1064, 16
        %v1118 = vrot.slane %v1116, 5
        %v1119 = vor.u32 %v1115, %v1118
        %v1120 = vrot.slane %v1119, 4
        %v1122 = vshll.u32 %v1065, 16
        %v1124 = vrot.slane %v1122, 5
        %v1125 = vsel %vm1087, %v1120, %v1124
        %v1126 = vshrl.u32 %v1065, 16
        %v1128 = vrot.slane %v1126, 4
        %v1129 = vor.u32 %v1128, %v1124
        %v1130 = vrot.slane %v1129, 4
        %v1132 = vshll.u32 %v1066, 16
        %v1134 = vrot.slane %v1132, 5
        %v1135 = vsel %vm1087, %v1130, %v1134
        %v1137 = vshrl.u32 %v1067, 16
        %v1139 = vrot.slane %v1137, 4
        %v1140 = vshll.u32 %v1067, 16
        %v1142 = vrot.slane %v1140, 5
        %v1143 = vor.u32 %v1139, %v1142
        %v1144 = vrot.slane %v1143, 4
        %v1146 = vshll.u32 %v1068, 16
        %v1148 = vrot.slane %v1146, 5
        %v1149 = vsel %vm1087, %v1144, %v1148
        %v1150 = vshrl.u32 %v1068, 16
        %v1152 = vrot.slane %v1150, 4
        %v1153 = vor.u32 %v1152, %v1148
        %v1154 = vrot.slane %v1153, 4
        %v1156 = vshll.u32 %v1069, 16
        %v1158 = vrot.slane %v1156, 5
        %v1159 = vsel %vm1087, %v1154, %v1158
        %v1161 = vshrl.u32 %v1070, 16
        %v1163 = vrot.slane %v1161, 4
        %v1164 = vshll.u32 %v1070, 16
        %v1166 = vrot.slane %v1164, 5
        %v1167 = vor.u32 %v1163, %v1166
        %v1168 = vrot.slane %v1167, 4
        %v1170 = vshll.u32 %v1071, 16
        %v1172 = vrot.slane %v1170, 5
        %v1173 = vsel %vm1087, %v1168, %v1172
        %v1174 = vshrl.u32 %v1071, 16
        %v1176 = vrot.slane %v1174, 4
        %v1177 = vor.u32 %v1176, %v1172
        %v1178 = vrot.slane %v1177, 4
        %v1180 = vshll.u32 %v1072, 16
        %v1182 = vrot.slane %v1180, 5
        %v1183 = vsel %vm1087, %v1178, %v1182
        %v1185 = vshrl.u32 %v1073, 16
        %v1187 = vrot.slane %v1185, 4
        %v1188 = vshll.u32 %v1073, 16
        %v1190 = vrot.slane %v1188, 5
        %v1191 = vor.u32 %v1187, %v1190
        %v1192 = vrot.slane %v1191, 4
        %v1194 = vshll.u32 %v1074, 16
        %v1196 = vrot.slane %v1194, 5
        %v1197 = vsel %vm1087, %v1192, %v1196
        %v1198 = vshrl.u32 %v1074, 16
        %v1200 = vrot.slane %v1198, 4
        %v1201 = vor.u32 %v1200, %v1196
        %v1202 = vrot.slane %v1201, 4
        %v1204 = vshll.u32 %v1075, 16
        %v1206 = vrot.slane %v1204, 5
        %v1207 = vsel %vm1087, %v1202, %v1206
        %v1209 = vshrl.u32 %v1076, 16
        %v1211 = vrot.slane %v1209, 4
        %v1212 = vshll.u32 %v1076, 16
        %v1214 = vrot.slane %v1212, 5
        %v1215 = vor.u32 %v1211, %v1214
        %v1216 = vrot.slane %v1215, 4
        %v1218 = vshll.u32 %v1077, 16
        %v1220 = vrot.slane %v1218, 5
        %v1221 = vsel %vm1087, %v1216, %v1220
        %v1222 = vshrl.u32 %v1077, 16
        %v1224 = vrot.slane %v1222, 4
        %v1225 = vor.u32 %v1224, %v1220
        %v1226 = vrot.slane %v1225, 4
        %v1228 = vshll.u32 %v1078, 16
        %v1230 = vrot.slane %v1228, 5
        %v1231 = vsel %vm1087, %v1226, %v1230
        %v1233 = vshrl.u32 %v1079, 16
        %v1235 = vrot.slane %v1233, 4
        %v1236 = vshll.u32 %v1079, 16
        %v1238 = vrot.slane %v1236, 5
        %v1239 = vor.u32 %v1235, %v1238
        %v1240 = vrot.slane %v1239, 4
        %v1242 = vshll.u32 %v1080, 16
        %v1244 = vrot.slane %v1242, 5
        %v1245 = vsel %vm1087, %v1240, %v1244
        %v1246 = vshrl.u32 %v1080, 16
        %v1248 = vrot.slane %v1246, 4
        %v1249 = vor.u32 %v1248, %v1244
        %v1250 = vrot.slane %v1249, 4
        %v1252 = vshll.u32 %v1081, 16
        %v1254 = vrot.slane %v1252, 5
        %v1255 = vsel %vm1087, %v1250, %v1254
        %v1257 = vshrl.u32 %v1082, 16
        %v1259 = vrot.slane %v1257, 4
        %v1260 = vshll.u32 %v1082, 16
        %v1262 = vrot.slane %v1260, 5
        %v1263 = vor.u32 %v1259, %v1262
        %v1264 = vrot.slane %v1263, 4
        %v1266 = vshll.u32 %v1083, 16
        %v1268 = vrot.slane %v1266, 5
        %v1269 = vsel %vm1087, %v1264, %v1268
        %v1270 = vshrl.u32 %v1083, 16
        %v1272 = vrot.slane %v1270, 4
        %v1273 = vor.u32 %v1272, %v1268
        %v1274 = vrot.slane %v1273, 4
        %v1276 = vshll.u32 %v1084, 16
        %v1278 = vrot.slane %v1276, 5
        %v1279 = vsel %vm1087, %v1274, %v1278
        %1296 = vst.msk [vmem:[#allocation3 + $0x4] sm:$0xf] %vm691, %v1101
        %1297 = vst.msk [vmem:[#allocation3 + $0x28] sm:$0xf] %vm691, %v1111
        %1298 = vst.msk [vmem:[#allocation3 + $0x4c] sm:$0xf] %vm691, %v1125
        %1299 = vst.msk [vmem:[#allocation3 + $0x70] sm:$0xf] %vm691, %v1135
        %1300 = vst.msk [vmem:[#allocation3 + $0x94] sm:$0xf] %vm691, %v1149
        %1301 = vst.msk [vmem:[#allocation3 + $0xb8] sm:$0xf] %vm691, %v1159
        %1302 = vst.msk [vmem:[#allocation3 + $0xdc] sm:$0xf] %vm691, %v1173
        %1303 = vst.msk [vmem:[#allocation3 + $0x100] sm:$0xf] %vm691, %v1183
        %1304 = vst.msk [vmem:[#allocation3 + $0x124] sm:$0xf] %vm691, %v1197
        %1305 = vst.msk [vmem:[#allocation3 + $0x148] sm:$0xf] %vm691, %v1207
        %1306 = vst.msk [vmem:[#allocation3 + $0x16c] sm:$0xf] %vm691, %v1221
        %1307 = vst.msk [vmem:[#allocation3 + $0x190] sm:$0xf] %vm691, %v1231
        %1308 = vst.msk [vmem:[#allocation3 + $0x1b4] sm:$0xf] %vm691, %v1245
        %1309 = vst.msk [vmem:[#allocation3 + $0x1d8] sm:$0xf] %vm691, %v1255
        %1310 = vst.msk [vmem:[#allocation3 + $0x1fc] sm:$0xf] %vm691, %v1269
        %1311 = vst.msk [vmem:[#allocation3 + $0x220] sm:$0xf] %vm691, %v1279
        %1312 = vst.msk [vmem:[#allocation3 + $0x4] sm:$0xf] %vm1044, 0
        %1313 = vst.msk [vmem:[#allocation3 + $0x28] sm:$0xf] %vm1044, 0
        %1314 = vst.msk [vmem:[#allocation3 + $0x4c] sm:$0xf] %vm1044, 0
        %1315 = vst.msk [vmem:[#allocation3 + $0x70] sm:$0xf] %vm1044, 0
        %1316 = vst.msk [vmem:[#allocation3 + $0x94] sm:$0xf] %vm1044, 0
        %1317 = vst.msk [vmem:[#allocation3 + $0xb8] sm:$0xf] %vm1044, 0
        %1318 = vst.msk [vmem:[#allocation3 + $0xdc] sm:$0xf] %vm1044, 0
        %1319 = vst.msk [vmem:[#allocation3 + $0x100] sm:$0xf] %vm1044, 0
        %1320 = vst.msk [vmem:[#allocation3 + $0x124] sm:$0xf] %vm1044, 0
        %1321 = vst.msk [vmem:[#allocation3 + $0x148] sm:$0xf] %vm1044, 0
        %1322 = vst.msk [vmem:[#allocation3 + $0x16c] sm:$0xf] %vm1044, 0
        %1323 = vst.msk [vmem:[#allocation3 + $0x190] sm:$0xf] %vm1044, 0
        %1324 = vst.msk [vmem:[#allocation3 + $0x1b4] sm:$0xf] %vm1044, 0
        %1325 = vst.msk [vmem:[#allocation3 + $0x1d8] sm:$0xf] %vm1044, 0
        %1326 = vst.msk [vmem:[#allocation3 + $0x1fc] sm:$0xf] %vm1044, 0
        %1327 = vst.msk [vmem:[#allocation3 + $0x220] sm:$0xf] %vm1044, 0
        %v1328 = vld [vmem:[#allocation2] sm:$0xe]
        %v1329 = vld [vmem:[#allocation2 + $0x4] sm:$0xf]
        %v1330 = vld [vmem:[#allocation2 + $0x8] sm:$0x1]
        %v1331 = vld [vmem:[#allocation2 + $0xc] sm:$0xe]
        %v1332 = vld [vmem:[#allocation2 + $0x10] sm:$0xf]
        %v1333 = vld [vmem:[#allocation2 + $0x14] sm:$0x1]
        %v1334 = vld [vmem:[#allocation2 + $0x18] sm:$0xe]
        %v1335 = vld [vmem:[#allocation2 + $0x1c] sm:$0xf]
        %v1336 = vld [vmem:[#allocation2 + $0x20] sm:$0x1]
        %v1337 = vld [vmem:[#allocation2 + $0x24] sm:$0xe]
        %v1338 = vld [vmem:[#allocation2 + $0x28] sm:$0xf]
        %v1339 = vld [vmem:[#allocation2 + $0x2c] sm:$0x1]
        %v1340 = vld [vmem:[#allocation2 + $0x30] sm:$0xe]
        %v1341 = vld [vmem:[#allocation2 + $0x34] sm:$0xf]
        %v1342 = vld [vmem:[#allocation2 + $0x38] sm:$0x1]
        %v1343 = vld [vmem:[#allocation2 + $0x3c] sm:$0xe]
        %v1344 = vld [vmem:[#allocation2 + $0x40] sm:$0xf]
        %v1345 = vld [vmem:[#allocation2 + $0x44] sm:$0x1]
        %v1346 = vld [vmem:[#allocation2 + $0x48] sm:$0xe]
        %v1347 = vld [vmem:[#allocation2 + $0x4c] sm:$0xf]
        %v1348 = vld [vmem:[#allocation2 + $0x50] sm:$0x1]
        %v1349 = vld [vmem:[#allocation2 + $0x54] sm:$0xe]
        %v1350 = vld [vmem:[#allocation2 + $0x58] sm:$0xf]
        %v1351 = vld [vmem:[#allocation2 + $0x5c] sm:$0x1]
        %vm1376 = vcmask 1042432
        %vm1377 = vcmask 1046532
        %vm1378 = vmor %vm1376, %vm1377
        %v1379 = vrot.slane %v1328, 5
        %v1380 = vrot.slane %v1379, 4
        %v1381 = vrot.slane %v1329, 5
        %v1382 = vsel %vm1378, %v1380, %v1381
        %v1383 = vrot.slane %v1381, 4
        %v1384 = vrot.slane %v1330, 5
        %v1385 = vsel %vm1378, %v1383, %v1384
        %v1386 = vrot.slane %v1331, 5
        %v1387 = vrot.slane %v1386, 4
        %v1388 = vrot.slane %v1332, 5
        %v1389 = vsel %vm1378, %v1387, %v1388
        %v1390 = vrot.slane %v1388, 4
        %v1391 = vrot.slane %v1333, 5
        %v1392 = vsel %vm1378, %v1390, %v1391
        %v1393 = vrot.slane %v1334, 5
        %v1394 = vrot.slane %v1393, 4
        %v1395 = vrot.slane %v1335, 5
        %v1396 = vsel %vm1378, %v1394, %v1395
        %v1397 = vrot.slane %v1395, 4
        %v1398 = vrot.slane %v1336, 5
        %v1399 = vsel %vm1378, %v1397, %v1398
        %v1400 = vrot.slane %v1337, 5
        %v1401 = vrot.slane %v1400, 4
        %v1402 = vrot.slane %v1338, 5
        %v1403 = vsel %vm1378, %v1401, %v1402
        %v1404 = vrot.slane %v1402, 4
        %v1405 = vrot.slane %v1339, 5
        %v1406 = vsel %vm1378, %v1404, %v1405
        %v1407 = vrot.slane %v1340, 5
        %v1408 = vrot.slane %v1407, 4
        %v1409 = vrot.slane %v1341, 5
        %v1410 = vsel %vm1378, %v1408, %v1409
        %v1411 = vrot.slane %v1409, 4
        %v1412 = vrot.slane %v1342, 5
        %v1413 = vsel %vm1378, %v1411, %v1412
        %v1414 = vrot.slane %v1343, 5
        %v1415 = vrot.slane %v1414, 4
        %v1416 = vrot.slane %v1344, 5
        %v1417 = vsel %vm1378, %v1415, %v1416
        %v1418 = vrot.slane %v1416, 4
        %v1419 = vrot.slane %v1345, 5
        %v1420 = vsel %vm1378, %v1418, %v1419
        %v1421 = vrot.slane %v1346, 5
        %v1422 = vrot.slane %v1421, 4
        %v1423 = vrot.slane %v1347, 5
        %v1424 = vsel %vm1378, %v1422, %v1423
        %v1425 = vrot.slane %v1423, 4
        %v1426 = vrot.slane %v1348, 5
        %v1427 = vsel %vm1378, %v1425, %v1426
        %v1428 = vrot.slane %v1349, 5
        %v1429 = vrot.slane %v1428, 4
        %v1430 = vrot.slane %v1350, 5
        %v1431 = vsel %vm1378, %v1429, %v1430
        %v1432 = vrot.slane %v1430, 4
        %v1433 = vrot.slane %v1351, 5
        %v1434 = vsel %vm1378, %v1432, %v1433
        %1451 = vst.msk [vmem:[#allocation3 + $0x8] sm:$0xf] %vm691, %v1382
        %1452 = vst.msk [vmem:[#allocation3 + $0x2c] sm:$0xf] %vm691, %v1385
        %1453 = vst.msk [vmem:[#allocation3 + $0x50] sm:$0xf] %vm691, %v1389
        %1454 = vst.msk [vmem:[#allocation3 + $0x74] sm:$0xf] %vm691, %v1392
        %1455 = vst.msk [vmem:[#allocation3 + $0x98] sm:$0xf] %vm691, %v1396
        %1456 = vst.msk [vmem:[#allocation3 + $0xbc] sm:$0xf] %vm691, %v1399
        %1457 = vst.msk [vmem:[#allocation3 + $0xe0] sm:$0xf] %vm691, %v1403
        %1458 = vst.msk [vmem:[#allocation3 + $0x104] sm:$0xf] %vm691, %v1406
        %1459 = vst.msk [vmem:[#allocation3 + $0x128] sm:$0xf] %vm691, %v1410
        %1460 = vst.msk [vmem:[#allocation3 + $0x14c] sm:$0xf] %vm691, %v1413
        %1461 = vst.msk [vmem:[#allocation3 + $0x170] sm:$0xf] %vm691, %v1417
        %1462 = vst.msk [vmem:[#allocation3 + $0x194] sm:$0xf] %vm691, %v1420
        %1463 = vst.msk [vmem:[#allocation3 + $0x1b8] sm:$0xf] %vm691, %v1424
        %1464 = vst.msk [vmem:[#allocation3 + $0x1dc] sm:$0xf] %vm691, %v1427
        %1465 = vst.msk [vmem:[#allocation3 + $0x200] sm:$0xf] %vm691, %v1431
        %1466 = vst.msk [vmem:[#allocation3 + $0x224] sm:$0xf] %vm691, %v1434
        %1467 = vst.msk [vmem:[#allocation3 + $0x8] sm:$0xf] %vm1044, 0
        %1468 = vst.msk [vmem:[#allocation3 + $0x2c] sm:$0xf] %vm1044, 0
        %1469 = vst.msk [vmem:[#allocation3 + $0x50] sm:$0xf] %vm1044, 0
        %1470 = vst.msk [vmem:[#allocation3 + $0x74] sm:$0xf] %vm1044, 0
        %1471 = vst.msk [vmem:[#allocation3 + $0x98] sm:$0xf] %vm1044, 0
        %1472 = vst.msk [vmem:[#allocation3 + $0xbc] sm:$0xf] %vm1044, 0
        %1473 = vst.msk [vmem:[#allocation3 + $0xe0] sm:$0xf] %vm1044, 0
        %1474 = vst.msk [vmem:[#allocation3 + $0x104] sm:$0xf] %vm1044, 0
        %1475 = vst.msk [vmem:[#allocation3 + $0x128] sm:$0xf] %vm1044, 0
        %1476 = vst.msk [vmem:[#allocation3 + $0x14c] sm:$0xf] %vm1044, 0
        %1477 = vst.msk [vmem:[#allocation3 + $0x170] sm:$0xf] %vm1044, 0
        %1478 = vst.msk [vmem:[#allocation3 + $0x194] sm:$0xf] %vm1044, 0
        %1479 = vst.msk [vmem:[#allocation3 + $0x1b8] sm:$0xf] %vm1044, 0
        %1480 = vst.msk [vmem:[#allocation3 + $0x1dc] sm:$0xf] %vm1044, 0
        %1481 = vst.msk [vmem:[#allocation3 + $0x200] sm:$0xf] %vm1044, 0
        %1482 = vst.msk [vmem:[#allocation3 + $0x224] sm:$0xf] %vm1044, 0
        %v1483 = vld [vmem:[%s684] sm:$0xf]
        %v1484 = vld [vmem:[%s684 + $0x4] sm:$0xf]
        %v1485 = vld [vmem:[%s684 + $0xc] sm:$0xf]
        %v1486 = vld [vmem:[%s684 + $0x10] sm:$0xf]
        %v1487 = vld [vmem:[%s684 + $0x18] sm:$0xf]
        %v1488 = vld [vmem:[%s684 + $0x1c] sm:$0xf]
        %v1489 = vld [vmem:[%s684 + $0x24] sm:$0xf]
        %v1490 = vld [vmem:[%s684 + $0x28] sm:$0xf]
        %v1491 = vld [vmem:[%s684 + $0x30] sm:$0xf]
        %v1492 = vld [vmem:[%s684 + $0x34] sm:$0xf]
        %v1493 = vld [vmem:[%s684 + $0x3c] sm:$0xf]
        %v1494 = vld [vmem:[%s684 + $0x40] sm:$0xf]
        %v1495 = vld [vmem:[%s684 + $0x48] sm:$0xf]
        %v1496 = vld [vmem:[%s684 + $0x4c] sm:$0xf]
        %v1497 = vld [vmem:[%s684 + $0x54] sm:$0xf]
        %v1498 = vld [vmem:[%s684 + $0x58] sm:$0xf]
        %1499 = vst.msk [vmem:[#allocation3 + $0xc] sm:$0xf] %vm691, %v1483
        %1500 = vst.msk [vmem:[#allocation3 + $0x30] sm:$0xf] %vm691, %v1484
        %1501 = vst.msk [vmem:[#allocation3 + $0x54] sm:$0xf] %vm691, %v1485
        %1502 = vst.msk [vmem:[#allocation3 + $0x78] sm:$0xf] %vm691, %v1486
        %1503 = vst.msk [vmem:[#allocation3 + $0x9c] sm:$0xf] %vm691, %v1487
        %1504 = vst.msk [vmem:[#allocation3 + $0xc0] sm:$0xf] %vm691, %v1488
        %1505 = vst.msk [vmem:[#allocation3 + $0xe4] sm:$0xf] %vm691, %v1489
        %1506 = vst.msk [vmem:[#allocation3 + $0x108] sm:$0xf] %vm691, %v1490
        %1507 = vst.msk [vmem:[#allocation3 + $0x12c] sm:$0xf] %vm691, %v1491
        %1508 = vst.msk [vmem:[#allocation3 + $0x150] sm:$0xf] %vm691, %v1492
        %1509 = vst.msk [vmem:[#allocation3 + $0x174] sm:$0xf] %vm691, %v1493
        %1510 = vst.msk [vmem:[#allocation3 + $0x198] sm:$0xf] %vm691, %v1494
        %1511 = vst.msk [vmem:[#allocation3 + $0x1bc] sm:$0xf] %vm691, %v1495
        %1512 = vst.msk [vmem:[#allocation3 + $0x1e0] sm:$0xf] %vm691, %v1496
        %1513 = vst.msk [vmem:[#allocation3 + $0x204] sm:$0xf] %vm691, %v1497
        %1514 = vst.msk [vmem:[#allocation3 + $0x228] sm:$0xf] %vm691, %v1498
        %1515 = vst.msk [vmem:[#allocation3 + $0xc] sm:$0xf] %vm1044, 0
        %1516 = vst.msk [vmem:[#allocation3 + $0x30] sm:$0xf] %vm1044, 0
        %1517 = vst.msk [vmem:[#allocation3 + $0x54] sm:$0xf] %vm1044, 0
        %1518 = vst.msk [vmem:[#allocation3 + $0x78] sm:$0xf] %vm1044, 0
        %1519 = vst.msk [vmem:[#allocation3 + $0x9c] sm:$0xf] %vm1044, 0
        %1520 = vst.msk [vmem:[#allocation3 + $0xc0] sm:$0xf] %vm1044, 0
        %1521 = vst.msk [vmem:[#allocation3 + $0xe4] sm:$0xf] %vm1044, 0
        %1522 = vst.msk [vmem:[#allocation3 + $0x108] sm:$0xf] %vm1044, 0
        %1523 = vst.msk [vmem:[#allocation3 + $0x12c] sm:$0xf] %vm1044, 0
        %1524 = vst.msk [vmem:[#allocation3 + $0x150] sm:$0xf] %vm1044, 0
        %1525 = vst.msk [vmem:[#allocation3 + $0x174] sm:$0xf] %vm1044, 0
        %1526 = vst.msk [vmem:[#allocation3 + $0x198] sm:$0xf] %vm1044, 0
        %1527 = vst.msk [vmem:[#allocation3 + $0x1bc] sm:$0xf] %vm1044, 0
        %1528 = vst.msk [vmem:[#allocation3 + $0x1e0] sm:$0xf] %vm1044, 0
        %1529 = vst.msk [vmem:[#allocation3 + $0x204] sm:$0xf] %vm1044, 0
        %1530 = vst.msk [vmem:[#allocation3 + $0x228] sm:$0xf] %vm1044, 0
        %v1531 = vld [vmem:[%s684] sm:$0xf]
        %v1532 = vld [vmem:[%s684 + $0x4] sm:$0xf]
        %v1533 = vld [vmem:[%s684 + $0x8] sm:$0x1]
        %v1534 = vld [vmem:[%s684 + $0xc] sm:$0xf]
        %v1535 = vld [vmem:[%s684 + $0x10] sm:$0xf]
        %v1536 = vld [vmem:[%s684 + $0x14] sm:$0x1]
        %v1537 = vld [vmem:[%s684 + $0x18] sm:$0xf]
        %v1538 = vld [vmem:[%s684 + $0x1c] sm:$0xf]
        %v1539 = vld [vmem:[%s684 + $0x20] sm:$0x1]
        %v1540 = vld [vmem:[%s684 + $0x24] sm:$0xf]
        %v1541 = vld [vmem:[%s684 + $0x28] sm:$0xf]
        %v1542 = vld [vmem:[%s684 + $0x2c] sm:$0x1]
        %v1543 = vld [vmem:[%s684 + $0x30] sm:$0xf]
        %v1544 = vld [vmem:[%s684 + $0x34] sm:$0xf]
        %v1545 = vld [vmem:[%s684 + $0x38] sm:$0x1]
        %v1546 = vld [vmem:[%s684 + $0x3c] sm:$0xf]
        %v1547 = vld [vmem:[%s684 + $0x40] sm:$0xf]
        %v1548 = vld [vmem:[%s684 + $0x44] sm:$0x1]
        %v1549 = vld [vmem:[%s684 + $0x48] sm:$0xf]
        %v1550 = vld [vmem:[%s684 + $0x4c] sm:$0xf]
        %v1551 = vld [vmem:[%s684 + $0x50] sm:$0x1]
        %v1552 = vld [vmem:[%s684 + $0x54] sm:$0xf]
        %v1553 = vld [vmem:[%s684 + $0x58] sm:$0xf]
        %v1554 = vld [vmem:[%s684 + $0x5c] sm:$0x1]
        %v1556 = vshrl.u32 %v1531, 16
        %v1558 = vrot.slane %v1556, 4
        %v1559 = vshll.u32 %v1531, 16
        %v1561 = vrot.slane %v1559, 5
        %v1562 = vor.u32 %v1558, %v1561
        %v1563 = vrot.slane %v1562, 4
        %v1565 = vshll.u32 %v1532, 16
        %v1567 = vrot.slane %v1565, 5
        %v1568 = vsel %vm1087, %v1563, %v1567
        %v1569 = vshrl.u32 %v1532, 16
        %v1571 = vrot.slane %v1569, 4
        %v1572 = vor.u32 %v1571, %v1567
        %v1573 = vrot.slane %v1572, 4
        %v1575 = vshll.u32 %v1533, 16
        %v1577 = vrot.slane %v1575, 5
        %v1578 = vsel %vm1087, %v1573, %v1577
        %v1580 = vshrl.u32 %v1534, 16
        %v1582 = vrot.slane %v1580, 4
        %v1583 = vshll.u32 %v1534, 16
        %v1585 = vrot.slane %v1583, 5
        %v1586 = vor.u32 %v1582, %v1585
        %v1587 = vrot.slane %v1586, 4
        %v1589 = vshll.u32 %v1535, 16
        %v1591 = vrot.slane %v1589, 5
        %v1592 = vsel %vm1087, %v1587, %v1591
        %v1593 = vshrl.u32 %v1535, 16
        %v1595 = vrot.slane %v1593, 4
        %v1596 = vor.u32 %v1595, %v1591
        %v1597 = vrot.slane %v1596, 4
        %v1599 = vshll.u32 %v1536, 16
        %v1601 = vrot.slane %v1599, 5
        %v1602 = vsel %vm1087, %v1597, %v1601
        %v1604 = vshrl.u32 %v1537, 16
        %v1606 = vrot.slane %v1604, 4
        %v1607 = vshll.u32 %v1537, 16
        %v1609 = vrot.slane %v1607, 5
        %v1610 = vor.u32 %v1606, %v1609
        %v1611 = vrot.slane %v1610, 4
        %v1613 = vshll.u32 %v1538, 16
        %v1615 = vrot.slane %v1613, 5
        %v1616 = vsel %vm1087, %v1611, %v1615
        %v1617 = vshrl.u32 %v1538, 16
        %v1619 = vrot.slane %v1617, 4
        %v1620 = vor.u32 %v1619, %v1615
        %v1621 = vrot.slane %v1620, 4
        %v1623 = vshll.u32 %v1539, 16
        %v1625 = vrot.slane %v1623, 5
        %v1626 = vsel %vm1087, %v1621, %v1625
        %v1628 = vshrl.u32 %v1540, 16
        %v1630 = vrot.slane %v1628, 4
        %v1631 = vshll.u32 %v1540, 16
        %v1633 = vrot.slane %v1631, 5
        %v1634 = vor.u32 %v1630, %v1633
        %v1635 = vrot.slane %v1634, 4
        %v1637 = vshll.u32 %v1541, 16
        %v1639 = vrot.slane %v1637, 5
        %v1640 = vsel %vm1087, %v1635, %v1639
        %v1641 = vshrl.u32 %v1541, 16
        %v1643 = vrot.slane %v1641, 4
        %v1644 = vor.u32 %v1643, %v1639
        %v1645 = vrot.slane %v1644, 4
        %v1647 = vshll.u32 %v1542, 16
        %v1649 = vrot.slane %v1647, 5
        %v1650 = vsel %vm1087, %v1645, %v1649
        %v1652 = vshrl.u32 %v1543, 16
        %v1654 = vrot.slane %v1652, 4
        %v1655 = vshll.u32 %v1543, 16
        %v1657 = vrot.slane %v1655, 5
        %v1658 = vor.u32 %v1654, %v1657
        %v1659 = vrot.slane %v1658, 4
        %v1661 = vshll.u32 %v1544, 16
        %v1663 = vrot.slane %v1661, 5
        %v1664 = vsel %vm1087, %v1659, %v1663
        %v1665 = vshrl.u32 %v1544, 16
        %v1667 = vrot.slane %v1665, 4
        %v1668 = vor.u32 %v1667, %v1663
        %v1669 = vrot.slane %v1668, 4
        %v1671 = vshll.u32 %v1545, 16
        %v1673 = vrot.slane %v1671, 5
        %v1674 = vsel %vm1087, %v1669, %v1673
        %v1676 = vshrl.u32 %v1546, 16
        %v1678 = vrot.slane %v1676, 4
        %v1679 = vshll.u32 %v1546, 16
        %v1681 = vrot.slane %v1679, 5
        %v1682 = vor.u32 %v1678, %v1681
        %v1683 = vrot.slane %v1682, 4
        %v1685 = vshll.u32 %v1547, 16
        %v1687 = vrot.slane %v1685, 5
        %v1688 = vsel %vm1087, %v1683, %v1687
        %v1689 = vshrl.u32 %v1547, 16
        %v1691 = vrot.slane %v1689, 4
        %v1692 = vor.u32 %v1691, %v1687
        %v1693 = vrot.slane %v1692, 4
        %v1695 = vshll.u32 %v1548, 16
        %v1697 = vrot.slane %v1695, 5
        %v1698 = vsel %vm1087, %v1693, %v1697
        %v1700 = vshrl.u32 %v1549, 16
        %v1702 = vrot.slane %v1700, 4
        %v1703 = vshll.u32 %v1549, 16
        %v1705 = vrot.slane %v1703, 5
        %v1706 = vor.u32 %v1702, %v1705
        %v1707 = vrot.slane %v1706, 4
        %v1709 = vshll.u32 %v1550, 16
        %v1711 = vrot.slane %v1709, 5
        %v1712 = vsel %vm1087, %v1707, %v1711
        %v1713 = vshrl.u32 %v1550, 16
        %v1715 = vrot.slane %v1713, 4
        %v1716 = vor.u32 %v1715, %v1711
        %v1717 = vrot.slane %v1716, 4
        %v1719 = vshll.u32 %v1551, 16
        %v1721 = vrot.slane %v1719, 5
        %v1722 = vsel %vm1087, %v1717, %v1721
        %v1724 = vshrl.u32 %v1552, 16
        %v1726 = vrot.slane %v1724, 4
        %v1727 = vshll.u32 %v1552, 16
        %v1729 = vrot.slane %v1727, 5
        %v1730 = vor.u32 %v1726, %v1729
        %v1731 = vrot.slane %v1730, 4
        %v1733 = vshll.u32 %v1553, 16
        %v1735 = vrot.slane %v1733, 5
        %v1736 = vsel %vm1087, %v1731, %v1735
        %v1737 = vshrl.u32 %v1553, 16
        %v1739 = vrot.slane %v1737, 4
        %v1740 = vor.u32 %v1739, %v1735
        %v1741 = vrot.slane %v1740, 4
        %v1743 = vshll.u32 %v1554, 16
        %v1745 = vrot.slane %v1743, 5
        %v1746 = vsel %vm1087, %v1741, %v1745
        %1763 = vst.msk [vmem:[#allocation3 + $0x10] sm:$0xf] %vm691, %v1568
        %1764 = vst.msk [vmem:[#allocation3 + $0x34] sm:$0xf] %vm691, %v1578
        %1765 = vst.msk [vmem:[#allocation3 + $0x58] sm:$0xf] %vm691, %v1592
        %1766 = vst.msk [vmem:[#allocation3 + $0x7c] sm:$0xf] %vm691, %v1602
        %1767 = vst.msk [vmem:[#allocation3 + $0xa0] sm:$0xf] %vm691, %v1616
        %1768 = vst.msk [vmem:[#allocation3 + $0xc4] sm:$0xf] %vm691, %v1626
        %1769 = vst.msk [vmem:[#allocation3 + $0xe8] sm:$0xf] %vm691, %v1640
        %1770 = vst.msk [vmem:[#allocation3 + $0x10c] sm:$0xf] %vm691, %v1650
        %1771 = vst.msk [vmem:[#allocation3 + $0x130] sm:$0xf] %vm691, %v1664
        %1772 = vst.msk [vmem:[#allocation3 + $0x154] sm:$0xf] %vm691, %v1674
        %1773 = vst.msk [vmem:[#allocation3 + $0x178] sm:$0xf] %vm691, %v1688
        %1774 = vst.msk [vmem:[#allocation3 + $0x19c] sm:$0xf] %vm691, %v1698
        %1775 = vst.msk [vmem:[#allocation3 + $0x1c0] sm:$0xf] %vm691, %v1712
        %1776 = vst.msk [vmem:[#allocation3 + $0x1e4] sm:$0xf] %vm691, %v1722
        %1777 = vst.msk [vmem:[#allocation3 + $0x208] sm:$0xf] %vm691, %v1736
        %1778 = vst.msk [vmem:[#allocation3 + $0x22c] sm:$0xf] %vm691, %v1746
        %1779 = vst.msk [vmem:[#allocation3 + $0x10] sm:$0xf] %vm1044, 0
        %1780 = vst.msk [vmem:[#allocation3 + $0x34] sm:$0xf] %vm1044, 0
        %1781 = vst.msk [vmem:[#allocation3 + $0x58] sm:$0xf] %vm1044, 0
        %1782 = vst.msk [vmem:[#allocation3 + $0x7c] sm:$0xf] %vm1044, 0
        %1783 = vst.msk [vmem:[#allocation3 + $0xa0] sm:$0xf] %vm1044, 0
        %1784 = vst.msk [vmem:[#allocation3 + $0xc4] sm:$0xf] %vm1044, 0
        %1785 = vst.msk [vmem:[#allocation3 + $0xe8] sm:$0xf] %vm1044, 0
        %1786 = vst.msk [vmem:[#allocation3 + $0x10c] sm:$0xf] %vm1044, 0
        %1787 = vst.msk [vmem:[#allocation3 + $0x130] sm:$0xf] %vm1044, 0
        %1788 = vst.msk [vmem:[#allocation3 + $0x154] sm:$0xf] %vm1044, 0
        %1789 = vst.msk [vmem:[#allocation3 + $0x178] sm:$0xf] %vm1044, 0
        %1790 = vst.msk [vmem:[#allocation3 + $0x19c] sm:$0xf] %vm1044, 0
        %1791 = vst.msk [vmem:[#allocation3 + $0x1c0] sm:$0xf] %vm1044, 0
        %1792 = vst.msk [vmem:[#allocation3 + $0x1e4] sm:$0xf] %vm1044, 0
        %1793 = vst.msk [vmem:[#allocation3 + $0x208] sm:$0xf] %vm1044, 0
        %1794 = vst.msk [vmem:[#allocation3 + $0x22c] sm:$0xf] %vm1044, 0
        %v1795 = vld [vmem:[%s684] sm:$0xe]
        %v1796 = vld [vmem:[%s684 + $0x4] sm:$0xf]
        %v1797 = vld [vmem:[%s684 + $0x8] sm:$0x1]
        %v1798 = vld [vmem:[%s684 + $0xc] sm:$0xe]
        %v1799 = vld [vmem:[%s684 + $0x10] sm:$0xf]
        %v1800 = vld [vmem:[%s684 + $0x14] sm:$0x1]
        %v1801 = vld [vmem:[%s684 + $0x18] sm:$0xe]
        %v1802 = vld [vmem:[%s684 + $0x1c] sm:$0xf]
        %v1803 = vld [vmem:[%s684 + $0x20] sm:$0x1]
        %v1804 = vld [vmem:[%s684 + $0x24] sm:$0xe]
        %v1805 = vld [vmem:[%s684 + $0x28] sm:$0xf]
        %v1806 = vld [vmem:[%s684 + $0x2c] sm:$0x1]
        %v1807 = vld [vmem:[%s684 + $0x30] sm:$0xe]
        %v1808 = vld [vmem:[%s684 + $0x34] sm:$0xf]
        %v1809 = vld [vmem:[%s684 + $0x38] sm:$0x1]
        %v1810 = vld [vmem:[%s684 + $0x3c] sm:$0xe]
        %v1811 = vld [vmem:[%s684 + $0x40] sm:$0xf]
        %v1812 = vld [vmem:[%s684 + $0x44] sm:$0x1]
        %v1813 = vld [vmem:[%s684 + $0x48] sm:$0xe]
        %v1814 = vld [vmem:[%s684 + $0x4c] sm:$0xf]
        %v1815 = vld [vmem:[%s684 + $0x50] sm:$0x1]
        %v1816 = vld [vmem:[%s684 + $0x54] sm:$0xe]
        %v1817 = vld [vmem:[%s684 + $0x58] sm:$0xf]
        %v1818 = vld [vmem:[%s684 + $0x5c] sm:$0x1]
        %v1843 = vrot.slane %v1795, 5
        %v1844 = vrot.slane %v1843, 4
        %v1845 = vrot.slane %v1796, 5
        %v1846 = vsel %vm1378, %v1844, %v1845
        %v1847 = vrot.slane %v1845, 4
        %v1848 = vrot.slane %v1797, 5
        %v1849 = vsel %vm1378, %v1847, %v1848
        %v1850 = vrot.slane %v1798, 5
        %v1851 = vrot.slane %v1850, 4
        %v1852 = vrot.slane %v1799, 5
        %v1853 = vsel %vm1378, %v1851, %v1852
        %v1854 = vrot.slane %v1852, 4
        %v1855 = vrot.slane %v1800, 5
        %v1856 = vsel %vm1378, %v1854, %v1855
        %v1857 = vrot.slane %v1801, 5
        %v1858 = vrot.slane %v1857, 4
        %v1859 = vrot.slane %v1802, 5
        %v1860 = vsel %vm1378, %v1858, %v1859
        %v1861 = vrot.slane %v1859, 4
        %v1862 = vrot.slane %v1803, 5
        %v1863 = vsel %vm1378, %v1861, %v1862
        %v1864 = vrot.slane %v1804, 5
        %v1865 = vrot.slane %v1864, 4
        %v1866 = vrot.slane %v1805, 5
        %v1867 = vsel %vm1378, %v1865, %v1866
        %v1868 = vrot.slane %v1866, 4
        %v1869 = vrot.slane %v1806, 5
        %v1870 = vsel %vm1378, %v1868, %v1869
        %v1871 = vrot.slane %v1807, 5
        %v1872 = vrot.slane %v1871, 4
        %v1873 = vrot.slane %v1808, 5
        %v1874 = vsel %vm1378, %v1872, %v1873
        %v1875 = vrot.slane %v1873, 4
        %v1876 = vrot.slane %v1809, 5
        %v1877 = vsel %vm1378, %v1875, %v1876
        %v1878 = vrot.slane %v1810, 5
        %v1879 = vrot.slane %v1878, 4
        %v1880 = vrot.slane %v1811, 5
        %v1881 = vsel %vm1378, %v1879, %v1880
        %v1882 = vrot.slane %v1880, 4
        %v1883 = vrot.slane %v1812, 5
        %v1884 = vsel %vm1378, %v1882, %v1883
        %v1885 = vrot.slane %v1813, 5
        %v1886 = vrot.slane %v1885, 4
        %v1887 = vrot.slane %v1814, 5
        %v1888 = vsel %vm1378, %v1886, %v1887
        %v1889 = vrot.slane %v1887, 4
        %v1890 = vrot.slane %v1815, 5
        %v1891 = vsel %vm1378, %v1889, %v1890
        %v1892 = vrot.slane %v1816, 5
        %v1893 = vrot.slane %v1892, 4
        %v1894 = vrot.slane %v1817, 5
        %v1895 = vsel %vm1378, %v1893, %v1894
        %v1896 = vrot.slane %v1894, 4
        %v1897 = vrot.slane %v1818, 5
        %v1898 = vsel %vm1378, %v1896, %v1897
        %1915 = vst.msk [vmem:[#allocation3 + $0x14] sm:$0xf] %vm691, %v1846
        %1916 = vst.msk [vmem:[#allocation3 + $0x38] sm:$0xf] %vm691, %v1849
        %1917 = vst.msk [vmem:[#allocation3 + $0x5c] sm:$0xf] %vm691, %v1853
        %1918 = vst.msk [vmem:[#allocation3 + $0x80] sm:$0xf] %vm691, %v1856
        %1919 = vst.msk [vmem:[#allocation3 + $0xa4] sm:$0xf] %vm691, %v1860
        %1920 = vst.msk [vmem:[#allocation3 + $0xc8] sm:$0xf] %vm691, %v1863
        %1921 = vst.msk [vmem:[#allocation3 + $0xec] sm:$0xf] %vm691, %v1867
        %1922 = vst.msk [vmem:[#allocation3 + $0x110] sm:$0xf] %vm691, %v1870
        %1923 = vst.msk [vmem:[#allocation3 + $0x134] sm:$0xf] %vm691, %v1874
        %1924 = vst.msk [vmem:[#allocation3 + $0x158] sm:$0xf] %vm691, %v1877
        %1925 = vst.msk [vmem:[#allocation3 + $0x17c] sm:$0xf] %vm691, %v1881
        %1926 = vst.msk [vmem:[#allocation3 + $0x1a0] sm:$0xf] %vm691, %v1884
        %1927 = vst.msk [vmem:[#allocation3 + $0x1c4] sm:$0xf] %vm691, %v1888
        %1928 = vst.msk [vmem:[#allocation3 + $0x1e8] sm:$0xf] %vm691, %v1891
        %1929 = vst.msk [vmem:[#allocation3 + $0x20c] sm:$0xf] %vm691, %v1895
        %1930 = vst.msk [vmem:[#allocation3 + $0x230] sm:$0xf] %vm691, %v1898
        %1931 = vst.msk [vmem:[#allocation3 + $0x14] sm:$0xf] %vm1044, 0
        %1932 = vst.msk [vmem:[#allocation3 + $0x38] sm:$0xf] %vm1044, 0
        %1933 = vst.msk [vmem:[#allocation3 + $0x5c] sm:$0xf] %vm1044, 0
        %1934 = vst.msk [vmem:[#allocation3 + $0x80] sm:$0xf] %vm1044, 0
        %1935 = vst.msk [vmem:[#allocation3 + $0xa4] sm:$0xf] %vm1044, 0
        %1936 = vst.msk [vmem:[#allocation3 + $0xc8] sm:$0xf] %vm1044, 0
        %1937 = vst.msk [vmem:[#allocation3 + $0xec] sm:$0xf] %vm1044, 0
        %1938 = vst.msk [vmem:[#allocation3 + $0x110] sm:$0xf] %vm1044, 0
        %1939 = vst.msk [vmem:[#allocation3 + $0x134] sm:$0xf] %vm1044, 0
        %1940 = vst.msk [vmem:[#allocation3 + $0x158] sm:$0xf] %vm1044, 0
        %1941 = vst.msk [vmem:[#allocation3 + $0x17c] sm:$0xf] %vm1044, 0
        %1942 = vst.msk [vmem:[#allocation3 + $0x1a0] sm:$0xf] %vm1044, 0
        %1943 = vst.msk [vmem:[#allocation3 + $0x1c4] sm:$0xf] %vm1044, 0
        %1944 = vst.msk [vmem:[#allocation3 + $0x1e8] sm:$0xf] %vm1044, 0
        %1945 = vst.msk [vmem:[#allocation3 + $0x20c] sm:$0xf] %vm1044, 0
        %1946 = vst.msk [vmem:[#allocation3 + $0x230] sm:$0xf] %vm1044, 0
        %s1947 = scalar_lea.vmem [#allocation2], 24
        %v1948 = vld [vmem:[%s1947] sm:$0xf]
        %v1949 = vld [vmem:[%s1947 + $0x4] sm:$0xf]
        %v1950 = vld [vmem:[%s1947 + $0xc] sm:$0xf]
        %v1951 = vld [vmem:[%s1947 + $0x10] sm:$0xf]
        %v1952 = vld [vmem:[%s1947 + $0x18] sm:$0xf]
        %v1953 = vld [vmem:[%s1947 + $0x1c] sm:$0xf]
        %v1954 = vld [vmem:[%s1947 + $0x24] sm:$0xf]
        %v1955 = vld [vmem:[%s1947 + $0x28] sm:$0xf]
        %v1956 = vld [vmem:[%s1947 + $0x30] sm:$0xf]
        %v1957 = vld [vmem:[%s1947 + $0x34] sm:$0xf]
        %v1958 = vld [vmem:[%s1947 + $0x3c] sm:$0xf]
        %v1959 = vld [vmem:[%s1947 + $0x40] sm:$0xf]
        %v1960 = vld [vmem:[%s1947 + $0x48] sm:$0xf]
        %v1961 = vld [vmem:[%s1947 + $0x4c] sm:$0xf]
        %v1962 = vld [vmem:[%s1947 + $0x54] sm:$0xf]
        %v1963 = vld [vmem:[%s1947 + $0x58] sm:$0xf]
        %1964 = vst.msk [vmem:[#allocation3 + $0x18] sm:$0xf] %vm691, %v1948
        %1965 = vst.msk [vmem:[#allocation3 + $0x3c] sm:$0xf] %vm691, %v1949
        %1966 = vst.msk [vmem:[#allocation3 + $0x60] sm:$0xf] %vm691, %v1950
        %1967 = vst.msk [vmem:[#allocation3 + $0x84] sm:$0xf] %vm691, %v1951
        %1968 = vst.msk [vmem:[#allocation3 + $0xa8] sm:$0xf] %vm691, %v1952
        %1969 = vst.msk [vmem:[#allocation3 + $0xcc] sm:$0xf] %vm691, %v1953
        %1970 = vst.msk [vmem:[#allocation3 + $0xf0] sm:$0xf] %vm691, %v1954
        %1971 = vst.msk [vmem:[#allocation3 + $0x114] sm:$0xf] %vm691, %v1955
        %1972 = vst.msk [vmem:[#allocation3 + $0x138] sm:$0xf] %vm691, %v1956
        %1973 = vst.msk [vmem:[#allocation3 + $0x15c] sm:$0xf] %vm691, %v1957
        %1974 = vst.msk [vmem:[#allocation3 + $0x180] sm:$0xf] %vm691, %v1958
        %1975 = vst.msk [vmem:[#allocation3 + $0x1a4] sm:$0xf] %vm691, %v1959
        %1976 = vst.msk [vmem:[#allocation3 + $0x1c8] sm:$0xf] %vm691, %v1960
        %1977 = vst.msk [vmem:[#allocation3 + $0x1ec] sm:$0xf] %vm691, %v1961
        %1978 = vst.msk [vmem:[#allocation3 + $0x210] sm:$0xf] %vm691, %v1962
        %1979 = vst.msk [vmem:[#allocation3 + $0x234] sm:$0xf] %vm691, %v1963
        %1980 = vst.msk [vmem:[#allocation3 + $0x18] sm:$0xf] %vm1044, 0
        %1981 = vst.msk [vmem:[#allocation3 + $0x3c] sm:$0xf] %vm1044, 0
        %1982 = vst.msk [vmem:[#allocation3 + $0x60] sm:$0xf] %vm1044, 0
        %1983 = vst.msk [vmem:[#allocation3 + $0x84] sm:$0xf] %vm1044, 0
        %1984 = vst.msk [vmem:[#allocation3 + $0xa8] sm:$0xf] %vm1044, 0
        %1985 = vst.msk [vmem:[#allocation3 + $0xcc] sm:$0xf] %vm1044, 0
        %1986 = vst.msk [vmem:[#allocation3 + $0xf0] sm:$0xf] %vm1044, 0
        %1987 = vst.msk [vmem:[#allocation3 + $0x114] sm:$0xf] %vm1044, 0
        %1988 = vst.msk [vmem:[#allocation3 + $0x138] sm:$0xf] %vm1044, 0
        %1989 = vst.msk [vmem:[#allocation3 + $0x15c] sm:$0xf] %vm1044, 0
        %1990 = vst.msk [vmem:[#allocation3 + $0x180] sm:$0xf] %vm1044, 0
        %1991 = vst.msk [vmem:[#allocation3 + $0x1a4] sm:$0xf] %vm1044, 0
        %1992 = vst.msk [vmem:[#allocation3 + $0x1c8] sm:$0xf] %vm1044, 0
        %1993 = vst.msk [vmem:[#allocation3 + $0x1ec] sm:$0xf] %vm1044, 0
        %1994 = vst.msk [vmem:[#allocation3 + $0x210] sm:$0xf] %vm1044, 0
        %1995 = vst.msk [vmem:[#allocation3 + $0x234] sm:$0xf] %vm1044, 0
        %v1996 = vld [vmem:[%s1947] sm:$0xf]
        %v1997 = vld [vmem:[%s1947 + $0x4] sm:$0xf]
        %v1998 = vld [vmem:[%s1947 + $0x8] sm:$0x1]
        %v1999 = vld [vmem:[%s1947 + $0xc] sm:$0xf]
        %v2000 = vld [vmem:[%s1947 + $0x10] sm:$0xf]
        %v2001 = vld [vmem:[%s1947 + $0x14] sm:$0x1]
        %v2002 = vld [vmem:[%s1947 + $0x18] sm:$0xf]
        %v2003 = vld [vmem:[%s1947 + $0x1c] sm:$0xf]
        %v2004 = vld [vmem:[%s1947 + $0x20] sm:$0x1]
        %v2005 = vld [vmem:[%s1947 + $0x24] sm:$0xf]
        %v2006 = vld [vmem:[%s1947 + $0x28] sm:$0xf]
        %v2007 = vld [vmem:[%s1947 + $0x2c] sm:$0x1]
        %v2008 = vld [vmem:[%s1947 + $0x30] sm:$0xf]
        %v2009 = vld [vmem:[%s1947 + $0x34] sm:$0xf]
        %v2010 = vld [vmem:[%s1947 + $0x38] sm:$0x1]
        %v2011 = vld [vmem:[%s1947 + $0x3c] sm:$0xf]
        %v2012 = vld [vmem:[%s1947 + $0x40] sm:$0xf]
        %v2013 = vld [vmem:[%s1947 + $0x44] sm:$0x1]
        %v2014 = vld [vmem:[%s1947 + $0x48] sm:$0xf]
        %v2015 = vld [vmem:[%s1947 + $0x4c] sm:$0xf]
        %v2016 = vld [vmem:[%s1947 + $0x50] sm:$0x1]
        %v2017 = vld [vmem:[%s1947 + $0x54] sm:$0xf]
        %v2018 = vld [vmem:[%s1947 + $0x58] sm:$0xf]
        %v2019 = vld [vmem:[%s1947 + $0x5c] sm:$0x1]
        %v2021 = vshrl.u32 %v1996, 16
        %v2023 = vrot.slane %v2021, 4
        %v2024 = vshll.u32 %v1996, 16
        %v2026 = vrot.slane %v2024, 5
        %v2027 = vor.u32 %v2023, %v2026
        %v2028 = vrot.slane %v2027, 4
        %v2030 = vshll.u32 %v1997, 16
        %v2032 = vrot.slane %v2030, 5
        %v2033 = vsel %vm1087, %v2028, %v2032
        %v2034 = vshrl.u32 %v1997, 16
        %v2036 = vrot.slane %v2034, 4
        %v2037 = vor.u32 %v2036, %v2032
        %v2038 = vrot.slane %v2037, 4
        %v2040 = vshll.u32 %v1998, 16
        %v2042 = vrot.slane %v2040, 5
        %v2043 = vsel %vm1087, %v2038, %v2042
        %v2045 = vshrl.u32 %v1999, 16
        %v2047 = vrot.slane %v2045, 4
        %v2048 = vshll.u32 %v1999, 16
        %v2050 = vrot.slane %v2048, 5
        %v2051 = vor.u32 %v2047, %v2050
        %v2052 = vrot.slane %v2051, 4
        %v2054 = vshll.u32 %v2000, 16
        %v2056 = vrot.slane %v2054, 5
        %v2057 = vsel %vm1087, %v2052, %v2056
        %v2058 = vshrl.u32 %v2000, 16
        %v2060 = vrot.slane %v2058, 4
        %v2061 = vor.u32 %v2060, %v2056
        %v2062 = vrot.slane %v2061, 4
        %v2064 = vshll.u32 %v2001, 16
        %v2066 = vrot.slane %v2064, 5
        %v2067 = vsel %vm1087, %v2062, %v2066
        %v2069 = vshrl.u32 %v2002, 16
        %v2071 = vrot.slane %v2069, 4
        %v2072 = vshll.u32 %v2002, 16
        %v2074 = vrot.slane %v2072, 5
        %v2075 = vor.u32 %v2071, %v2074
        %v2076 = vrot.slane %v2075, 4
        %v2078 = vshll.u32 %v2003, 16
        %v2080 = vrot.slane %v2078, 5
        %v2081 = vsel %vm1087, %v2076, %v2080
        %v2082 = vshrl.u32 %v2003, 16
        %v2084 = vrot.slane %v2082, 4
        %v2085 = vor.u32 %v2084, %v2080
        %v2086 = vrot.slane %v2085, 4
        %v2088 = vshll.u32 %v2004, 16
        %v2090 = vrot.slane %v2088, 5
        %v2091 = vsel %vm1087, %v2086, %v2090
        %v2093 = vshrl.u32 %v2005, 16
        %v2095 = vrot.slane %v2093, 4
        %v2096 = vshll.u32 %v2005, 16
        %v2098 = vrot.slane %v2096, 5
        %v2099 = vor.u32 %v2095, %v2098
        %v2100 = vrot.slane %v2099, 4
        %v2102 = vshll.u32 %v2006, 16
        %v2104 = vrot.slane %v2102, 5
        %v2105 = vsel %vm1087, %v2100, %v2104
        %v2106 = vshrl.u32 %v2006, 16
        %v2108 = vrot.slane %v2106, 4
        %v2109 = vor.u32 %v2108, %v2104
        %v2110 = vrot.slane %v2109, 4
        %v2112 = vshll.u32 %v2007, 16
        %v2114 = vrot.slane %v2112, 5
        %v2115 = vsel %vm1087, %v2110, %v2114
        %v2117 = vshrl.u32 %v2008, 16
        %v2119 = vrot.slane %v2117, 4
        %v2120 = vshll.u32 %v2008, 16
        %v2122 = vrot.slane %v2120, 5
        %v2123 = vor.u32 %v2119, %v2122
        %v2124 = vrot.slane %v2123, 4
        %v2126 = vshll.u32 %v2009, 16
        %v2128 = vrot.slane %v2126, 5
        %v2129 = vsel %vm1087, %v2124, %v2128
        %v2130 = vshrl.u32 %v2009, 16
        %v2132 = vrot.slane %v2130, 4
        %v2133 = vor.u32 %v2132, %v2128
        %v2134 = vrot.slane %v2133, 4
        %v2136 = vshll.u32 %v2010, 16
        %v2138 = vrot.slane %v2136, 5
        %v2139 = vsel %vm1087, %v2134, %v2138
        %v2141 = vshrl.u32 %v2011, 16
        %v2143 = vrot.slane %v2141, 4
        %v2144 = vshll.u32 %v2011, 16
        %v2146 = vrot.slane %v2144, 5
        %v2147 = vor.u32 %v2143, %v2146
        %v2148 = vrot.slane %v2147, 4
        %v2150 = vshll.u32 %v2012, 16
        %v2152 = vrot.slane %v2150, 5
        %v2153 = vsel %vm1087, %v2148, %v2152
        %v2154 = vshrl.u32 %v2012, 16
        %v2156 = vrot.slane %v2154, 4
        %v2157 = vor.u32 %v2156, %v2152
        %v2158 = vrot.slane %v2157, 4
        %v2160 = vshll.u32 %v2013, 16
        %v2162 = vrot.slane %v2160, 5
        %v2163 = vsel %vm1087, %v2158, %v2162
        %v2165 = vshrl.u32 %v2014, 16
        %v2167 = vrot.slane %v2165, 4
        %v2168 = vshll.u32 %v2014, 16
        %v2170 = vrot.slane %v2168, 5
        %v2171 = vor.u32 %v2167, %v2170
        %v2172 = vrot.slane %v2171, 4
        %v2174 = vshll.u32 %v2015, 16
        %v2176 = vrot.slane %v2174, 5
        %v2177 = vsel %vm1087, %v2172, %v2176
        %v2178 = vshrl.u32 %v2015, 16
        %v2180 = vrot.slane %v2178, 4
        %v2181 = vor.u32 %v2180, %v2176
        %v2182 = vrot.slane %v2181, 4
        %v2184 = vshll.u32 %v2016, 16
        %v2186 = vrot.slane %v2184, 5
        %v2187 = vsel %vm1087, %v2182, %v2186
        %v2189 = vshrl.u32 %v2017, 16
        %v2191 = vrot.slane %v2189, 4
        %v2192 = vshll.u32 %v2017, 16
        %v2194 = vrot.slane %v2192, 5
        %v2195 = vor.u32 %v2191, %v2194
        %v2196 = vrot.slane %v2195, 4
        %v2198 = vshll.u32 %v2018, 16
        %v2200 = vrot.slane %v2198, 5
        %v2201 = vsel %vm1087, %v2196, %v2200
        %v2202 = vshrl.u32 %v2018, 16
        %v2204 = vrot.slane %v2202, 4
        %v2205 = vor.u32 %v2204, %v2200
        %v2206 = vrot.slane %v2205, 4
        %v2208 = vshll.u32 %v2019, 16
        %v2210 = vrot.slane %v2208, 5
        %v2211 = vsel %vm1087, %v2206, %v2210
        %2228 = vst.msk [vmem:[#allocation3 + $0x1c] sm:$0xf] %vm691, %v2033
        %2229 = vst.msk [vmem:[#allocation3 + $0x40] sm:$0xf] %vm691, %v2043
        %2230 = vst.msk [vmem:[#allocation3 + $0x64] sm:$0xf] %vm691, %v2057
        %2231 = vst.msk [vmem:[#allocation3 + $0x88] sm:$0xf] %vm691, %v2067
        %2232 = vst.msk [vmem:[#allocation3 + $0xac] sm:$0xf] %vm691, %v2081
        %2233 = vst.msk [vmem:[#allocation3 + $0xd0] sm:$0xf] %vm691, %v2091
        %2234 = vst.msk [vmem:[#allocation3 + $0xf4] sm:$0xf] %vm691, %v2105
        %2235 = vst.msk [vmem:[#allocation3 + $0x118] sm:$0xf] %vm691, %v2115
        %2236 = vst.msk [vmem:[#allocation3 + $0x13c] sm:$0xf] %vm691, %v2129
        %2237 = vst.msk [vmem:[#allocation3 + $0x160] sm:$0xf] %vm691, %v2139
        %2238 = vst.msk [vmem:[#allocation3 + $0x184] sm:$0xf] %vm691, %v2153
        %2239 = vst.msk [vmem:[#allocation3 + $0x1a8] sm:$0xf] %vm691, %v2163
        %2240 = vst.msk [vmem:[#allocation3 + $0x1cc] sm:$0xf] %vm691, %v2177
        %2241 = vst.msk [vmem:[#allocation3 + $0x1f0] sm:$0xf] %vm691, %v2187
        %2242 = vst.msk [vmem:[#allocation3 + $0x214] sm:$0xf] %vm691, %v2201
        %2243 = vst.msk [vmem:[#allocation3 + $0x238] sm:$0xf] %vm691, %v2211
        %2244 = vst.msk [vmem:[#allocation3 + $0x1c] sm:$0xf] %vm1044, 0
        %2245 = vst.msk [vmem:[#allocation3 + $0x40] sm:$0xf] %vm1044, 0
        %2246 = vst.msk [vmem:[#allocation3 + $0x64] sm:$0xf] %vm1044, 0
        %2247 = vst.msk [vmem:[#allocation3 + $0x88] sm:$0xf] %vm1044, 0
        %2248 = vst.msk [vmem:[#allocation3 + $0xac] sm:$0xf] %vm1044, 0
        %2249 = vst.msk [vmem:[#allocation3 + $0xd0] sm:$0xf] %vm1044, 0
        %2250 = vst.msk [vmem:[#allocation3 + $0xf4] sm:$0xf] %vm1044, 0
        %2251 = vst.msk [vmem:[#allocation3 + $0x118] sm:$0xf] %vm1044, 0
        %2252 = vst.msk [vmem:[#allocation3 + $0x13c] sm:$0xf] %vm1044, 0
        %2253 = vst.msk [vmem:[#allocation3 + $0x160] sm:$0xf] %vm1044, 0
        %2254 = vst.msk [vmem:[#allocation3 + $0x184] sm:$0xf] %vm1044, 0
        %2255 = vst.msk [vmem:[#allocation3 + $0x1a8] sm:$0xf] %vm1044, 0
        %2256 = vst.msk [vmem:[#allocation3 + $0x1cc] sm:$0xf] %vm1044, 0
        %2257 = vst.msk [vmem:[#allocation3 + $0x1f0] sm:$0xf] %vm1044, 0
        %2258 = vst.msk [vmem:[#allocation3 + $0x214] sm:$0xf] %vm1044, 0
        %2259 = vst.msk [vmem:[#allocation3 + $0x238] sm:$0xf] %vm1044, 0
        %v2260 = vld [vmem:[%s1947] sm:$0xe]
        %v2261 = vld [vmem:[%s1947 + $0x4] sm:$0xf]
        %v2262 = vld [vmem:[%s1947 + $0x8] sm:$0x1]
        %v2263 = vld [vmem:[%s1947 + $0xc] sm:$0xe]
        %v2264 = vld [vmem:[%s1947 + $0x10] sm:$0xf]
        %v2265 = vld [vmem:[%s1947 + $0x14] sm:$0x1]
        %v2266 = vld [vmem:[%s1947 + $0x18] sm:$0xe]
        %v2267 = vld [vmem:[%s1947 + $0x1c] sm:$0xf]
        %v2268 = vld [vmem:[%s1947 + $0x20] sm:$0x1]
        %v2269 = vld [vmem:[%s1947 + $0x24] sm:$0xe]
        %v2270 = vld [vmem:[%s1947 + $0x28] sm:$0xf]
        %v2271 = vld [vmem:[%s1947 + $0x2c] sm:$0x1]
        %v2272 = vld [vmem:[%s1947 + $0x30] sm:$0xe]
        %v2273 = vld [vmem:[%s1947 + $0x34] sm:$0xf]
        %v2274 = vld [vmem:[%s1947 + $0x38] sm:$0x1]
        %v2275 = vld [vmem:[%s1947 + $0x3c] sm:$0xe]
        %v2276 = vld [vmem:[%s1947 + $0x40] sm:$0xf]
        %v2277 = vld [vmem:[%s1947 + $0x44] sm:$0x1]
        %v2278 = vld [vmem:[%s1947 + $0x48] sm:$0xe]
        %v2279 = vld [vmem:[%s1947 + $0x4c] sm:$0xf]
        %v2280 = vld [vmem:[%s1947 + $0x50] sm:$0x1]
        %v2281 = vld [vmem:[%s1947 + $0x54] sm:$0xe]
        %v2282 = vld [vmem:[%s1947 + $0x58] sm:$0xf]
        %v2283 = vld [vmem:[%s1947 + $0x5c] sm:$0x1]
        %v2308 = vrot.slane %v2260, 5
        %v2309 = vrot.slane %v2308, 4
        %v2310 = vrot.slane %v2261, 5
        %v2311 = vsel %vm1378, %v2309, %v2310
        %v2312 = vrot.slane %v2310, 4
        %v2313 = vrot.slane %v2262, 5
        %v2314 = vsel %vm1378, %v2312, %v2313
        %v2315 = vrot.slane %v2263, 5
        %v2316 = vrot.slane %v2315, 4
        %v2317 = vrot.slane %v2264, 5
        %v2318 = vsel %vm1378, %v2316, %v2317
        %v2319 = vrot.slane %v2317, 4
        %v2320 = vrot.slane %v2265, 5
        %v2321 = vsel %vm1378, %v2319, %v2320
        %v2322 = vrot.slane %v2266, 5
        %v2323 = vrot.slane %v2322, 4
        %v2324 = vrot.slane %v2267, 5
        %v2325 = vsel %vm1378, %v2323, %v2324
        %v2326 = vrot.slane %v2324, 4
        %v2327 = vrot.slane %v2268, 5
        %v2328 = vsel %vm1378, %v2326, %v2327
        %v2329 = vrot.slane %v2269, 5
        %v2330 = vrot.slane %v2329, 4
        %v2331 = vrot.slane %v2270, 5
        %v2332 = vsel %vm1378, %v2330, %v2331
        %v2333 = vrot.slane %v2331, 4
        %v2334 = vrot.slane %v2271, 5
        %v2335 = vsel %vm1378, %v2333, %v2334
        %v2336 = vrot.slane %v2272, 5
        %v2337 = vrot.slane %v2336, 4
        %v2338 = vrot.slane %v2273, 5
        %v2339 = vsel %vm1378, %v2337, %v2338
        %v2340 = vrot.slane %v2338, 4
        %v2341 = vrot.slane %v2274, 5
        %v2342 = vsel %vm1378, %v2340, %v2341
        %v2343 = vrot.slane %v2275, 5
        %v2344 = vrot.slane %v2343, 4
        %v2345 = vrot.slane %v2276, 5
        %v2346 = vsel %vm1378, %v2344, %v2345
        %v2347 = vrot.slane %v2345, 4
        %v2348 = vrot.slane %v2277, 5
        %v2349 = vsel %vm1378, %v2347, %v2348
        %v2350 = vrot.slane %v2278, 5
        %v2351 = vrot.slane %v2350, 4
        %v2352 = vrot.slane %v2279, 5
        %v2353 = vsel %vm1378, %v2351, %v2352
        %v2354 = vrot.slane %v2352, 4
        %v2355 = vrot.slane %v2280, 5
        %v2356 = vsel %vm1378, %v2354, %v2355
        %v2357 = vrot.slane %v2281, 5
        %v2358 = vrot.slane %v2357, 4
        %v2359 = vrot.slane %v2282, 5
        %v2360 = vsel %vm1378, %v2358, %v2359
        %v2361 = vrot.slane %v2359, 4
        %v2362 = vrot.slane %v2283, 5
        %v2363 = vsel %vm1378, %v2361, %v2362
        %2380 = vst.msk [vmem:[#allocation3 + $0x20] sm:$0xf] %vm691, %v2311
        %2381 = vst.msk [vmem:[#allocation3 + $0x44] sm:$0xf] %vm691, %v2314
        %2382 = vst.msk [vmem:[#allocation3 + $0x68] sm:$0xf] %vm691, %v2318
        %2383 = vst.msk [vmem:[#allocation3 + $0x8c] sm:$0xf] %vm691, %v2321
        %2384 = vst.msk [vmem:[#allocation3 + $0xb0] sm:$0xf] %vm691, %v2325
        %2385 = vst.msk [vmem:[#allocation3 + $0xd4] sm:$0xf] %vm691, %v2328
        %2386 = vst.msk [vmem:[#allocation3 + $0xf8] sm:$0xf] %vm691, %v2332
        %2387 = vst.msk [vmem:[#allocation3 + $0x11c] sm:$0xf] %vm691, %v2335
        %2388 = vst.msk [vmem:[#allocation3 + $0x140] sm:$0xf] %vm691, %v2339
        %2389 = vst.msk [vmem:[#allocation3 + $0x164] sm:$0xf] %vm691, %v2342
        %2390 = vst.msk [vmem:[#allocation3 + $0x188] sm:$0xf] %vm691, %v2346
        %2391 = vst.msk [vmem:[#allocation3 + $0x1ac] sm:$0xf] %vm691, %v2349
        %2392 = vst.msk [vmem:[#allocation3 + $0x1d0] sm:$0xf] %vm691, %v2353
        %2393 = vst.msk [vmem:[#allocation3 + $0x1f4] sm:$0xf] %vm691, %v2356
        %2394 = vst.msk [vmem:[#allocation3 + $0x218] sm:$0xf] %vm691, %v2360
        %2395 = vst.msk [vmem:[#allocation3 + $0x23c] sm:$0xf] %vm691, %v2363
        %2396 = vst.msk [vmem:[#allocation3 + $0x20] sm:$0xf] %vm1044, 0
        %2397 = vst.msk [vmem:[#allocation3 + $0x44] sm:$0xf] %vm1044, 0
        %2398 = vst.msk [vmem:[#allocation3 + $0x68] sm:$0xf] %vm1044, 0
        %2399 = vst.msk [vmem:[#allocation3 + $0x8c] sm:$0xf] %vm1044, 0
        %2400 = vst.msk [vmem:[#allocation3 + $0xb0] sm:$0xf] %vm1044, 0
        %2401 = vst.msk [vmem:[#allocation3 + $0xd4] sm:$0xf] %vm1044, 0
        %2402 = vst.msk [vmem:[#allocation3 + $0xf8] sm:$0xf] %vm1044, 0
        %2403 = vst.msk [vmem:[#allocation3 + $0x11c] sm:$0xf] %vm1044, 0
        %2404 = vst.msk [vmem:[#allocation3 + $0x140] sm:$0xf] %vm1044, 0
        %2405 = vst.msk [vmem:[#allocation3 + $0x164] sm:$0xf] %vm1044, 0
        %2406 = vst.msk [vmem:[#allocation3 + $0x188] sm:$0xf] %vm1044, 0
        %2407 = vst.msk [vmem:[#allocation3 + $0x1ac] sm:$0xf] %vm1044, 0
        %2408 = vst.msk [vmem:[#allocation3 + $0x1d0] sm:$0xf] %vm1044, 0
        %2409 = vst.msk [vmem:[#allocation3 + $0x1f4] sm:$0xf] %vm1044, 0
        %2410 = vst.msk [vmem:[#allocation3 + $0x218] sm:$0xf] %vm1044, 0
        %2411 = vst.msk [vmem:[#allocation3 + $0x23c] sm:$0xf] %vm1044, 0
        %v2412 = vld [vmem:[#allocation3] sm:$0xff]
        %v2413 = vld [vmem:[#allocation3 + $0x8] sm:$0xff]
        %v2414 = vld [vmem:[#allocation3 + $0x10] sm:$0xff]
        %v2415 = vld [vmem:[#allocation3 + $0x18] sm:$0xff]
        %v2416 = vld [vmem:[#allocation3 + $0x20] sm:$0xf]
        %v2417 = vld [vmem:[#allocation3 + $0x24] sm:$0xff]
        %v2418 = vld [vmem:[#allocation3 + $0x2c] sm:$0xff]
        %v2419 = vld [vmem:[#allocation3 + $0x34] sm:$0xff]
        %v2420 = vld [vmem:[#allocation3 + $0x3c] sm:$0xff]
        %v2421 = vld [vmem:[#allocation3 + $0x44] sm:$0xf]
        %v2422 = vld [vmem:[#allocation3 + $0x48] sm:$0xff]
        %v2423 = vld [vmem:[#allocation3 + $0x50] sm:$0xff]
        %v2424 = vld [vmem:[#allocation3 + $0x58] sm:$0xff]
        %v2425 = vld [vmem:[#allocation3 + $0x60] sm:$0xff]
        %v2426 = vld [vmem:[#allocation3 + $0x68] sm:$0xf]
        %v2427 = vld [vmem:[#allocation3 + $0x6c] sm:$0xff]
        %v2428 = vld [vmem:[#allocation3 + $0x74] sm:$0xff]
        %v2429 = vld [vmem:[#allocation3 + $0x7c] sm:$0xff]
        %v2430 = vld [vmem:[#allocation3 + $0x84] sm:$0xff]
        %v2431 = vld [vmem:[#allocation3 + $0x8c] sm:$0xf]
        %v2432 = vld [vmem:[#allocation3 + $0x90] sm:$0xff]
        %v2433 = vld [vmem:[#allocation3 + $0x98] sm:$0xff]
        %v2434 = vld [vmem:[#allocation3 + $0xa0] sm:$0xff]
        %v2435 = vld [vmem:[#allocation3 + $0xa8] sm:$0xff]
        %v2436 = vld [vmem:[#allocation3 + $0xb0] sm:$0xf]
        %v2437 = vld [vmem:[#allocation3 + $0xb4] sm:$0xff]
        %v2438 = vld [vmem:[#allocation3 + $0xbc] sm:$0xff]
        %v2439 = vld [vmem:[#allocation3 + $0xc4] sm:$0xff]
        %v2440 = vld [vmem:[#allocation3 + $0xcc] sm:$0xff]
        %v2441 = vld [vmem:[#allocation3 + $0xd4] sm:$0xf]
        %v2442 = vld [vmem:[#allocation3 + $0xd8] sm:$0xff]
        %v2443 = vld [vmem:[#allocation3 + $0xe0] sm:$0xff]
        %v2444 = vld [vmem:[#allocation3 + $0xe8] sm:$0xff]
        %v2445 = vld [vmem:[#allocation3 + $0xf0] sm:$0xff]
        %v2446 = vld [vmem:[#allocation3 + $0xf8] sm:$0xf]
        %v2447 = vld [vmem:[#allocation3 + $0xfc] sm:$0xff]
        %v2448 = vld [vmem:[#allocation3 + $0x104] sm:$0xff]
        %v2449 = vld [vmem:[#allocation3 + $0x10c] sm:$0xff]
        %v2450 = vld [vmem:[#allocation3 + $0x114] sm:$0xff]
        %v2451 = vld [vmem:[#allocation3 + $0x11c] sm:$0xf]
        %v2452 = vld [vmem:[#allocation3 + $0x120] sm:$0xff]
        %v2453 = vld [vmem:[#allocation3 + $0x128] sm:$0xff]
        %v2454 = vld [vmem:[#allocation3 + $0x130] sm:$0xff]
        %v2455 = vld [vmem:[#allocation3 + $0x138] sm:$0xff]
        %v2456 = vld [vmem:[#allocation3 + $0x140] sm:$0xf]
        %v2457 = vld [vmem:[#allocation3 + $0x144] sm:$0xff]
        %v2458 = vld [vmem:[#allocation3 + $0x14c] sm:$0xff]
        %v2459 = vld [vmem:[#allocation3 + $0x154] sm:$0xff]
        %v2460 = vld [vmem:[#allocation3 + $0x15c] sm:$0xff]
        %v2461 = vld [vmem:[#allocation3 + $0x164] sm:$0xf]
        %v2462 = vld [vmem:[#allocation3 + $0x168] sm:$0xff]
        %v2463 = vld [vmem:[#allocation3 + $0x170] sm:$0xff]
        %v2464 = vld [vmem:[#allocation3 + $0x178] sm:$0xff]
        %v2465 = vld [vmem:[#allocation3 + $0x180] sm:$0xff]
        %v2466 = vld [vmem:[#allocation3 + $0x188] sm:$0xf]
        %v2467 = vld [vmem:[#allocation3 + $0x18c] sm:$0xff]
        %v2468 = vld [vmem:[#allocation3 + $0x194] sm:$0xff]
        %v2469 = vld [vmem:[#allocation3 + $0x19c] sm:$0xff]
        %v2470 = vld [vmem:[#allocation3 + $0x1a4] sm:$0xff]
        %v2471 = vld [vmem:[#allocation3 + $0x1ac] sm:$0xf]
        %v2472 = vld [vmem:[#allocation3 + $0x1b0] sm:$0xff]
        %v2473 = vld [vmem:[#allocation3 + $0x1b8] sm:$0xff]
        %v2474 = vld [vmem:[#allocation3 + $0x1c0] sm:$0xff]
        %v2475 = vld [vmem:[#allocation3 + $0x1c8] sm:$0xff]
        %v2476 = vld [vmem:[#allocation3 + $0x1d0] sm:$0xf]
        %v2477 = vld [vmem:[#allocation3 + $0x1d4] sm:$0xff]
        %v2478 = vld [vmem:[#allocation3 + $0x1dc] sm:$0xff]
        %v2479 = vld [vmem:[#allocation3 + $0x1e4] sm:$0xff]
        %v2480 = vld [vmem:[#allocation3 + $0x1ec] sm:$0xff]
        %v2481 = vld [vmem:[#allocation3 + $0x1f4] sm:$0xf]
        %v2482 = vld [vmem:[#allocation3 + $0x1f8] sm:$0xff]
        %v2483 = vld [vmem:[#allocation3 + $0x200] sm:$0xff]
        %v2484 = vld [vmem:[#allocation3 + $0x208] sm:$0xff]
        %v2485 = vld [vmem:[#allocation3 + $0x210] sm:$0xff]
        %v2486 = vld [vmem:[#allocation3 + $0x218] sm:$0xf]
        %v2487 = vld [vmem:[#allocation3 + $0x21c] sm:$0xff]
        %v2488 = vld [vmem:[#allocation3 + $0x224] sm:$0xff]
        %v2489 = vld [vmem:[#allocation3 + $0x22c] sm:$0xff]
        %v2490 = vld [vmem:[#allocation3 + $0x234] sm:$0xff]
        %v2491 = vld [vmem:[#allocation3 + $0x23c] sm:$0xf]
        %v2492 = vld [vmem:[%s3] sm:$0xf]
        %v2493 = vld [vmem:[%s3 + $0x4] sm:$0xf]
        %v2494 = vld [vmem:[%s3 + $0x8] sm:$0xf]
        %v2495 = vld [vmem:[%s3 + $0xc] sm:$0xf]
        %v2496 = vld [vmem:[%s3 + $0x10] sm:$0xf]
        %v2497 = vld [vmem:[%s3 + $0x14] sm:$0xf]
        %v2498 = vld [vmem:[%s3 + $0x18] sm:$0xf]
        %v2499 = vld [vmem:[%s3 + $0x1c] sm:$0xf]
        %v2500 = vld [vmem:[%s3 + $0x20] sm:$0xf]
        %v2501 = vld [vmem:[%s3 + $0x24] sm:$0xf]
        %v2502 = vld [vmem:[%s3 + $0x28] sm:$0xf]
        %v2503 = vld [vmem:[%s3 + $0x2c] sm:$0xf]
        %v2504 = vld [vmem:[%s3 + $0x30] sm:$0xf]
        %v2505 = vld [vmem:[%s3 + $0x34] sm:$0xf]
        %v2506 = vld [vmem:[%s3 + $0x38] sm:$0xf]
        %v2507 = vld [vmem:[%s3 + $0x3c] sm:$0xf]
        %v2508 = vld [vmem:[%s3 + $0x40] sm:$0xf]
        %v2509 = vld [vmem:[%s3 + $0x44] sm:$0xf]
        %v2510 = vld [vmem:[%s3 + $0x48] sm:$0xf]
        %v2511 = vld [vmem:[%s3 + $0x4c] sm:$0xf]
        %v2512 = vld [vmem:[%s3 + $0x50] sm:$0xf]
        %v2513 = vld [vmem:[%s3 + $0x54] sm:$0xf]
        %v2514 = vld [vmem:[%s3 + $0x58] sm:$0xf]
        %v2515 = vld [vmem:[%s3 + $0x5c] sm:$0xf]
        %v2516 = vld [vmem:[%s3 + $0x60] sm:$0xf]
        %v2517 = vld [vmem:[%s3 + $0x64] sm:$0xf]
        %v2518 = vld [vmem:[%s3 + $0x68] sm:$0xf]
        %v2519 = vld [vmem:[%s3 + $0x6c] sm:$0xf]
        %v2520 = vld [vmem:[%s3 + $0x70] sm:$0xf]
        %v2521 = vld [vmem:[%s3 + $0x74] sm:$0xf]
        %v2522 = vld [vmem:[%s3 + $0x78] sm:$0xf]
        %v2523 = vld [vmem:[%s3 + $0x7c] sm:$0xf]
        %v2524 = vld [vmem:[%s3 + $0x80] sm:$0xf]
        %v2525 = vld [vmem:[%s3 + $0x84] sm:$0xf]
        %v2526 = vld [vmem:[%s3 + $0x88] sm:$0xf]
        %v2527 = vld [vmem:[%s3 + $0x8c] sm:$0xf]
        %v2528 = vld [vmem:[%s3 + $0x90] sm:$0xf]
        %v2529 = vld [vmem:[%s3 + $0x94] sm:$0xf]
        %v2530 = vld [vmem:[%s3 + $0x98] sm:$0xf]
        %v2531 = vld [vmem:[%s3 + $0x9c] sm:$0xf]
        %v2532 = vld [vmem:[%s3 + $0xa0] sm:$0xf]
        %v2533 = vld [vmem:[%s3 + $0xa4] sm:$0xf]
        %v2534 = vld [vmem:[%s3 + $0xa8] sm:$0xf]
        %v2535 = vld [vmem:[%s3 + $0xac] sm:$0xf]
        %v2536 = vld [vmem:[%s3 + $0xb0] sm:$0xf]
        %v2537 = vld [vmem:[%s3 + $0xb4] sm:$0xf]
        %v2538 = vld [vmem:[%s3 + $0xb8] sm:$0xf]
        %v2539 = vld [vmem:[%s3 + $0xbc] sm:$0xf]
        %v2540 = vld [vmem:[%s3 + $0xc0] sm:$0xf]
        %v2541 = vld [vmem:[%s3 + $0xc4] sm:$0xf]
        %v2542 = vld [vmem:[%s3 + $0xc8] sm:$0xf]
        %v2543 = vld [vmem:[%s3 + $0xcc] sm:$0xf]
        %v2544 = vld [vmem:[%s3 + $0xd0] sm:$0xf]
        %v2545 = vld [vmem:[%s3 + $0xd4] sm:$0xf]
        %v2546 = vld [vmem:[%s3 + $0xd8] sm:$0xf]
        %v2547 = vld [vmem:[%s3 + $0xdc] sm:$0xf]
        %v2548 = vld [vmem:[%s3 + $0xe0] sm:$0xf]
        %v2549 = vld [vmem:[%s3 + $0xe4] sm:$0xf]
        %v2550 = vld [vmem:[%s3 + $0xe8] sm:$0xf]
        %v2551 = vld [vmem:[%s3 + $0xec] sm:$0xf]
        %v2552 = vld [vmem:[%s3 + $0xf0] sm:$0xf]
        %v2553 = vld [vmem:[%s3 + $0xf4] sm:$0xf]
        %v2554 = vld [vmem:[%s3 + $0xf8] sm:$0xf]
        %v2555 = vld [vmem:[%s3 + $0xfc] sm:$0xf]
        %v2556 = vld [vmem:[%s3 + $0x100] sm:$0xf]
        %v2557 = vld [vmem:[%s3 + $0x104] sm:$0xf]
        %v2558 = vld [vmem:[%s3 + $0x108] sm:$0xf]
        %v2559 = vld [vmem:[%s3 + $0x10c] sm:$0xf]
        %v2560 = vld [vmem:[%s3 + $0x110] sm:$0xf]
        %v2561 = vld [vmem:[%s3 + $0x114] sm:$0xf]
        %v2562 = vld [vmem:[%s3 + $0x118] sm:$0xf]
        %v2563 = vld [vmem:[%s3 + $0x11c] sm:$0xf]
        %v2564 = vld [vmem:[%s3 + $0x120] sm:$0xf]
        %v2565 = vld [vmem:[%s3 + $0x124] sm:$0xf]
        %v2566 = vld [vmem:[%s3 + $0x128] sm:$0xf]
        %v2567 = vld [vmem:[%s3 + $0x12c] sm:$0xf]
        %v2568 = vld [vmem:[%s3 + $0x130] sm:$0xf]
        %v2569 = vld [vmem:[%s3 + $0x134] sm:$0xf]
        %v2570 = vld [vmem:[%s3 + $0x138] sm:$0xf]
        %v2571 = vld [vmem:[%s3 + $0x13c] sm:$0xf]
        %v2572 = vld [vmem:[%s3 + $0x140] sm:$0xf]
        %v2573 = vld [vmem:[%s3 + $0x144] sm:$0xf]
        %v2574 = vld [vmem:[%s3 + $0x148] sm:$0xf]
        %v2575 = vld [vmem:[%s3 + $0x14c] sm:$0xf]
        %v2576 = vld [vmem:[%s3 + $0x150] sm:$0xf]
        %v2577 = vld [vmem:[%s3 + $0x154] sm:$0xf]
        %v2578 = vld [vmem:[%s3 + $0x158] sm:$0xf]
        %v2579 = vld [vmem:[%s3 + $0x15c] sm:$0xf]
        %v2580 = vld [vmem:[%s3 + $0x160] sm:$0xf]
        %v2581 = vld [vmem:[%s3 + $0x164] sm:$0xf]
        %v2582 = vld [vmem:[%s3 + $0x168] sm:$0xf]
        %v2583 = vld [vmem:[%s3 + $0x16c] sm:$0xf]
        %v2584 = vld [vmem:[%s3 + $0x170] sm:$0xf]
        %v2585 = vld [vmem:[%s3 + $0x174] sm:$0xf]
        %v2586 = vld [vmem:[%s3 + $0x178] sm:$0xf]
        %v2587 = vld [vmem:[%s3 + $0x17c] sm:$0xf]
        %v2588 = vld [vmem:[%s3 + $0x180] sm:$0xf]
        %v2589 = vld [vmem:[%s3 + $0x184] sm:$0xf]
        %v2590 = vld [vmem:[%s3 + $0x188] sm:$0xf]
        %v2591 = vld [vmem:[%s3 + $0x18c] sm:$0xf]
        %v2592 = vld [vmem:[%s3 + $0x190] sm:$0xf]
        %v2593 = vld [vmem:[%s3 + $0x194] sm:$0xf]
        %v2594 = vld [vmem:[%s3 + $0x198] sm:$0xf]
        %v2595 = vld [vmem:[%s3 + $0x19c] sm:$0xf]
        %v2596 = vld [vmem:[%s3 + $0x1a0] sm:$0xf]
        %v2597 = vld [vmem:[%s3 + $0x1a4] sm:$0xf]
        %v2598 = vld [vmem:[%s3 + $0x1a8] sm:$0xf]
        %v2599 = vld [vmem:[%s3 + $0x1ac] sm:$0xf]
        %v2600 = vld [vmem:[%s3 + $0x1b0] sm:$0xf]
        %v2601 = vld [vmem:[%s3 + $0x1b4] sm:$0xf]
        %v2602 = vld [vmem:[%s3 + $0x1b8] sm:$0xf]
        %v2603 = vld [vmem:[%s3 + $0x1bc] sm:$0xf]
        %v2604 = vld [vmem:[%s3 + $0x1c0] sm:$0xf]
        %v2605 = vld [vmem:[%s3 + $0x1c4] sm:$0xf]
        %v2606 = vld [vmem:[%s3 + $0x1c8] sm:$0xf]
        %v2607 = vld [vmem:[%s3 + $0x1cc] sm:$0xf]
        %v2608 = vld [vmem:[%s3 + $0x1d0] sm:$0xf]
        %v2609 = vld [vmem:[%s3 + $0x1d4] sm:$0xf]
        %v2610 = vld [vmem:[%s3 + $0x1d8] sm:$0xf]
        %v2611 = vld [vmem:[%s3 + $0x1dc] sm:$0xf]
        %v2612 = vld [vmem:[%s3 + $0x1e0] sm:$0xf]
        %v2613 = vld [vmem:[%s3 + $0x1e4] sm:$0xf]
        %v2614 = vld [vmem:[%s3 + $0x1e8] sm:$0xf]
        %v2615 = vld [vmem:[%s3 + $0x1ec] sm:$0xf]
        %v2616 = vld [vmem:[%s3 + $0x1f0] sm:$0xf]
        %v2617 = vld [vmem:[%s3 + $0x1f4] sm:$0xf]
        %v2618 = vld [vmem:[%s3 + $0x1f8] sm:$0xf]
        %v2619 = vld [vmem:[%s3 + $0x1fc] sm:$0xf]
        %v2620 = vld [vmem:[%s3 + $0x200] sm:$0xf]
        %v2621 = vld [vmem:[%s3 + $0x204] sm:$0xf]
        %v2622 = vld [vmem:[%s3 + $0x208] sm:$0xf]
        %v2623 = vld [vmem:[%s3 + $0x20c] sm:$0xf]
        %v2624 = vld [vmem:[%s3 + $0x210] sm:$0xf]
        %v2625 = vld [vmem:[%s3 + $0x214] sm:$0xf]
        %v2626 = vld [vmem:[%s3 + $0x218] sm:$0xf]
        %v2627 = vld [vmem:[%s3 + $0x21c] sm:$0xf]
        %v2628 = vld [vmem:[%s3 + $0x220] sm:$0xf]
        %v2629 = vld [vmem:[%s3 + $0x224] sm:$0xf]
        %v2630 = vld [vmem:[%s3 + $0x228] sm:$0xf]
        %v2631 = vld [vmem:[%s3 + $0x22c] sm:$0xf]
        %v2632 = vld [vmem:[%s3 + $0x230] sm:$0xf]
        %v2633 = vld [vmem:[%s3 + $0x234] sm:$0xf]
        %v2634 = vld [vmem:[%s3 + $0x238] sm:$0xf]
        %v2635 = vld [vmem:[%s3 + $0x23c] sm:$0xf]
        %v2636 = vld [vmem:[%s4] sm:$0x1]
        %v2638 = vlaneseq
        %v2639 = vshrl.u32 %v2638, 7
        %v2640 = vsub.s32 0, %v2639
        %v2641 = vrot.slane %v2636, %v2640
        %v2723 = vunpack.c.l.b16 %v2412
        %v2724 = vunpack.c.h.b16 %v2412
        %v2725 = vunpack.c.l.b16 %v2413
        %v2726 = vunpack.c.h.b16 %v2413
        %v2727 = vunpack.c.l.b16 %v2414
        %v2728 = vunpack.c.h.b16 %v2414
        %v2729 = vunpack.c.l.b16 %v2415
        %v2730 = vunpack.c.h.b16 %v2415
        %v2731 = vunpack.c.l.b16 %v2416
        %v2732 = vunpack.c.l.b16 %v2417
        %v2733 = vunpack.c.h.b16 %v2417
        %v2734 = vunpack.c.l.b16 %v2418
        %v2735 = vunpack.c.h.b16 %v2418
        %v2736 = vunpack.c.l.b16 %v2419
        %v2737 = vunpack.c.h.b16 %v2419
        %v2738 = vunpack.c.l.b16 %v2420
        %v2739 = vunpack.c.h.b16 %v2420
        %v2740 = vunpack.c.l.b16 %v2421
        %v2741 = vunpack.c.l.b16 %v2422
        %v2742 = vunpack.c.h.b16 %v2422
        %v2743 = vunpack.c.l.b16 %v2423
        %v2744 = vunpack.c.h.b16 %v2423
        %v2745 = vunpack.c.l.b16 %v2424
        %v2746 = vunpack.c.h.b16 %v2424
        %v2747 = vunpack.c.l.b16 %v2425
        %v2748 = vunpack.c.h.b16 %v2425
        %v2749 = vunpack.c.l.b16 %v2426
        %v2750 = vunpack.c.l.b16 %v2427
        %v2751 = vunpack.c.h.b16 %v2427
        %v2752 = vunpack.c.l.b16 %v2428
        %v2753 = vunpack.c.h.b16 %v2428
        %v2754 = vunpack.c.l.b16 %v2429
        %v2755 = vunpack.c.h.b16 %v2429
        %v2756 = vunpack.c.l.b16 %v2430
        %v2757 = vunpack.c.h.b16 %v2430
        %v2758 = vunpack.c.l.b16 %v2431
        %v2759 = vunpack.c.l.b16 %v2432
        %v2760 = vunpack.c.h.b16 %v2432
        %v2761 = vunpack.c.l.b16 %v2433
        %v2762 = vunpack.c.h.b16 %v2433
        %v2763 = vunpack.c.l.b16 %v2434
        %v2764 = vunpack.c.h.b16 %v2434
        %v2765 = vunpack.c.l.b16 %v2435
        %v2766 = vunpack.c.h.b16 %v2435
        %v2767 = vunpack.c.l.b16 %v2436
        %v2768 = vunpack.c.l.b16 %v2437
        %v2769 = vunpack.c.h.b16 %v2437
        %v2770 = vunpack.c.l.b16 %v2438
        %v2771 = vunpack.c.h.b16 %v2438
        %v2772 = vunpack.c.l.b16 %v2439
        %v2773 = vunpack.c.h.b16 %v2439
        %v2774 = vunpack.c.l.b16 %v2440
        %v2775 = vunpack.c.h.b16 %v2440
        %v2776 = vunpack.c.l.b16 %v2441
        %v2777 = vunpack.c.l.b16 %v2442
        %v2778 = vunpack.c.h.b16 %v2442
        %v2779 = vunpack.c.l.b16 %v2443
        %v2780 = vunpack.c.h.b16 %v2443
        %v2781 = vunpack.c.l.b16 %v2444
        %v2782 = vunpack.c.h.b16 %v2444
        %v2783 = vunpack.c.l.b16 %v2445
        %v2784 = vunpack.c.h.b16 %v2445
        %v2785 = vunpack.c.l.b16 %v2446
        %v2786 = vunpack.c.l.b16 %v2447
        %v2787 = vunpack.c.h.b16 %v2447
        %v2788 = vunpack.c.l.b16 %v2448
        %v2789 = vunpack.c.h.b16 %v2448
        %v2790 = vunpack.c.l.b16 %v2449
        %v2791 = vunpack.c.h.b16 %v2449
        %v2792 = vunpack.c.l.b16 %v2450
        %v2793 = vunpack.c.h.b16 %v2450
        %v2794 = vunpack.c.l.b16 %v2451
        %v2795 = vunpack.c.l.b16 %v2452
        %v2796 = vunpack.c.h.b16 %v2452
        %v2797 = vunpack.c.l.b16 %v2453
        %v2798 = vunpack.c.h.b16 %v2453
        %v2799 = vunpack.c.l.b16 %v2454
        %v2800 = vunpack.c.h.b16 %v2454
        %v2801 = vunpack.c.l.b16 %v2455
        %v2802 = vunpack.c.h.b16 %v2455
        %v2803 = vunpack.c.l.b16 %v2456
        %v2804 = vunpack.c.l.b16 %v2457
        %v2805 = vunpack.c.h.b16 %v2457
        %v2806 = vunpack.c.l.b16 %v2458
        %v2807 = vunpack.c.h.b16 %v2458
        %v2808 = vunpack.c.l.b16 %v2459
        %v2809 = vunpack.c.h.b16 %v2459
        %v2810 = vunpack.c.l.b16 %v2460
        %v2811 = vunpack.c.h.b16 %v2460
        %v2812 = vunpack.c.l.b16 %v2461
        %v2813 = vunpack.c.l.b16 %v2462
        %v2814 = vunpack.c.h.b16 %v2462
        %v2815 = vunpack.c.l.b16 %v2463
        %v2816 = vunpack.c.h.b16 %v2463
        %v2817 = vunpack.c.l.b16 %v2464
        %v2818 = vunpack.c.h.b16 %v2464
        %v2819 = vunpack.c.l.b16 %v2465
        %v2820 = vunpack.c.h.b16 %v2465
        %v2821 = vunpack.c.l.b16 %v2466
        %v2822 = vunpack.c.l.b16 %v2467
        %v2823 = vunpack.c.h.b16 %v2467
        %v2824 = vunpack.c.l.b16 %v2468
        %v2825 = vunpack.c.h.b16 %v2468
        %v2826 = vunpack.c.l.b16 %v2469
        %v2827 = vunpack.c.h.b16 %v2469
        %v2828 = vunpack.c.l.b16 %v2470
        %v2829 = vunpack.c.h.b16 %v2470
        %v2830 = vunpack.c.l.b16 %v2471
        %v2831 = vunpack.c.l.b16 %v2472
        %v2832 = vunpack.c.h.b16 %v2472
        %v2833 = vunpack.c.l.b16 %v2473
        %v2834 = vunpack.c.h.b16 %v2473
        %v2835 = vunpack.c.l.b16 %v2474
        %v2836 = vunpack.c.h.b16 %v2474
        %v2837 = vunpack.c.l.b16 %v2475
        %v2838 = vunpack.c.h.b16 %v2475
        %v2839 = vunpack.c.l.b16 %v2476
        %v2840 = vunpack.c.l.b16 %v2477
        %v2841 = vunpack.c.h.b16 %v2477
        %v2842 = vunpack.c.l.b16 %v2478
        %v2843 = vunpack.c.h.b16 %v2478
        %v2844 = vunpack.c.l.b16 %v2479
        %v2845 = vunpack.c.h.b16 %v2479
        %v2846 = vunpack.c.l.b16 %v2480
        %v2847 = vunpack.c.h.b16 %v2480
        %v2848 = vunpack.c.l.b16 %v2481
        %v2849 = vunpack.c.l.b16 %v2482
        %v2850 = vunpack.c.h.b16 %v2482
        %v2851 = vunpack.c.l.b16 %v2483
        %v2852 = vunpack.c.h.b16 %v2483
        %v2853 = vunpack.c.l.b16 %v2484
        %v2854 = vunpack.c.h.b16 %v2484
        %v2855 = vunpack.c.l.b16 %v2485
        %v2856 = vunpack.c.h.b16 %v2485
        %v2857 = vunpack.c.l.b16 %v2486
        %v2858 = vunpack.c.l.b16 %v2487
        %v2859 = vunpack.c.h.b16 %v2487
        %v2860 = vunpack.c.l.b16 %v2488
        %v2861 = vunpack.c.h.b16 %v2488
        %v2862 = vunpack.c.l.b16 %v2489
        %v2863 = vunpack.c.h.b16 %v2489
        %v2864 = vunpack.c.l.b16 %v2490
        %v2865 = vunpack.c.h.b16 %v2490
        %v2866 = vunpack.c.l.b16 %v2491
        %v2867 = vpack.c.b16 %v2732, %v2723
        %v2868 = vpack.c.b16 %v2733, %v2724
        %v2869 = vpack.c.b16 %v2734, %v2725
        %v2870 = vpack.c.b16 %v2735, %v2726
        %v2871 = vpack.c.b16 %v2736, %v2727
        %v2872 = vpack.c.b16 %v2737, %v2728
        %v2873 = vpack.c.b16 %v2738, %v2729
        %v2874 = vpack.c.b16 %v2739, %v2730
        %v2875 = vpack.c.b16 %v2740, %v2731
        %v2876 = vpack.c.b16 %v2750, %v2741
        %v2877 = vpack.c.b16 %v2751, %v2742
        %v2878 = vpack.c.b16 %v2752, %v2743
        %v2879 = vpack.c.b16 %v2753, %v2744
        %v2880 = vpack.c.b16 %v2754, %v2745
        %v2881 = vpack.c.b16 %v2755, %v2746
        %v2882 = vpack.c.b16 %v2756, %v2747
        %v2883 = vpack.c.b16 %v2757, %v2748
        %v2884 = vpack.c.b16 %v2758, %v2749
        %v2885 = vpack.c.b16 %v2768, %v2759
        %v2886 = vpack.c.b16 %v2769, %v2760
        %v2887 = vpack.c.b16 %v2770, %v2761
        %v2888 = vpack.c.b16 %v2771, %v2762
        %v2889 = vpack.c.b16 %v2772, %v2763
        %v2890 = vpack.c.b16 %v2773, %v2764
        %v2891 = vpack.c.b16 %v2774, %v2765
        %v2892 = vpack.c.b16 %v2775, %v2766
        %v2893 = vpack.c.b16 %v2776, %v2767
        %v2894 = vpack.c.b16 %v2786, %v2777
        %v2895 = vpack.c.b16 %v2787, %v2778
        %v2896 = vpack.c.b16 %v2788, %v2779
        %v2897 = vpack.c.b16 %v2789, %v2780
        %v2898 = vpack.c.b16 %v2790, %v2781
        %v2899 = vpack.c.b16 %v2791, %v2782
        %v2900 = vpack.c.b16 %v2792, %v2783
        %v2901 = vpack.c.b16 %v2793, %v2784
        %v2902 = vpack.c.b16 %v2794, %v2785
        %v2903 = vpack.c.b16 %v2804, %v2795
        %v2904 = vpack.c.b16 %v2805, %v2796
        %v2905 = vpack.c.b16 %v2806, %v2797
        %v2906 = vpack.c.b16 %v2807, %v2798
        %v2907 = vpack.c.b16 %v2808, %v2799
        %v2908 = vpack.c.b16 %v2809, %v2800
        %v2909 = vpack.c.b16 %v2810, %v2801
        %v2910 = vpack.c.b16 %v2811, %v2802
        %v2911 = vpack.c.b16 %v2812, %v2803
        %v2912 = vpack.c.b16 %v2822, %v2813
        %v2913 = vpack.c.b16 %v2823, %v2814
        %v2914 = vpack.c.b16 %v2824, %v2815
        %v2915 = vpack.c.b16 %v2825, %v2816
        %v2916 = vpack.c.b16 %v2826, %v2817
        %v2917 = vpack.c.b16 %v2827, %v2818
        %v2918 = vpack.c.b16 %v2828, %v2819
        %v2919 = vpack.c.b16 %v2829, %v2820
        %v2920 = vpack.c.b16 %v2830, %v2821
        %v2921 = vpack.c.b16 %v2840, %v2831
        %v2922 = vpack.c.b16 %v2841, %v2832
        %v2923 = vpack.c.b16 %v2842, %v2833
        %v2924 = vpack.c.b16 %v2843, %v2834
        %v2925 = vpack.c.b16 %v2844, %v2835
        %v2926 = vpack.c.b16 %v2845, %v2836
        %v2927 = vpack.c.b16 %v2846, %v2837
        %v2928 = vpack.c.b16 %v2847, %v2838
        %v2929 = vpack.c.b16 %v2848, %v2839
        %v2930 = vpack.c.b16 %v2858, %v2849
        %v2931 = vpack.c.b16 %v2859, %v2850
        %v2932 = vpack.c.b16 %v2860, %v2851
        %v2933 = vpack.c.b16 %v2861, %v2852
        %v2934 = vpack.c.b16 %v2862, %v2853
        %v2935 = vpack.c.b16 %v2863, %v2854
        %v2936 = vpack.c.b16 %v2864, %v2855
        %v2937 = vpack.c.b16 %v2865, %v2856
        %v2938 = vpack.c.b16 %v2866, %v2857
        %v3155 = vunpack.c.l.b16 %v2492
        %v3156 = vunpack.c.l.b16 %v2493
        %v3157 = vunpack.c.l.b16 %v2494
        %v3158 = vunpack.c.l.b16 %v2495
        %v3159 = vunpack.c.l.b16 %v2496
        %v3160 = vunpack.c.l.b16 %v2497
        %v3161 = vunpack.c.l.b16 %v2498
        %v3162 = vunpack.c.l.b16 %v2499
        %v3163 = vunpack.c.l.b16 %v2500
        %v3164 = vunpack.c.l.b16 %v2501
        %v3165 = vunpack.c.l.b16 %v2502
        %v3166 = vunpack.c.l.b16 %v2503
        %v3167 = vunpack.c.l.b16 %v2504
        %v3168 = vunpack.c.l.b16 %v2505
        %v3169 = vunpack.c.l.b16 %v2506
        %v3170 = vunpack.c.l.b16 %v2507
        %v3171 = vunpack.c.l.b16 %v2508
        %v3172 = vunpack.c.l.b16 %v2509
        %v3173 = vunpack.c.l.b16 %v2510
        %v3174 = vunpack.c.l.b16 %v2511
        %v3175 = vunpack.c.l.b16 %v2512
        %v3176 = vunpack.c.l.b16 %v2513
        %v3177 = vunpack.c.l.b16 %v2514
        %v3178 = vunpack.c.l.b16 %v2515
        %v3179 = vunpack.c.l.b16 %v2516
        %v3180 = vunpack.c.l.b16 %v2517
        %v3181 = vunpack.c.l.b16 %v2518
        %v3182 = vunpack.c.l.b16 %v2519
        %v3183 = vunpack.c.l.b16 %v2520
        %v3184 = vunpack.c.l.b16 %v2521
        %v3185 = vunpack.c.l.b16 %v2522
        %v3186 = vunpack.c.l.b16 %v2523
        %v3187 = vunpack.c.l.b16 %v2524
        %v3188 = vunpack.c.l.b16 %v2525
        %v3189 = vunpack.c.l.b16 %v2526
        %v3190 = vunpack.c.l.b16 %v2527
        %v3191 = vunpack.c.l.b16 %v2528
        %v3192 = vunpack.c.l.b16 %v2529
        %v3193 = vunpack.c.l.b16 %v2530
        %v3194 = vunpack.c.l.b16 %v2531
        %v3195 = vunpack.c.l.b16 %v2532
        %v3196 = vunpack.c.l.b16 %v2533
        %v3197 = vunpack.c.l.b16 %v2534
        %v3198 = vunpack.c.l.b16 %v2535
        %v3199 = vunpack.c.l.b16 %v2536
        %v3200 = vunpack.c.l.b16 %v2537
        %v3201 = vunpack.c.l.b16 %v2538
        %v3202 = vunpack.c.l.b16 %v2539
        %v3203 = vunpack.c.l.b16 %v2540
        %v3204 = vunpack.c.l.b16 %v2541
        %v3205 = vunpack.c.l.b16 %v2542
        %v3206 = vunpack.c.l.b16 %v2543
        %v3207 = vunpack.c.l.b16 %v2544
        %v3208 = vunpack.c.l.b16 %v2545
        %v3209 = vunpack.c.l.b16 %v2546
        %v3210 = vunpack.c.l.b16 %v2547
        %v3211 = vunpack.c.l.b16 %v2548
        %v3212 = vunpack.c.l.b16 %v2549
        %v3213 = vunpack.c.l.b16 %v2550
        %v3214 = vunpack.c.l.b16 %v2551
        %v3215 = vunpack.c.l.b16 %v2552
        %v3216 = vunpack.c.l.b16 %v2553
        %v3217 = vunpack.c.l.b16 %v2554
        %v3218 = vunpack.c.l.b16 %v2555
        %v3219 = vunpack.c.l.b16 %v2556
        %v3220 = vunpack.c.l.b16 %v2557
        %v3221 = vunpack.c.l.b16 %v2558
        %v3222 = vunpack.c.l.b16 %v2559
        %v3223 = vunpack.c.l.b16 %v2560
        %v3224 = vunpack.c.l.b16 %v2561
        %v3225 = vunpack.c.l.b16 %v2562
        %v3226 = vunpack.c.l.b16 %v2563
        %v3227 = vunpack.c.l.b16 %v2564
        %v3228 = vunpack.c.l.b16 %v2565
        %v3229 = vunpack.c.l.b16 %v2566
        %v3230 = vunpack.c.l.b16 %v2567
        %v3231 = vunpack.c.l.b16 %v2568
        %v3232 = vunpack.c.l.b16 %v2569
        %v3233 = vunpack.c.l.b16 %v2570
        %v3234 = vunpack.c.l.b16 %v2571
        %v3235 = vunpack.c.l.b16 %v2572
        %v3236 = vunpack.c.l.b16 %v2573
        %v3237 = vunpack.c.l.b16 %v2574
        %v3238 = vunpack.c.l.b16 %v2575
        %v3239 = vunpack.c.l.b16 %v2576
        %v3240 = vunpack.c.l.b16 %v2577
        %v3241 = vunpack.c.l.b16 %v2578
        %v3242 = vunpack.c.l.b16 %v2579
        %v3243 = vunpack.c.l.b16 %v2580
        %v3244 = vunpack.c.l.b16 %v2581
        %v3245 = vunpack.c.l.b16 %v2582
        %v3246 = vunpack.c.l.b16 %v2583
        %v3247 = vunpack.c.l.b16 %v2584
        %v3248 = vunpack.c.l.b16 %v2585
        %v3249 = vunpack.c.l.b16 %v2586
        %v3250 = vunpack.c.l.b16 %v2587
        %v3251 = vunpack.c.l.b16 %v2588
        %v3252 = vunpack.c.l.b16 %v2589
        %v3253 = vunpack.c.l.b16 %v2590
        %v3254 = vunpack.c.l.b16 %v2591
        %v3255 = vunpack.c.l.b16 %v2592
        %v3256 = vunpack.c.l.b16 %v2593
        %v3257 = vunpack.c.l.b16 %v2594
        %v3258 = vunpack.c.l.b16 %v2595
        %v3259 = vunpack.c.l.b16 %v2596
        %v3260 = vunpack.c.l.b16 %v2597
        %v3261 = vunpack.c.l.b16 %v2598
        %v3262 = vunpack.c.l.b16 %v2599
        %v3263 = vunpack.c.l.b16 %v2600
        %v3264 = vunpack.c.l.b16 %v2601
        %v3265 = vunpack.c.l.b16 %v2602
        %v3266 = vunpack.c.l.b16 %v2603
        %v3267 = vunpack.c.l.b16 %v2604
        %v3268 = vunpack.c.l.b16 %v2605
        %v3269 = vunpack.c.l.b16 %v2606
        %v3270 = vunpack.c.l.b16 %v2607
        %v3271 = vunpack.c.l.b16 %v2608
        %v3272 = vunpack.c.l.b16 %v2609
        %v3273 = vunpack.c.l.b16 %v2610
        %v3274 = vunpack.c.l.b16 %v2611
        %v3275 = vunpack.c.l.b16 %v2612
        %v3276 = vunpack.c.l.b16 %v2613
        %v3277 = vunpack.c.l.b16 %v2614
        %v3278 = vunpack.c.l.b16 %v2615
        %v3279 = vunpack.c.l.b16 %v2616
        %v3280 = vunpack.c.l.b16 %v2617
        %v3281 = vunpack.c.l.b16 %v2618
        %v3282 = vunpack.c.l.b16 %v2619
        %v3283 = vunpack.c.l.b16 %v2620
        %v3284 = vunpack.c.l.b16 %v2621
        %v3285 = vunpack.c.l.b16 %v2622
        %v3286 = vunpack.c.l.b16 %v2623
        %v3287 = vunpack.c.l.b16 %v2624
        %v3288 = vunpack.c.l.b16 %v2625
        %v3289 = vunpack.c.l.b16 %v2626
        %v3290 = vunpack.c.l.b16 %v2627
        %v3291 = vunpack.c.l.b16 %v2628
        %v3292 = vunpack.c.l.b16 %v2629
        %v3293 = vunpack.c.l.b16 %v2630
        %v3294 = vunpack.c.l.b16 %v2631
        %v3295 = vunpack.c.l.b16 %v2632
        %v3296 = vunpack.c.l.b16 %v2633
        %v3297 = vunpack.c.l.b16 %v2634
        %v3298 = vunpack.c.l.b16 %v2635
        %v3299 = vpack.c.b16 %v3156, %v3155
        %v3300 = vpack.c.b16 %v3158, %v3157
        %v3301 = vpack.c.b16 %v3160, %v3159
        %v3302 = vpack.c.b16 %v3162, %v3161
        %v3303 = vpack.c.b16 %v3164, %v3163
        %v3304 = vpack.c.b16 %v3166, %v3165
        %v3305 = vpack.c.b16 %v3168, %v3167
        %v3306 = vpack.c.b16 %v3170, %v3169
        %v3307 = vpack.c.b16 %v3172, %v3171
        %v3308 = vpack.c.b16 %v3174, %v3173
        %v3309 = vpack.c.b16 %v3176, %v3175
        %v3310 = vpack.c.b16 %v3178, %v3177
        %v3311 = vpack.c.b16 %v3180, %v3179
        %v3312 = vpack.c.b16 %v3182, %v3181
        %v3313 = vpack.c.b16 %v3184, %v3183
        %v3314 = vpack.c.b16 %v3186, %v3185
        %v3315 = vpack.c.b16 %v3188, %v3187
        %v3316 = vpack.c.b16 %v3190, %v3189
        %v3317 = vpack.c.b16 %v3192, %v3191
        %v3318 = vpack.c.b16 %v3194, %v3193
        %v3319 = vpack.c.b16 %v3196, %v3195
        %v3320 = vpack.c.b16 %v3198, %v3197
        %v3321 = vpack.c.b16 %v3200, %v3199
        %v3322 = vpack.c.b16 %v3202, %v3201
        %v3323 = vpack.c.b16 %v3204, %v3203
        %v3324 = vpack.c.b16 %v3206, %v3205
        %v3325 = vpack.c.b16 %v3208, %v3207
        %v3326 = vpack.c.b16 %v3210, %v3209
        %v3327 = vpack.c.b16 %v3212, %v3211
        %v3328 = vpack.c.b16 %v3214, %v3213
        %v3329 = vpack.c.b16 %v3216, %v3215
        %v3330 = vpack.c.b16 %v3218, %v3217
        %v3331 = vpack.c.b16 %v3220, %v3219
        %v3332 = vpack.c.b16 %v3222, %v3221
        %v3333 = vpack.c.b16 %v3224, %v3223
        %v3334 = vpack.c.b16 %v3226, %v3225
        %v3335 = vpack.c.b16 %v3228, %v3227
        %v3336 = vpack.c.b16 %v3230, %v3229
        %v3337 = vpack.c.b16 %v3232, %v3231
        %v3338 = vpack.c.b16 %v3234, %v3233
        %v3339 = vpack.c.b16 %v3236, %v3235
        %v3340 = vpack.c.b16 %v3238, %v3237
        %v3341 = vpack.c.b16 %v3240, %v3239
        %v3342 = vpack.c.b16 %v3242, %v3241
        %v3343 = vpack.c.b16 %v3244, %v3243
        %v3344 = vpack.c.b16 %v3246, %v3245
        %v3345 = vpack.c.b16 %v3248, %v3247
        %v3346 = vpack.c.b16 %v3250, %v3249
        %v3347 = vpack.c.b16 %v3252, %v3251
        %v3348 = vpack.c.b16 %v3254, %v3253
        %v3349 = vpack.c.b16 %v3256, %v3255
        %v3350 = vpack.c.b16 %v3258, %v3257
        %v3351 = vpack.c.b16 %v3260, %v3259
        %v3352 = vpack.c.b16 %v3262, %v3261
        %v3353 = vpack.c.b16 %v3264, %v3263
        %v3354 = vpack.c.b16 %v3266, %v3265
        %v3355 = vpack.c.b16 %v3268, %v3267
        %v3356 = vpack.c.b16 %v3270, %v3269
        %v3357 = vpack.c.b16 %v3272, %v3271
        %v3358 = vpack.c.b16 %v3274, %v3273
        %v3359 = vpack.c.b16 %v3276, %v3275
        %v3360 = vpack.c.b16 %v3278, %v3277
        %v3361 = vpack.c.b16 %v3280, %v3279
        %v3362 = vpack.c.b16 %v3282, %v3281
        %v3363 = vpack.c.b16 %v3284, %v3283
        %v3364 = vpack.c.b16 %v3286, %v3285
        %v3365 = vpack.c.b16 %v3288, %v3287
        %v3366 = vpack.c.b16 %v3290, %v3289
        %v3367 = vpack.c.b16 %v3292, %v3291
        %v3368 = vpack.c.b16 %v3294, %v3293
        %v3369 = vpack.c.b16 %v3296, %v3295
        %v3370 = vpack.c.b16 %v3298, %v3297
        %3443 = vmatprep.subr.bf16.mxu0 0
        %3444 = vmatpush1.bf16.msra.mxu0 %v3306
        %3445 = vmatprep.subr.bf16.mxu0 0
        %3446 = vmatpush1.bf16.msra.mxu0 %v3305
        %3447 = vmatprep.subr.bf16.mxu0 0
        %3448 = vmatpush1.bf16.msra.mxu0 %v3304
        %3449 = vmatprep.subr.bf16.mxu0 0
        %3450 = vmatpush1.bf16.msra.mxu0 %v3303
        %3451 = vmatprep.subr.bf16.mxu0 0
        %3452 = vmatpush1.bf16.msra.mxu0 %v3302
        %3453 = vmatprep.subr.bf16.mxu0 0
        %3454 = vmatpush1.bf16.msra.mxu0 %v3301
        %3455 = vmatprep.subr.bf16.mxu0 0
        %3456 = vmatpush1.bf16.msra.mxu0 %v3300
        %3457 = vmatprep.subr.bf16.mxu0 0
        %3458 = vmatpush1.bf16.msra.mxu0 %v3299
        %3459 = vmatprep.subr.bf16.mxu0 0
        %3460 = vmatpush2.bf16.msra.mxu0 %v3314
        %3461 = vmatprep.subr.bf16.mxu0 0
        %3462 = vmatpush2.bf16.msra.mxu0 %v3313
        %3463 = vmatprep.subr.bf16.mxu0 0
        %3464 = vmatpush2.bf16.msra.mxu0 %v3312
        %3465 = vmatprep.subr.bf16.mxu0 0
        %3466 = vmatpush2.bf16.msra.mxu0 %v3311
        %3467 = vmatprep.subr.bf16.mxu0 0
        %3468 = vmatpush2.bf16.msra.mxu0 %v3310
        %3469 = vmatprep.subr.bf16.mxu0 0
        %3470 = vmatpush2.bf16.msra.mxu0 %v3309
        %3471 = vmatprep.subr.bf16.mxu0 0
        %3472 = vmatpush2.bf16.msra.mxu0 %v3308
        %3473 = vmatprep.subr.bf16.mxu0 0
        %3474 = vmatpush2.bf16.msra.mxu0 %v3307
        %3475 = vmatprep.mubr.bf16.mxu0 %v2868
        %3476 = vmatmul.mubr.bf16.gmra.mxu0 %v2867
        %v3477 = vpop.f32.mrf.mxu0
        %v3478 = vadd.f32 %v2641, %v3477
        %v3479 = vpop.f32.mrf.mxu0
        %v3480 = vpop.f32.mrf.mxu0
        %v3481 = vadd.f32 %v2641, %v3480
        %v3482 = vpop.f32.mrf.mxu0
        %3483 = vmatprep.mubr.bf16.mxu0 %v2877
        %3484 = vmatmul.mubr.bf16.gmra.mxu0 %v2876
        %v3485 = vpop.f32.mrf.mxu0
        %v3486 = vadd.f32 %v2641, %v3485
        %v3487 = vpop.f32.mrf.mxu0
        %v3488 = vpop.f32.mrf.mxu0
        %v3489 = vadd.f32 %v2641, %v3488
        %v3490 = vpop.f32.mrf.mxu0
        %3491 = vmatprep.mubr.bf16.mxu0 %v2886
        %3492 = vmatmul.mubr.bf16.gmra.mxu0 %v2885
        %v3493 = vpop.f32.mrf.mxu0
        %v3494 = vadd.f32 %v2641, %v3493
        %v3495 = vpop.f32.mrf.mxu0
        %v3496 = vpop.f32.mrf.mxu0
        %v3497 = vadd.f32 %v2641, %v3496
        %v3498 = vpop.f32.mrf.mxu0
        %3499 = vmatprep.mubr.bf16.mxu0 %v2895
        %3500 = vmatmul.mubr.bf16.gmra.mxu0 %v2894
        %v3501 = vpop.f32.mrf.mxu0
        %v3502 = vadd.f32 %v2641, %v3501
        %v3503 = vpop.f32.mrf.mxu0
        %v3504 = vpop.f32.mrf.mxu0
        %v3505 = vadd.f32 %v2641, %v3504
        %v3506 = vpop.f32.mrf.mxu0
        %3507 = vmatprep.mubr.bf16.mxu0 %v2904
        %3508 = vmatmul.mubr.bf16.gmra.mxu0 %v2903
        %v3509 = vpop.f32.mrf.mxu0
        %v3510 = vadd.f32 %v2641, %v3509
        %v3511 = vpop.f32.mrf.mxu0
        %v3512 = vpop.f32.mrf.mxu0
        %v3513 = vadd.f32 %v2641, %v3512
        %v3514 = vpop.f32.mrf.mxu0
        %3515 = vmatprep.mubr.bf16.mxu0 %v2913
        %3516 = vmatmul.mubr.bf16.gmra.mxu0 %v2912
        %v3517 = vpop.f32.mrf.mxu0
        %v3518 = vadd.f32 %v2641, %v3517
        %v3519 = vpop.f32.mrf.mxu0
        %v3520 = vpop.f32.mrf.mxu0
        %v3521 = vadd.f32 %v2641, %v3520
        %v3522 = vpop.f32.mrf.mxu0
        %3523 = vmatprep.mubr.bf16.mxu0 %v2922
        %3524 = vmatmul.mubr.bf16.gmra.mxu0 %v2921
        %v3525 = vpop.f32.mrf.mxu0
        %v3526 = vadd.f32 %v2641, %v3525
        %v3527 = vpop.f32.mrf.mxu0
        %v3528 = vpop.f32.mrf.mxu0
        %v3529 = vadd.f32 %v2641, %v3528
        %v3530 = vpop.f32.mrf.mxu0
        %3531 = vmatprep.mubr.bf16.mxu0 %v2931
        %3532 = vmatmul.mubr.bf16.gmra.mxu0 %v2930
        %v3533 = vpop.f32.mrf.mxu0
        %v3534 = vadd.f32 %v2641, %v3533
        %v3535 = vpop.f32.mrf.mxu0
        %v3536 = vpop.f32.mrf.mxu0
        %v3537 = vadd.f32 %v2641, %v3536
        %v3538 = vpop.f32.mrf.mxu0
        %3539 = vdwg.mxu0
        %3540 = vmatprep.subr.bf16.mxu0 0
        %3541 = vmatpush1.bf16.msra.mxu0 %v3322
        %3542 = vmatprep.subr.bf16.mxu0 0
        %3543 = vmatpush1.bf16.msra.mxu0 %v3321
        %3544 = vmatprep.subr.bf16.mxu0 0
        %3545 = vmatpush1.bf16.msra.mxu0 %v3320
        %3546 = vmatprep.subr.bf16.mxu0 0
        %3547 = vmatpush1.bf16.msra.mxu0 %v3319
        %3548 = vmatprep.subr.bf16.mxu0 0
        %3549 = vmatpush1.bf16.msra.mxu0 %v3318
        %3550 = vmatprep.subr.bf16.mxu0 0
        %3551 = vmatpush1.bf16.msra.mxu0 %v3317
        %3552 = vmatprep.subr.bf16.mxu0 0
        %3553 = vmatpush1.bf16.msra.mxu0 %v3316
        %3554 = vmatprep.subr.bf16.mxu0 0
        %3555 = vmatpush1.bf16.msra.mxu0 %v3315
        %3556 = vmatprep.subr.bf16.mxu0 0
        %3557 = vmatpush2.bf16.msra.mxu0 %v3330
        %3558 = vmatprep.subr.bf16.mxu0 0
        %3559 = vmatpush2.bf16.msra.mxu0 %v3329
        %3560 = vmatprep.subr.bf16.mxu0 0
        %3561 = vmatpush2.bf16.msra.mxu0 %v3328
        %3562 = vmatprep.subr.bf16.mxu0 0
        %3563 = vmatpush2.bf16.msra.mxu0 %v3327
        %3564 = vmatprep.subr.bf16.mxu0 0
        %3565 = vmatpush2.bf16.msra.mxu0 %v3326
        %3566 = vmatprep.subr.bf16.mxu0 0
        %3567 = vmatpush2.bf16.msra.mxu0 %v3325
        %3568 = vmatprep.subr.bf16.mxu0 0
        %3569 = vmatpush2.bf16.msra.mxu0 %v3324
        %3570 = vmatprep.subr.bf16.mxu0 0
        %3571 = vmatpush2.bf16.msra.mxu0 %v3323
        %3572 = vmatprep.mubr.bf16.mxu0 %v2870
        %3573 = vmatmul.mubr.bf16.gmra.mxu0 %v2869
        %v3574 = vpop.f32.mrf.mxu0
        %v3575 = vadd.f32 %v3478, %v3574
        %v3576 = vpop.f32.mrf.mxu0
        %v3577 = vpop.f32.mrf.mxu0
        %v3578 = vadd.f32 %v3481, %v3577
        %v3579 = vpop.f32.mrf.mxu0
        %3580 = vmatprep.mubr.bf16.mxu0 %v2879
        %3581 = vmatmul.mubr.bf16.gmra.mxu0 %v2878
        %v3582 = vpop.f32.mrf.mxu0
        %v3583 = vadd.f32 %v3486, %v3582
        %v3584 = vpop.f32.mrf.mxu0
        %v3585 = vpop.f32.mrf.mxu0
        %v3586 = vadd.f32 %v3489, %v3585
        %v3587 = vpop.f32.mrf.mxu0
        %3588 = vmatprep.mubr.bf16.mxu0 %v2888
        %3589 = vmatmul.mubr.bf16.gmra.mxu0 %v2887
        %v3590 = vpop.f32.mrf.mxu0
        %v3591 = vadd.f32 %v3494, %v3590
        %v3592 = vpop.f32.mrf.mxu0
        %v3593 = vpop.f32.mrf.mxu0
        %v3594 = vadd.f32 %v3497, %v3593
        %v3595 = vpop.f32.mrf.mxu0
        %3596 = vmatprep.mubr.bf16.mxu0 %v2897
        %3597 = vmatmul.mubr.bf16.gmra.mxu0 %v2896
        %v3598 = vpop.f32.mrf.mxu0
        %v3599 = vadd.f32 %v3502, %v3598
        %v3600 = vpop.f32.mrf.mxu0
        %v3601 = vpop.f32.mrf.mxu0
        %v3602 = vadd.f32 %v3505, %v3601
        %v3603 = vpop.f32.mrf.mxu0
        %3604 = vmatprep.mubr.bf16.mxu0 %v2906
        %3605 = vmatmul.mubr.bf16.gmra.mxu0 %v2905
        %v3606 = vpop.f32.mrf.mxu0
        %v3607 = vadd.f32 %v3510, %v3606
        %v3608 = vpop.f32.mrf.mxu0
        %v3609 = vpop.f32.mrf.mxu0
        %v3610 = vadd.f32 %v3513, %v3609
        %v3611 = vpop.f32.mrf.mxu0
        %3612 = vmatprep.mubr.bf16.mxu0 %v2915
        %3613 = vmatmul.mubr.bf16.gmra.mxu0 %v2914
        %v3614 = vpop.f32.mrf.mxu0
        %v3615 = vadd.f32 %v3518, %v3614
        %v3616 = vpop.f32.mrf.mxu0
        %v3617 = vpop.f32.mrf.mxu0
        %v3618 = vadd.f32 %v3521, %v3617
        %v3619 = vpop.f32.mrf.mxu0
        %3620 = vmatprep.mubr.bf16.mxu0 %v2924
        %3621 = vmatmul.mubr.bf16.gmra.mxu0 %v2923
        %v3622 = vpop.f32.mrf.mxu0
        %v3623 = vadd.f32 %v3526, %v3622
        %v3624 = vpop.f32.mrf.mxu0
        %v3625 = vpop.f32.mrf.mxu0
        %v3626 = vadd.f32 %v3529, %v3625
        %v3627 = vpop.f32.mrf.mxu0
        %3628 = vmatprep.mubr.bf16.mxu0 %v2933
        %3629 = vmatmul.mubr.bf16.gmra.mxu0 %v2932
        %v3630 = vpop.f32.mrf.mxu0
        %v3631 = vadd.f32 %v3534, %v3630
        %v3632 = vpop.f32.mrf.mxu0
        %v3633 = vpop.f32.mrf.mxu0
        %v3634 = vadd.f32 %v3537, %v3633
        %v3635 = vpop.f32.mrf.mxu0
        %3636 = vdwg.mxu0
        %3637 = vmatprep.subr.bf16.mxu0 0
        %3638 = vmatpush1.bf16.msra.mxu0 %v3338
        %3639 = vmatprep.subr.bf16.mxu0 0
        %3640 = vmatpush1.bf16.msra.mxu0 %v3337
        %3641 = vmatprep.subr.bf16.mxu0 0
        %3642 = vmatpush1.bf16.msra.mxu0 %v3336
        %3643 = vmatprep.subr.bf16.mxu0 0
        %3644 = vmatpush1.bf16.msra.mxu0 %v3335
        %3645 = vmatprep.subr.bf16.mxu0 0
        %3646 = vmatpush1.bf16.msra.mxu0 %v3334
        %3647 = vmatprep.subr.bf16.mxu0 0
        %3648 = vmatpush1.bf16.msra.mxu0 %v3333
        %3649 = vmatprep.subr.bf16.mxu0 0
        %3650 = vmatpush1.bf16.msra.mxu0 %v3332
        %3651 = vmatprep.subr.bf16.mxu0 0
        %3652 = vmatpush1.bf16.msra.mxu0 %v3331
        %3653 = vmatprep.subr.bf16.mxu0 0
        %3654 = vmatpush2.bf16.msra.mxu0 %v3346
        %3655 = vmatprep.subr.bf16.mxu0 0
        %3656 = vmatpush2.bf16.msra.mxu0 %v3345
        %3657 = vmatprep.subr.bf16.mxu0 0
        %3658 = vmatpush2.bf16.msra.mxu0 %v3344
        %3659 = vmatprep.subr.bf16.mxu0 0
        %3660 = vmatpush2.bf16.msra.mxu0 %v3343
        %3661 = vmatprep.subr.bf16.mxu0 0
        %3662 = vmatpush2.bf16.msra.mxu0 %v3342
        %3663 = vmatprep.subr.bf16.mxu0 0
        %3664 = vmatpush2.bf16.msra.mxu0 %v3341
        %3665 = vmatprep.subr.bf16.mxu0 0
        %3666 = vmatpush2.bf16.msra.mxu0 %v3340
        %3667 = vmatprep.subr.bf16.mxu0 0
        %3668 = vmatpush2.bf16.msra.mxu0 %v3339
        %3669 = vmatprep.mubr.bf16.mxu0 %v2872
        %3670 = vmatmul.mubr.bf16.gmra.mxu0 %v2871
        %v3671 = vpop.f32.mrf.mxu0
        %v3672 = vadd.f32 %v3575, %v3671
        %v3673 = vpop.f32.mrf.mxu0
        %v3674 = vpop.f32.mrf.mxu0
        %v3675 = vadd.f32 %v3578, %v3674
        %v3676 = vpop.f32.mrf.mxu0
        %3677 = vmatprep.mubr.bf16.mxu0 %v2881
        %3678 = vmatmul.mubr.bf16.gmra.mxu0 %v2880
        %v3679 = vpop.f32.mrf.mxu0
        %v3680 = vadd.f32 %v3583, %v3679
        %v3681 = vpop.f32.mrf.mxu0
        %v3682 = vpop.f32.mrf.mxu0
        %v3683 = vadd.f32 %v3586, %v3682
        %v3684 = vpop.f32.mrf.mxu0
        %3685 = vmatprep.mubr.bf16.mxu0 %v2890
        %3686 = vmatmul.mubr.bf16.gmra.mxu0 %v2889
        %v3687 = vpop.f32.mrf.mxu0
        %v3688 = vadd.f32 %v3591, %v3687
        %v3689 = vpop.f32.mrf.mxu0
        %v3690 = vpop.f32.mrf.mxu0
        %v3691 = vadd.f32 %v3594, %v3690
        %v3692 = vpop.f32.mrf.mxu0
        %3693 = vmatprep.mubr.bf16.mxu0 %v2899
        %3694 = vmatmul.mubr.bf16.gmra.mxu0 %v2898
        %v3695 = vpop.f32.mrf.mxu0
        %v3696 = vadd.f32 %v3599, %v3695
        %v3697 = vpop.f32.mrf.mxu0
        %v3698 = vpop.f32.mrf.mxu0
        %v3699 = vadd.f32 %v3602, %v3698
        %v3700 = vpop.f32.mrf.mxu0
        %3701 = vmatprep.mubr.bf16.mxu0 %v2908
        %3702 = vmatmul.mubr.bf16.gmra.mxu0 %v2907
        %v3703 = vpop.f32.mrf.mxu0
        %v3704 = vadd.f32 %v3607, %v3703
        %v3705 = vpop.f32.mrf.mxu0
        %v3706 = vpop.f32.mrf.mxu0
        %v3707 = vadd.f32 %v3610, %v3706
        %v3708 = vpop.f32.mrf.mxu0
        %3709 = vmatprep.mubr.bf16.mxu0 %v2917
        %3710 = vmatmul.mubr.bf16.gmra.mxu0 %v2916
        %v3711 = vpop.f32.mrf.mxu0
        %v3712 = vadd.f32 %v3615, %v3711
        %v3713 = vpop.f32.mrf.mxu0
        %v3714 = vpop.f32.mrf.mxu0
        %v3715 = vadd.f32 %v3618, %v3714
        %v3716 = vpop.f32.mrf.mxu0
        %3717 = vmatprep.mubr.bf16.mxu0 %v2926
        %3718 = vmatmul.mubr.bf16.gmra.mxu0 %v2925
        %v3719 = vpop.f32.mrf.mxu0
        %v3720 = vadd.f32 %v3623, %v3719
        %v3721 = vpop.f32.mrf.mxu0
        %v3722 = vpop.f32.mrf.mxu0
        %v3723 = vadd.f32 %v3626, %v3722
        %v3724 = vpop.f32.mrf.mxu0
        %3725 = vmatprep.mubr.bf16.mxu0 %v2935
        %3726 = vmatmul.mubr.bf16.gmra.mxu0 %v2934
        %v3727 = vpop.f32.mrf.mxu0
        %v3728 = vadd.f32 %v3631, %v3727
        %v3729 = vpop.f32.mrf.mxu0
        %v3730 = vpop.f32.mrf.mxu0
        %v3731 = vadd.f32 %v3634, %v3730
        %v3732 = vpop.f32.mrf.mxu0
        %3733 = vdwg.mxu0
        %3734 = vmatprep.subr.bf16.mxu0 0
        %3735 = vmatpush1.bf16.msra.mxu0 %v3354
        %3736 = vmatprep.subr.bf16.mxu0 0
        %3737 = vmatpush1.bf16.msra.mxu0 %v3353
        %3738 = vmatprep.subr.bf16.mxu0 0
        %3739 = vmatpush1.bf16.msra.mxu0 %v3352
        %3740 = vmatprep.subr.bf16.mxu0 0
        %3741 = vmatpush1.bf16.msra.mxu0 %v3351
        %3742 = vmatprep.subr.bf16.mxu0 0
        %3743 = vmatpush1.bf16.msra.mxu0 %v3350
        %3744 = vmatprep.subr.bf16.mxu0 0
        %3745 = vmatpush1.bf16.msra.mxu0 %v3349
        %3746 = vmatprep.subr.bf16.mxu0 0
        %3747 = vmatpush1.bf16.msra.mxu0 %v3348
        %3748 = vmatprep.subr.bf16.mxu0 0
        %3749 = vmatpush1.bf16.msra.mxu0 %v3347
        %3750 = vmatprep.subr.bf16.mxu0 0
        %3751 = vmatpush2.bf16.msra.mxu0 %v3362
        %3752 = vmatprep.subr.bf16.mxu0 0
        %3753 = vmatpush2.bf16.msra.mxu0 %v3361
        %3754 = vmatprep.subr.bf16.mxu0 0
        %3755 = vmatpush2.bf16.msra.mxu0 %v3360
        %3756 = vmatprep.subr.bf16.mxu0 0
        %3757 = vmatpush2.bf16.msra.mxu0 %v3359
        %3758 = vmatprep.subr.bf16.mxu0 0
        %3759 = vmatpush2.bf16.msra.mxu0 %v3358
        %3760 = vmatprep.subr.bf16.mxu0 0
        %3761 = vmatpush2.bf16.msra.mxu0 %v3357
        %3762 = vmatprep.subr.bf16.mxu0 0
        %3763 = vmatpush2.bf16.msra.mxu0 %v3356
        %3764 = vmatprep.subr.bf16.mxu0 0
        %3765 = vmatpush2.bf16.msra.mxu0 %v3355
        %3766 = vmatprep.mubr.bf16.mxu0 %v2874
        %3767 = vmatmul.mubr.bf16.gmra.mxu0 %v2873
        %v3768 = vpop.f32.mrf.mxu0
        %v3769 = vadd.f32 %v3672, %v3768
        %v3770 = vpop.f32.mrf.mxu0
        %v3771 = vpop.f32.mrf.mxu0
        %v3772 = vadd.f32 %v3675, %v3771
        %v3773 = vpop.f32.mrf.mxu0
        %3774 = vmatprep.mubr.bf16.mxu0 %v2883
        %3775 = vmatmul.mubr.bf16.gmra.mxu0 %v2882
        %v3776 = vpop.f32.mrf.mxu0
        %v3777 = vadd.f32 %v3680, %v3776
        %v3778 = vpop.f32.mrf.mxu0
        %v3779 = vpop.f32.mrf.mxu0
        %v3780 = vadd.f32 %v3683, %v3779
        %v3781 = vpop.f32.mrf.mxu0
        %3782 = vmatprep.mubr.bf16.mxu0 %v2892
        %3783 = vmatmul.mubr.bf16.gmra.mxu0 %v2891
        %v3784 = vpop.f32.mrf.mxu0
        %v3785 = vadd.f32 %v3688, %v3784
        %v3786 = vpop.f32.mrf.mxu0
        %v3787 = vpop.f32.mrf.mxu0
        %v3788 = vadd.f32 %v3691, %v3787
        %v3789 = vpop.f32.mrf.mxu0
        %3790 = vmatprep.mubr.bf16.mxu0 %v2901
        %3791 = vmatmul.mubr.bf16.gmra.mxu0 %v2900
        %v3792 = vpop.f32.mrf.mxu0
        %v3793 = vadd.f32 %v3696, %v3792
        %v3794 = vpop.f32.mrf.mxu0
        %v3795 = vpop.f32.mrf.mxu0
        %v3796 = vadd.f32 %v3699, %v3795
        %v3797 = vpop.f32.mrf.mxu0
        %3798 = vmatprep.mubr.bf16.mxu0 %v2910
        %3799 = vmatmul.mubr.bf16.gmra.mxu0 %v2909
        %v3800 = vpop.f32.mrf.mxu0
        %v3801 = vadd.f32 %v3704, %v3800
        %v3802 = vpop.f32.mrf.mxu0
        %v3803 = vpop.f32.mrf.mxu0
        %v3804 = vadd.f32 %v3707, %v3803
        %v3805 = vpop.f32.mrf.mxu0
        %3806 = vmatprep.mubr.bf16.mxu0 %v2919
        %3807 = vmatmul.mubr.bf16.gmra.mxu0 %v2918
        %v3808 = vpop.f32.mrf.mxu0
        %v3809 = vadd.f32 %v3712, %v3808
        %v3810 = vpop.f32.mrf.mxu0
        %v3811 = vpop.f32.mrf.mxu0
        %v3812 = vadd.f32 %v3715, %v3811
        %v3813 = vpop.f32.mrf.mxu0
        %3814 = vmatprep.mubr.bf16.mxu0 %v2928
        %3815 = vmatmul.mubr.bf16.gmra.mxu0 %v2927
        %v3816 = vpop.f32.mrf.mxu0
        %v3817 = vadd.f32 %v3720, %v3816
        %v3818 = vpop.f32.mrf.mxu0
        %v3819 = vpop.f32.mrf.mxu0
        %v3820 = vadd.f32 %v3723, %v3819
        %v3821 = vpop.f32.mrf.mxu0
        %3822 = vmatprep.mubr.bf16.mxu0 %v2937
        %3823 = vmatmul.mubr.bf16.gmra.mxu0 %v2936
        %v3824 = vpop.f32.mrf.mxu0
        %v3825 = vadd.f32 %v3728, %v3824
        %v3826 = vpop.f32.mrf.mxu0
        %v3827 = vpop.f32.mrf.mxu0
        %v3828 = vadd.f32 %v3731, %v3827
        %v3829 = vpop.f32.mrf.mxu0
        %3830 = vdwg.mxu0
        %3831 = vmatprep.subr.bf16.mxu0 0
        %3832 = vmatpush1.bf16.msra.mxu0 %v3370
        %3833 = vmatprep.subr.bf16.mxu0 0
        %3834 = vmatpush1.bf16.msra.mxu0 %v3369
        %3835 = vmatprep.subr.bf16.mxu0 0
        %3836 = vmatpush1.bf16.msra.mxu0 %v3368
        %3837 = vmatprep.subr.bf16.mxu0 0
        %3838 = vmatpush1.bf16.msra.mxu0 %v3367
        %3839 = vmatprep.subr.bf16.mxu0 0
        %3840 = vmatpush1.bf16.msra.mxu0 %v3366
        %3841 = vmatprep.subr.bf16.mxu0 0
        %3842 = vmatpush1.bf16.msra.mxu0 %v3365
        %3843 = vmatprep.subr.bf16.mxu0 0
        %3844 = vmatpush1.bf16.msra.mxu0 %v3364
        %3845 = vmatprep.subr.bf16.mxu0 0
        %3846 = vmatpush1.bf16.msra.mxu0 %v3363
        %3847 = vmatprep.subr.bf16.mxu0 0
        %3848 = vmatpush2.bf16.msra.mxu0 0
        %3849 = vmatprep.subr.bf16.mxu0 0
        %3850 = vmatpush2.bf16.msra.mxu0 0
        %3851 = vmatprep.subr.bf16.mxu0 0
        %3852 = vmatpush2.bf16.msra.mxu0 0
        %3853 = vmatprep.subr.bf16.mxu0 0
        %3854 = vmatpush2.bf16.msra.mxu0 0
        %3855 = vmatprep.subr.bf16.mxu0 0
        %3856 = vmatpush2.bf16.msra.mxu0 0
        %3857 = vmatprep.subr.bf16.mxu0 0
        %3858 = vmatpush2.bf16.msra.mxu0 0
        %3859 = vmatprep.subr.bf16.mxu0 0
        %3860 = vmatpush2.bf16.msra.mxu0 0
        %3861 = vmatprep.subr.bf16.mxu0 0
        %3862 = vmatpush2.bf16.msra.mxu0 0
        %3863 = vmatprep.mubr.bf16.mxu0 0
        %3864 = vmatmul.mubr.bf16.gmra.mxu0 %v2875
        %v3865 = vpop.f32.mrf.mxu0
        %v3866 = vadd.f32 %v3769, %v3865
        %v3867 = vpop.f32.mrf.mxu0
        %v3868 = vpop.f32.mrf.mxu0
        %v3869 = vadd.f32 %v3772, %v3868
        %v3870 = vpop.f32.mrf.mxu0
        %3871 = vmatprep.mubr.bf16.mxu0 0
        %3872 = vmatmul.mubr.bf16.gmra.mxu0 %v2884
        %v3873 = vpop.f32.mrf.mxu0
        %v3874 = vadd.f32 %v3777, %v3873
        %v3875 = vpop.f32.mrf.mxu0
        %v3876 = vpop.f32.mrf.mxu0
        %v3877 = vadd.f32 %v3780, %v3876
        %v3878 = vpop.f32.mrf.mxu0
        %3879 = vmatprep.mubr.bf16.mxu0 0
        %3880 = vmatmul.mubr.bf16.gmra.mxu0 %v2893
        %v3881 = vpop.f32.mrf.mxu0
        %v3882 = vadd.f32 %v3785, %v3881
        %v3883 = vpop.f32.mrf.mxu0
        %v3884 = vpop.f32.mrf.mxu0
        %v3885 = vadd.f32 %v3788, %v3884
        %v3886 = vpop.f32.mrf.mxu0
        %3887 = vmatprep.mubr.bf16.mxu0 0
        %3888 = vmatmul.mubr.bf16.gmra.mxu0 %v2902
        %v3889 = vpop.f32.mrf.mxu0
        %v3890 = vadd.f32 %v3793, %v3889
        %v3891 = vpop.f32.mrf.mxu0
        %v3892 = vpop.f32.mrf.mxu0
        %v3893 = vadd.f32 %v3796, %v3892
        %v3894 = vpop.f32.mrf.mxu0
        %3895 = vmatprep.mubr.bf16.mxu0 0
        %3896 = vmatmul.mubr.bf16.gmra.mxu0 %v2911
        %v3897 = vpop.f32.mrf.mxu0
        %v3898 = vadd.f32 %v3801, %v3897
        %v3899 = vpop.f32.mrf.mxu0
        %v3900 = vpop.f32.mrf.mxu0
        %v3901 = vadd.f32 %v3804, %v3900
        %v3902 = vpop.f32.mrf.mxu0
        %3903 = vmatprep.mubr.bf16.mxu0 0
        %3904 = vmatmul.mubr.bf16.gmra.mxu0 %v2920
        %v3905 = vpop.f32.mrf.mxu0
        %v3906 = vadd.f32 %v3809, %v3905
        %v3907 = vpop.f32.mrf.mxu0
        %v3908 = vpop.f32.mrf.mxu0
        %v3909 = vadd.f32 %v3812, %v3908
        %v3910 = vpop.f32.mrf.mxu0
        %3911 = vmatprep.mubr.bf16.mxu0 0
        %3912 = vmatmul.mubr.bf16.gmra.mxu0 %v2929
        %v3913 = vpop.f32.mrf.mxu0
        %v3914 = vadd.f32 %v3817, %v3913
        %v3915 = vpop.f32.mrf.mxu0
        %v3916 = vpop.f32.mrf.mxu0
        %v3917 = vadd.f32 %v3820, %v3916
        %v3918 = vpop.f32.mrf.mxu0
        %3919 = vmatprep.mubr.bf16.mxu0 0
        %3920 = vmatmul.mubr.bf16.gmra.mxu0 %v2938
        %v3921 = vpop.f32.mrf.mxu0
        %v3922 = vadd.f32 %v3825, %v3921
        %v3923 = vpop.f32.mrf.mxu0
        %v3924 = vpop.f32.mrf.mxu0
        %v3925 = vadd.f32 %v3828, %v3924
        %v3926 = vpop.f32.mrf.mxu0
        %3927 = vdwg.mxu0
        %v3928 = vmax.f32 %v3866, 0.0
        %v3929 = vmax.f32 %v3869, 0.0
        %v3930 = vmax.f32 %v3874, 0.0
        %v3931 = vmax.f32 %v3877, 0.0
        %v3932 = vmax.f32 %v3882, 0.0
        %v3933 = vmax.f32 %v3885, 0.0
        %v3934 = vmax.f32 %v3890, 0.0
        %v3935 = vmax.f32 %v3893, 0.0
        %v3936 = vmax.f32 %v3898, 0.0
        %v3937 = vmax.f32 %v3901, 0.0
        %v3938 = vmax.f32 %v3906, 0.0
        %v3939 = vmax.f32 %v3909, 0.0
        %v3940 = vmax.f32 %v3914, 0.0
        %v3941 = vmax.f32 %v3917, 0.0
        %v3942 = vmax.f32 %v3922, 0.0
        %v3943 = vmax.f32 %v3925, 0.0
        %v3944 = vpack.c.bf16 %v3929, %v3928
        %v3945 = vpack.c.bf16 %v3931, %v3930
        %v3946 = vpack.c.bf16 %v3933, %v3932
        %v3947 = vpack.c.bf16 %v3935, %v3934
        %v3948 = vpack.c.bf16 %v3937, %v3936
        %v3949 = vpack.c.bf16 %v3939, %v3938
        %v3950 = vpack.c.bf16 %v3941, %v3940
        %v3951 = vpack.c.bf16 %v3943, %v3942
        %v3952 = vld [vmem:[%s5] sm:$0x3]
        %v3953 = vld [vmem:[%s6] sm:$0x1]
        %v3955 = vlaneseq
        %v3956 = vshrl.u32 %v3955, 7
        %v3957 = vsub.s32 0, %v3956
        %v3958 = vrot.slane %v3953, %v3957
        %vm3960 = vcmask 31744
        %v3962 = vsel %vm3960, %v3944, 0
        %v3965 = vsel %vm3960, %v3945, 0
        %v3968 = vsel %vm3960, %v3946, 0
        %v3971 = vsel %vm3960, %v3947, 0
        %v3974 = vsel %vm3960, %v3948, 0
        %v3977 = vsel %vm3960, %v3949, 0
        %v3980 = vsel %vm3960, %v3950, 0
        %v3983 = vsel %vm3960, %v3951, 0
        %vm3985 = vcmask 1041408
        %v3987 = vsel %vm3985, %v3952, 0
        %3989 = vmatprep.subr.bf16.mxu0 0
        %3990 = vmatpush1.bf16.msra.mxu0 0
        %3991 = vmatprep.subr.bf16.mxu0 0
        %3992 = vmatpush1.bf16.msra.mxu0 0
        %3993 = vmatprep.subr.bf16.mxu0 0
        %3994 = vmatpush1.bf16.msra.mxu0 0
        %3995 = vmatprep.subr.bf16.mxu0 0
        %3996 = vmatpush1.bf16.msra.mxu0 0
        %3997 = vmatprep.subr.bf16.mxu0 0
        %3998 = vmatpush1.bf16.msra.mxu0 0
        %3999 = vmatprep.subr.bf16.mxu0 0
        %4000 = vmatpush1.bf16.msra.mxu0 0
        %4001 = vmatprep.subr.bf16.mxu0 0
        %4002 = vmatpush1.bf16.msra.mxu0 0
        %4003 = vmatprep.subr.bf16.mxu0 0
        %4004 = vmatpush1.bf16.msra.mxu0 %v3987
        %4005 = vmatprep.subr.bf16.mxu0 0
        %4006 = vmatpush2.bf16.msra.mxu0 0
        %4007 = vmatprep.subr.bf16.mxu0 0
        %4008 = vmatpush2.bf16.msra.mxu0 0
        %4009 = vmatprep.subr.bf16.mxu0 0
        %4010 = vmatpush2.bf16.msra.mxu0 0
        %4011 = vmatprep.subr.bf16.mxu0 0
        %4012 = vmatpush2.bf16.msra.mxu0 0
        %4013 = vmatprep.subr.bf16.mxu0 0
        %4014 = vmatpush2.bf16.msra.mxu0 0
        %4015 = vmatprep.subr.bf16.mxu0 0
        %4016 = vmatpush2.bf16.msra.mxu0 0
        %4017 = vmatprep.subr.bf16.mxu0 0
        %4018 = vmatpush2.bf16.msra.mxu0 0
        %4019 = vmatprep.subr.bf16.mxu0 0
        %4020 = vmatpush2.bf16.msra.mxu0 0
        %4021 = vmatprep.mubr.bf16.mxu0 0
        %4022 = vmatmul.mubr.bf16.gmra.mxu0 %v3962
        %v4023 = vpop.f32.mrf.mxu0
        %v4024 = vadd.f32 %v3958, %v4023
        %v4025 = vpop.f32.mrf.mxu0
        %v4026 = vpop.f32.mrf.mxu0
        %v4027 = vadd.f32 %v3958, %v4026
        %v4028 = vpop.f32.mrf.mxu0
        %4029 = vmatprep.mubr.bf16.mxu0 0
        %4030 = vmatmul.mubr.bf16.gmra.mxu0 %v3965
        %v4031 = vpop.f32.mrf.mxu0
        %v4032 = vadd.f32 %v3958, %v4031
        %v4033 = vpop.f32.mrf.mxu0
        %v4034 = vpop.f32.mrf.mxu0
        %v4035 = vadd.f32 %v3958, %v4034
        %v4036 = vpop.f32.mrf.mxu0
        %4037 = vmatprep.mubr.bf16.mxu0 0
        %4038 = vmatmul.mubr.bf16.gmra.mxu0 %v3968
        %v4039 = vpop.f32.mrf.mxu0
        %v4040 = vadd.f32 %v3958, %v4039
        %v4041 = vpop.f32.mrf.mxu0
        %v4042 = vpop.f32.mrf.mxu0
        %v4043 = vadd.f32 %v3958, %v4042
        %v4044 = vpop.f32.mrf.mxu0
        %4045 = vmatprep.mubr.bf16.mxu0 0
        %4046 = vmatmul.mubr.bf16.gmra.mxu0 %v3971
        %v4047 = vpop.f32.mrf.mxu0
        %v4048 = vadd.f32 %v3958, %v4047
        %v4049 = vpop.f32.mrf.mxu0
        %v4050 = vpop.f32.mrf.mxu0
        %v4051 = vadd.f32 %v3958, %v4050
        %v4052 = vpop.f32.mrf.mxu0
        %4053 = vmatprep.mubr.bf16.mxu0 0
        %4054 = vmatmul.mubr.bf16.gmra.mxu0 %v3974
        %v4055 = vpop.f32.mrf.mxu0
        %v4056 = vadd.f32 %v3958, %v4055
        %v4057 = vpop.f32.mrf.mxu0
        %v4058 = vpop.f32.mrf.mxu0
        %v4059 = vadd.f32 %v3958, %v4058
        %v4060 = vpop.f32.mrf.mxu0
        %4061 = vmatprep.mubr.bf16.mxu0 0
        %4062 = vmatmul.mubr.bf16.gmra.mxu0 %v3977
        %v4063 = vpop.f32.mrf.mxu0
        %v4064 = vadd.f32 %v3958, %v4063
        %v4065 = vpop.f32.mrf.mxu0
        %v4066 = vpop.f32.mrf.mxu0
        %v4067 = vadd.f32 %v3958, %v4066
        %v4068 = vpop.f32.mrf.mxu0
        %4069 = vmatprep.mubr.bf16.mxu0 0
        %4070 = vmatmul.mubr.bf16.gmra.mxu0 %v3980
        %v4071 = vpop.f32.mrf.mxu0
        %v4072 = vadd.f32 %v3958, %v4071
        %v4073 = vpop.f32.mrf.mxu0
        %v4074 = vpop.f32.mrf.mxu0
        %v4075 = vadd.f32 %v3958, %v4074
        %v4076 = vpop.f32.mrf.mxu0
        %4077 = vmatprep.mubr.bf16.mxu0 0
        %4078 = vmatmul.mubr.bf16.gmra.mxu0 %v3983
        %v4079 = vpop.f32.mrf.mxu0
        %v4080 = vadd.f32 %v3958, %v4079
        %v4081 = vpop.f32.mrf.mxu0
        %v4082 = vpop.f32.mrf.mxu0
        %v4083 = vadd.f32 %v3958, %v4082
        %v4084 = vpop.f32.mrf.mxu0
        %4085 = vdwg.mxu0
        %v4086 = vld [vmem:[%s295] sm:$0xff]
        %v4087 = vld [vmem:[%s295 + $0x8] sm:$0xff]
        %v4088 = vld [vmem:[%s295 + $0x10] sm:$0xff]
        %v4089 = vld [vmem:[%s295 + $0x18] sm:$0xff]
        %v4090 = vld [vmem:[%s295 + $0x20] sm:$0xff]
        %v4091 = vld [vmem:[%s295 + $0x28] sm:$0xff]
        %v4092 = vld [vmem:[%s295 + $0x30] sm:$0xff]
        %v4093 = vld [vmem:[%s295 + $0x38] sm:$0xff]
        %v4094 = vld [vmem:[%s295 + $0x40] sm:$0xff]
        %v4095 = vld [vmem:[%s295 + $0x48] sm:$0xff]
        %v4096 = vld [vmem:[%s295 + $0x50] sm:$0xff]
        %v4097 = vld [vmem:[%s295 + $0x58] sm:$0xff]
        %v4098 = vld [vmem:[%s295 + $0x60] sm:$0xff]
        %v4099 = vld [vmem:[%s295 + $0x68] sm:$0xff]
        %v4100 = vld [vmem:[%s295 + $0x70] sm:$0xff]
        %v4101 = vld [vmem:[%s295 + $0x78] sm:$0xff]
        %v4102 = vadd.f32 %v4024, %v4086
        %v4103 = vadd.f32 %v4027, %v4087
        %v4104 = vadd.f32 %v4032, %v4088
        %v4105 = vadd.f32 %v4035, %v4089
        %v4106 = vadd.f32 %v4040, %v4090
        %v4107 = vadd.f32 %v4043, %v4091
        %v4108 = vadd.f32 %v4048, %v4092
        %v4109 = vadd.f32 %v4051, %v4093
        %v4110 = vadd.f32 %v4056, %v4094
        %v4111 = vadd.f32 %v4059, %v4095
        %v4112 = vadd.f32 %v4064, %v4096
        %v4113 = vadd.f32 %v4067, %v4097
        %v4114 = vadd.f32 %v4072, %v4098
        %v4115 = vadd.f32 %v4075, %v4099
        %v4116 = vadd.f32 %v4080, %v4100
        %v4117 = vadd.f32 %v4083, %v4101
        %v4118 = vmax.f32 %v4102, 0.0
        %v4119 = vmax.f32 %v4103, 0.0
        %v4120 = vmax.f32 %v4104, 0.0
        %v4121 = vmax.f32 %v4105, 0.0
        %v4122 = vmax.f32 %v4106, 0.0
        %v4123 = vmax.f32 %v4107, 0.0
        %v4124 = vmax.f32 %v4108, 0.0
        %v4125 = vmax.f32 %v4109, 0.0
        %v4126 = vmax.f32 %v4110, 0.0
        %v4127 = vmax.f32 %v4111, 0.0
        %v4128 = vmax.f32 %v4112, 0.0
        %v4129 = vmax.f32 %v4113, 0.0
        %v4130 = vmax.f32 %v4114, 0.0
        %v4131 = vmax.f32 %v4115, 0.0
        %v4132 = vmax.f32 %v4116, 0.0
        %v4133 = vmax.f32 %v4117, 0.0
        %4134 = vst.msk [vmem:[%s285] sm:$0xff] %vm335, %v4118
        %4135 = vst.msk [vmem:[%s285 + $0x8] sm:$0xff] %vm335, %v4119
        %4136 = vst.msk [vmem:[%s285 + $0x10] sm:$0xff] %vm335, %v4120
        %4137 = vst.msk [vmem:[%s285 + $0x18] sm:$0xff] %vm335, %v4121
        %4138 = vst.msk [vmem:[%s285 + $0x20] sm:$0xff] %vm335, %v4122
        %4139 = vst.msk [vmem:[%s285 + $0x28] sm:$0xff] %vm335, %v4123
        %4140 = vst.msk [vmem:[%s285 + $0x30] sm:$0xff] %vm335, %v4124
        %4141 = vst.msk [vmem:[%s285 + $0x38] sm:$0xff] %vm335, %v4125
        %4142 = vst.msk [vmem:[%s285 + $0x40] sm:$0xff] %vm335, %v4126
        %4143 = vst.msk [vmem:[%s285 + $0x48] sm:$0xff] %vm335, %v4127
        %4144 = vst.msk [vmem:[%s285 + $0x50] sm:$0xff] %vm335, %v4128
        %4145 = vst.msk [vmem:[%s285 + $0x58] sm:$0xff] %vm335, %v4129
        %4146 = vst.msk [vmem:[%s285 + $0x60] sm:$0xff] %vm335, %v4130
        %4147 = vst.msk [vmem:[%s285 + $0x68] sm:$0xff] %vm335, %v4131
        %4148 = vst.msk [vmem:[%s285 + $0x70] sm:$0xff] %vm335, %v4132
        %4149 = vst.msk [vmem:[%s285 + $0x78] sm:$0xff] %vm335, %v4133
        %s4150 = sand.u32 %s195, 1
        %s4151 = scalar_lea.sflag [#allocation5], %s4150
        %s4152 = sand.u32 %s195, 1
        %s4153 = smul.addr %s4152, 128
        %s4154 = scalar_lea.vmem [#allocation4], %s4153
        // Predicated region
        $region57: #{tpu_custom_call.1} parent=47 // pred_check
          %p4155 = pneg %p205
        $region58: #{tpu_custom_call.1} parent=47 // pred_check_branch
          %4157 = sbr.rel (%p4155) target = $region60
        $region59: #{tpu_custom_call.1} parent=47 // pred_region
          %s4158 = smul.u32 8, %s26
          %s4160 = ssub.s32 2048, 2048
          %4161 = vsyncadd %s4151, %s4160
          %s4162 = smul.addr %s4158, 2
          %s4163 = smul.addr %s25, 32
          %s4164 = sadd.s32 %s4162, %s4163
          %s4165 = smul.addr %s4164, 128
          %s4166 = scalar_lea.hbm %s7, %s4165
          %s4167 = sshll.u32 %s4154, 4
          %s4168 = int_to_ptr.vmem [resolvable:$true] %s4167
          %4173 = dma.vmem_to_hbm [thread:$0]  %s4168, 2048, %s4166, %s4151, 128, 128, 8
        $region60: #{tpu_custom_call.1} parent=47 // pred_fallthru
          _
      $region48: #{tpu_custom_call.1} parent=5 // pred_fallthru
        _
      %p4174 = scmp.le.s32.totalorder 2, %s16
      // Predicated region
      $region61: #{tpu_custom_call.1} parent=5 // pred_check
        %p4175 = pneg %p4174
      $region62: #{tpu_custom_call.1} parent=5 // pred_check_branch
        %4177 = sbr.rel (%p4175) target = $region64
      $region63: #{tpu_custom_call.1} parent=5 // pred_region
        %s4178 = ssub.s32 %s16, 2
        // Predicated region
        $region65: #{tpu_custom_call.1} parent=63 // pred_check
          %p4179 = pneg %p211
        $region66: #{tpu_custom_call.1} parent=63 // pred_check_branch
          %4181 = sbr.rel (%p4179) target = $region68
        $region67: #{tpu_custom_call.1} parent=63 // pred_region
          %s4182 = sand.u32 %s196, 1
          %s4183 = scalar_lea.sflag [#allocation5], %s4182
          %s4184 = sand.u32 %s196, 1
          %s4185 = smul.addr %s4184, 128
          %s4186 = scalar_lea.vmem [#allocation4], %s4185
          %4187 = dma.done %s4183, 2048
        $region68: #{tpu_custom_call.1} parent=63 // pred_fallthru
          _
      $region64: #{tpu_custom_call.1} parent=5 // pred_fallthru
        _
    $region6: #{tpu_custom_call.1} parent=1 // loop_footer
      %s20 = sadd.s32 1, %s16
    $region7: #{tpu_custom_call.1} parent=1 // loop_footer_branch
      %15 = sbr.rel target = $region3
    $region8: #{tpu_custom_call.1} parent=1 // loop_exit
      _
    %4188 = vsyncpa [#allocation5], 1
    %s4189 = scalar_lea.sflag [#allocation5], 1
    %4190 = vsyncpa %s4189, 1

</llo_original>
